<compile_context>
chip_gen: v7x
topology: tpu7x:2x2x1
jax: 0.10.0
libtpu: 0.0.40
codegen_flags: <defaults>
</compile_context>

<pallas_src>
import functools

import numpy as np

import jax
import jax.numpy as jnp
from jax import lax
from jax.experimental import pallas as pl
from jax.experimental.pallas import tpu as pltpu


def _round_up(x, m):
    return (x + m - 1) // m * m


# ---------------------------------------------------------------------------
# Static geometry for 28x28 inputs (MNIST-style, as implied by 32*7*7 linear).
# ---------------------------------------------------------------------------
# Layer-1 input: 28x28x1 image, zero padded to (33, 32), packed 4 image columns
# per row:  row = r*8 + s//4, lane = s%4.
HP1, WP1 = 33, 32
WQ1 = WP1 // 4                        # 8 packed columns per padded image row
P1 = HP1 * WQ1                        # 264 packed rows
M1 = _round_up(13 * 16 + 6 + 1, 8)    # 216 pooled rows, m1 = ho*16 + wo//2
K1 = 48                               # 6 row-offsets x 8 column-offsets (Cin=1)

# Layer-2 input (= conv1 output): 14x14x16 activation, zero padded, packed 2
# columns per row:  row = r2*9 + s2//2, lane = (s2 % 2)*16 + c  (32 lanes).
WHP2 = 9                              # packed columns per padded row
P2 = 176                              # packed rows (>= 5*9 + 2 + M2)
M2 = 128                              # pooled rows, m2 = ho*18 + wo (>= 7*18)
K2 = 576                              # 6 x 3 packed offsets x 32 lanes


# ---------------------------------------------------------------------------
# Pallas kernels
# ---------------------------------------------------------------------------
def _conv1_kernel(x_ref, w_ref, b_ref, o_ref, *, bblk):
    """Fused 5x5 'same' conv + bias + ReLU + 2x2 maxpool for an image block.

    x_ref: (bblk, P1, 4)   bf16  packed padded images (row = r*8+s//4, lane = s%4)
    w_ref: (48, 128)       bf16  block weight, rows a*8+b, cols tap*32+wp*16+cout
    b_ref: (1, 32)         f32   bias tiled over the two column parities
    o_ref: (bblk, P2, 32)  bf16  conv2-ready zero-padded packed activation
    """
    cols = [x_ref[:, pl.ds(a * WQ1 + bq, M1), :]
            for a in range(6) for bq in range(2)]                  # (bblk, M1, 4) each
    slab = jnp.concatenate(cols, axis=-1).reshape(bblk * M1, K1)   # bf16
    r = jnp.dot(slab, w_ref[...], preferred_element_type=jnp.float32)  # (bblk*M1,128)
    # max over the 4 pooling taps (32-lane groups); then bias + ReLU
    # (maxpool(relu(conv + b)) == relu(max_taps(conv) + b): bias shared, ReLU monotone)
    t = jnp.maximum(jnp.maximum(r[:, 0:32], r[:, 32:64]),
                    jnp.maximum(r[:, 64:96], r[:, 96:128]))
    act = jnp.maximum(t + b_ref[...], 0.0).astype(o_ref.dtype)
    act = act.reshape(bblk, M1, 32)
    # Epilogue: emit the zero-padded, w-packed bf16 layout that conv2 slices.
    o_ref[...] = jnp.zeros_like(o_ref)
    for h in range(14):
        dst = (h + 2) * WHP2 + 1
        o_ref[:, pl.ds(dst, 7), :] = act[:, h * 16:h * 16 + 7, :]


def _conv2_kernel(x_ref, w_ref, b_ref, o_ref, *, bblk):
    """Fused 5x5 'same' conv + bias + ReLU + 2x2 maxpool for layer 2.

    x_ref: (bblk, P2, 32)  bf16  padded packed activation from conv1
    w_ref: (576, 128)      bf16  rows (u*3 + v//2)*32 + (v%2)*16 + cin, cols tap*32+cout
    b_ref: (1, 32)         f32
    o_ref: (bblk, M2, 32)  f32   pooled output, row m2 = ho*18 + wo
    """
    cols = [x_ref[:, pl.ds(u * WHP2 + k, M2), :]
            for u in range(6) for k in range(3)]                   # (bblk, M2, 32) each
    slab = jnp.concatenate(cols, axis=-1).reshape(bblk * M2, K2)
    r = jnp.dot(slab, w_ref[...], preferred_element_type=jnp.float32)  # (bblk*M2,128)
    t = jnp.maximum(jnp.maximum(r[:, 0:32], r[:, 32:64]),
                    jnp.maximum(r[:, 64:96], r[:, 96:128]))
    out = jnp.maximum(t + b_ref[...], 0.0)
    o_ref[...] = out.reshape(bblk, M2, 32).astype(o_ref.dtype)


def _linear_kernel(x_ref, w_ref, b_ref, o_ref):
    o_ref[...] = (
        jnp.dot(x_ref[...], w_ref[...], preferred_element_type=jnp.float32)
        + b_ref[...]
    ).astype(o_ref.dtype)


# ---------------------------------------------------------------------------
# pallas_call wrappers
# ---------------------------------------------------------------------------
def _run_conv(body, x, wblk, bias, *, m_rows, out_rows, out_dtype, bblk):
    Bp, P, Cin = x.shape
    K, N = wblk.shape
    grid = Bp // bblk
    flops = 2 * Bp * m_rows * K * N
    bytes_accessed = int(
        x.size * x.dtype.itemsize + wblk.size * 2 + bias.size * 4
        + Bp * out_rows * 32 * jnp.dtype(out_dtype).itemsize)
    return pl.pallas_call(
        functools.partial(body, bblk=bblk),
        out_shape=jax.ShapeDtypeStruct((Bp, out_rows, 32), out_dtype),
        grid=(grid,),
        in_specs=[
            pl.BlockSpec((bblk, P, Cin), lambda i: (i, 0, 0)),
            pl.BlockSpec((K, N), lambda i: (0, 0)),
            pl.BlockSpec(bias.shape, lambda i: (0, 0)),
        ],
        out_specs=pl.BlockSpec((bblk, out_rows, 32), lambda i: (i, 0, 0)),
        compiler_params=pltpu.CompilerParams(dimension_semantics=("parallel",)),
        cost_estimate=pl.CostEstimate(flops=flops, transcendentals=0,
                                      bytes_accessed=bytes_accessed),
    )(x, wblk, bias)


def _linear(x, w_kn, bias):
    """x: (M, K) f32; w_kn: (K, N) f32; bias: (1, N) f32 -> (M, N) f32."""
    M, K = x.shape
    N = w_kn.shape[1]
    TM = M if M <= 256 else 256
    return pl.pallas_call(
        _linear_kernel,
        out_shape=jax.ShapeDtypeStruct((M, N), jnp.float32),
        grid=(pl.cdiv(M, TM),),
        in_specs=[
            pl.BlockSpec((TM, K), lambda i: (i, 0)),
            pl.BlockSpec((K, N), lambda i: (0, 0)),
            pl.BlockSpec((1, N), lambda i: (0, 0)),
        ],
        out_specs=pl.BlockSpec((TM, N), lambda i: (i, 0)),
        compiler_params=pltpu.CompilerParams(dimension_semantics=("parallel",)),
    )(x, w_kn, bias)


# ---------------------------------------------------------------------------
# Parameters (PyTorch layout) and one-time kernel-layout preparation
# ---------------------------------------------------------------------------
def init_params(key):
    """PyTorch-layout parameters (Conv2d OIHW, Linear (out, in))."""
    k1, k2, k3, k4, k5, k6 = jax.random.split(key, 6)
    return {
        "w1": jax.random.normal(k1, (16, 1, 5, 5), jnp.float32) * 0.10,
        "b1": jax.random.normal(k2, (16,), jnp.float32) * 0.10,
        "w2": jax.random.normal(k3, (32, 16, 5, 5), jnp.float32) * 0.05,
        "b2": jax.random.normal(k4, (32,), jnp.float32) * 0.05,
        "wl": jax.random.normal(k5, (10, 32 * 7 * 7), jnp.float32) * 0.02,
        "bl": jax.random.normal(k6, (10,), jnp.float32) * 0.02,
    }


def prepare_params(params):
    """One-time host-side conversion to kernel-ready block-weight layouts."""
    w1 = np.asarray(params["w1"], np.float32)      # (16, 1, 5, 5)  OIHW
    w2 = np.asarray(params["w2"], np.float32)      # (32, 16, 5, 5) OIHW
    b1 = np.asarray(params["b1"], np.float32)
    b2 = np.asarray(params["b2"], np.float32)
    wl = np.asarray(params["wl"], np.float32)      # (10, 1568), CHW flatten order
    bl = np.asarray(params["bl"], np.float32)

    # conv1 block weight: rows = a*8 + b  (a = dh+kh, b = 2*wp + dw + kw),
    # cols = tap*32 + wp*16 + cout  (tap = dh*2 + dw).
    w1blk = np.zeros((K1, 128), np.float32)
    for dh in range(2):
        for dw in range(2):
            tap = dh * 2 + dw
            for wp in range(2):
                col = tap * 32 + wp * 16
                for kh in range(5):
                    for kw in range(5):
                        row = (dh + kh) * 8 + (2 * wp + dw + kw)
                        w1blk[row, col:col + 16] = w1[:, 0, kh, kw]

    # conv2 block weight: rows = (u*3 + v//2)*32 + (v%2)*16 + cin
    # (u = dh+kh, v = dw+kw), cols = tap*32 + cout.
    w2blk = np.zeros((K2, 128), np.float32)
    for dh in range(2):
        for dw in range(2):
            tap = dh * 2 + dw
            for kh in range(5):
                for kw in range(5):
                    u, v = dh + kh, dw + kw
                    row = (u * 3 + v // 2) * 32 + (v % 2) * 16
                    w2blk[row:row + 16, tap * 32:tap * 32 + 32] = w2[:, :, kh, kw].T

    return {
        "w1blk": jnp.asarray(w1blk, jnp.bfloat16),
        "b1t": jnp.asarray(np.concatenate([b1, b1])[None, :], jnp.float32),  # (1, 32)
        "w2blk": jnp.asarray(w2blk, jnp.bfloat16),
        "b2t": jnp.asarray(b2[None, :], jnp.float32),                         # (1, 32)
        "wl_t": jnp.asarray(wl.T, jnp.float32),                               # (1568, 10)
        "bl": jnp.asarray(bl[None, :], jnp.float32),                          # (1, 10)
    }


# ---------------------------------------------------------------------------
# Full forward pass (matches CNN.forward semantics: returns (logits, flat))
# ---------------------------------------------------------------------------
def _pick_bblk(batch):
    # >= 2 grid steps whenever batch >= 2 (keeps both v7x TensorCores busy),
    # up to 8 images folded into one matmul per step.
    return max(1, min(8, batch // 2))


def cnn_forward(x, kp):
    """x: (B, 1, 28, 28) NCHW float32 (PyTorch layout)."""
    B = x.shape[0]
    assert x.shape[1:] == (1, 28, 28)
    bblk = _pick_bblk(B)
    Bp = _round_up(B, bblk)

    # Layer-1 input: zero-pad to (33, 32), pack 4 columns per row, bf16.
    img = x.reshape(B, 28, 28)
    if Bp != B:
        img = jnp.pad(img, ((0, Bp - B), (0, 0), (0, 0)))
    imgp = jnp.pad(img, ((0, 0), (2, HP1 - 30), (2, 2)))            # (Bp, 33, 32)
    x1 = imgp.reshape(Bp, P1, 4).astype(jnp.bfloat16)

    a2 = _run_conv(_conv1_kernel, x1, kp["w1blk"], kp["b1t"],
                   m_rows=M1, out_rows=P2, out_dtype=jnp.bfloat16, bblk=bblk)
    y2 = _run_conv(_conv2_kernel, a2, kp["w2blk"], kp["b2t"],
                   m_rows=M2, out_rows=M2, out_dtype=jnp.float32, bblk=bblk)

    # valid pooled rows: m2 = ho*18 + wo with ho, wo in [0, 7)
    y = y2[:B, :7 * 18, :].reshape(B, 7, 18, 32)[:, :, :7, :]        # (B,7,7,32) NHWC
    # Flatten in PyTorch NCHW order (required: the module returns these features).
    flat = jnp.transpose(y, (0, 3, 1, 2)).reshape(B, 32 * 7 * 7)
    logits = _linear(flat, kp["wl_t"], kp["bl"])
    return logits, flat


# ---------------------------------------------------------------------------
# Pure-XLA reference for correctness checking
# ---------------------------------------------------------------------------
def ref_forward(x, params):
    def conv_relu_pool(y, w, b):
        y = lax.conv_general_dilated(
            y, w, window_strides=(1, 1), padding=((2, 2), (2, 2)),
            dimension_numbers=("NCHW", "OIHW", "NCHW"))
        y = jax.nn.relu(y + b.reshape(1, -1, 1, 1))
        return lax.reduce_window(y, -jnp.inf, lax.max,
                                 (1, 1, 2, 2), (1, 1, 2, 2), "VALID")
    y = conv_relu_pool(x, params["w1"], params["b1"])
    y = conv_relu_pool(y, params["w2"], params["b2"])
    flat = y.reshape(x.shape[0], -1)
    logits = flat @ params["wl"].T + params["bl"]
    return logits, flat


if __name__ == "__main__":
    key = jax.random.PRNGKey(0)
    kx, kparam = jax.random.split(key)
    params = init_params(kparam)
    kparams = prepare_params(params)

    fwd = jax.jit(cnn_forward)
    ref = jax.jit(ref_forward)

    # batch=2: bblk=1, grid=2.  batch=5: exercises batch blocking (bblk=2,
    # padded to 6 images, grid=3).
    for batch in (2, 5):
        xb = jax.random.normal(jax.random.fold_in(kx, batch),
                               (batch, 1, 28, 28), jnp.float32)
        logits, feats = fwd(xb, kparams)
        jax.block_until_ready((logits, feats))

        assert logits.shape == (batch, 10) and logits.dtype == jnp.float32
        assert feats.shape == (batch, 32 * 7 * 7) and feats.dtype == jnp.float32

        r_logits, r_feats = ref(xb, params)
        jax.block_until_ready((r_logits, r_feats))
        err_f = float(jnp.max(jnp.abs(feats - r_feats)))
        err_l = float(jnp.max(jnp.abs(logits - r_logits)))
        # Loose tolerance: conv path uses bf16 activations/weights (f32 accum).
        assert jnp.allclose(feats, r_feats, atol=1e-1, rtol=1e-1), err_f
        assert jnp.allclose(logits, r_logits, atol=1e-1, rtol=1e-1), err_l

    print("KERNEL_OK")
</pallas_src>

<mosaic_0001>
module attributes {stable_mosaic.version = 11 : i64} {
  func.func @_conv2_kernel(%arg0: i32, %arg1: memref<1x176x32xbf16, #tpu.memory_space<vmem>>, %arg2: memref<576x128xbf16, #tpu.memory_space<vmem>>, %arg3: memref<1x32xf32, #tpu.memory_space<vmem>>, %arg4: memref<1x128x32xf32, #tpu.memory_space<vmem>>) attributes {dimension_semantics = [#tpu.dimension_semantics<parallel>], iteration_bounds = array<i64: 2>, scalar_prefetch = 0 : i64, scratch_operands = 0 : i64, tpu.core_type = #tpu.core_type<tc>, window_params = [{transform_indices = @transform_0, window_bounds = array<i64: 1, 176, 32>}, {pipeline_mode = #tpu.pipeline_mode<synchronous>, transform_indices = @transform_1, window_bounds = array<i64: 576, 128>}, {pipeline_mode = #tpu.pipeline_mode<synchronous>, transform_indices = @transform_2, window_bounds = array<i64: 1, 32>}, {transform_indices = @transform_3, window_bounds = array<i64: 1, 128, 32>}]} {
    %c0 = arith.constant 0 : index
    %c0_0 = arith.constant 0 : index
    %c0_1 = arith.constant 0 : index
    %0 = vector.load %arg1[%c0, %c0_0, %c0_1] : memref<1x176x32xbf16, #tpu.memory_space<vmem>>, vector<1x128x32xbf16>
    %c0_2 = arith.constant 0 : index
    %c1 = arith.constant 1 : index
    %c0_3 = arith.constant 0 : index
    %1 = vector.load %arg1[%c0_2, %c1, %c0_3] : memref<1x176x32xbf16, #tpu.memory_space<vmem>>, vector<1x128x32xbf16>
    %c0_4 = arith.constant 0 : index
    %c2 = arith.constant 2 : index
    %c0_5 = arith.constant 0 : index
    %2 = vector.load %arg1[%c0_4, %c2, %c0_5] : memref<1x176x32xbf16, #tpu.memory_space<vmem>>, vector<1x128x32xbf16>
    %c0_6 = arith.constant 0 : index
    %c9 = arith.constant 9 : index
    %c0_7 = arith.constant 0 : index
    %3 = vector.load %arg1[%c0_6, %c9, %c0_7] : memref<1x176x32xbf16, #tpu.memory_space<vmem>>, vector<1x128x32xbf16>
    %c0_8 = arith.constant 0 : index
    %c10 = arith.constant 10 : index
    %c0_9 = arith.constant 0 : index
    %4 = vector.load %arg1[%c0_8, %c10, %c0_9] : memref<1x176x32xbf16, #tpu.memory_space<vmem>>, vector<1x128x32xbf16>
    %c0_10 = arith.constant 0 : index
    %c11 = arith.constant 11 : index
    %c0_11 = arith.constant 0 : index
    %5 = vector.load %arg1[%c0_10, %c11, %c0_11] : memref<1x176x32xbf16, #tpu.memory_space<vmem>>, vector<1x128x32xbf16>
    %c0_12 = arith.constant 0 : index
    %c18 = arith.constant 18 : index
    %c0_13 = arith.constant 0 : index
    %6 = vector.load %arg1[%c0_12, %c18, %c0_13] : memref<1x176x32xbf16, #tpu.memory_space<vmem>>, vector<1x128x32xbf16>
    %c0_14 = arith.constant 0 : index
    %c19 = arith.constant 19 : index
    %c0_15 = arith.constant 0 : index
    %7 = vector.load %arg1[%c0_14, %c19, %c0_15] : memref<1x176x32xbf16, #tpu.memory_space<vmem>>, vector<1x128x32xbf16>
    %c0_16 = arith.constant 0 : index
    %c20 = arith.constant 20 : index
    %c0_17 = arith.constant 0 : index
    %8 = vector.load %arg1[%c0_16, %c20, %c0_17] : memref<1x176x32xbf16, #tpu.memory_space<vmem>>, vector<1x128x32xbf16>
    %c0_18 = arith.constant 0 : index
    %c27 = arith.constant 27 : index
    %c0_19 = arith.constant 0 : index
    %9 = vector.load %arg1[%c0_18, %c27, %c0_19] : memref<1x176x32xbf16, #tpu.memory_space<vmem>>, vector<1x128x32xbf16>
    %c0_20 = arith.constant 0 : index
    %c28 = arith.constant 28 : index
    %c0_21 = arith.constant 0 : index
    %10 = vector.load %arg1[%c0_20, %c28, %c0_21] : memref<1x176x32xbf16, #tpu.memory_space<vmem>>, vector<1x128x32xbf16>
    %c0_22 = arith.constant 0 : index
    %c29 = arith.constant 29 : index
    %c0_23 = arith.constant 0 : index
    %11 = vector.load %arg1[%c0_22, %c29, %c0_23] : memref<1x176x32xbf16, #tpu.memory_space<vmem>>, vector<1x128x32xbf16>
    %c0_24 = arith.constant 0 : index
    %c36 = arith.constant 36 : index
    %c0_25 = arith.constant 0 : index
    %12 = vector.load %arg1[%c0_24, %c36, %c0_25] : memref<1x176x32xbf16, #tpu.memory_space<vmem>>, vector<1x128x32xbf16>
    %c0_26 = arith.constant 0 : index
    %c37 = arith.constant 37 : index
    %c0_27 = arith.constant 0 : index
    %13 = vector.load %arg1[%c0_26, %c37, %c0_27] : memref<1x176x32xbf16, #tpu.memory_space<vmem>>, vector<1x128x32xbf16>
    %c0_28 = arith.constant 0 : index
    %c38 = arith.constant 38 : index
    %c0_29 = arith.constant 0 : index
    %14 = vector.load %arg1[%c0_28, %c38, %c0_29] : memref<1x176x32xbf16, #tpu.memory_space<vmem>>, vector<1x128x32xbf16>
    %c0_30 = arith.constant 0 : index
    %c45 = arith.constant 45 : index
    %c0_31 = arith.constant 0 : index
    %15 = vector.load %arg1[%c0_30, %c45, %c0_31] : memref<1x176x32xbf16, #tpu.memory_space<vmem>>, vector<1x128x32xbf16>
    %c0_32 = arith.constant 0 : index
    %c46 = arith.constant 46 : index
    %c0_33 = arith.constant 0 : index
    %16 = vector.load %arg1[%c0_32, %c46, %c0_33] : memref<1x176x32xbf16, #tpu.memory_space<vmem>>, vector<1x128x32xbf16>
    %c0_34 = arith.constant 0 : index
    %c47 = arith.constant 47 : index
    %c0_35 = arith.constant 0 : index
    %17 = vector.load %arg1[%c0_34, %c47, %c0_35] : memref<1x176x32xbf16, #tpu.memory_space<vmem>>, vector<1x128x32xbf16>
    %18 = tpu.concatenate %0, %1, %2, %3, %4, %5, %6, %7, %8, %9, %10, %11, %12, %13, %14, %15 in 2 : vector<1x128x32xbf16>, vector<1x128x32xbf16>, vector<1x128x32xbf16>, vector<1x128x32xbf16>, vector<1x128x32xbf16>, vector<1x128x32xbf16>, vector<1x128x32xbf16>, vector<1x128x32xbf16>, vector<1x128x32xbf16>, vector<1x128x32xbf16>, vector<1x128x32xbf16>, vector<1x128x32xbf16>, vector<1x128x32xbf16>, vector<1x128x32xbf16>, vector<1x128x32xbf16>, vector<1x128x32xbf16> -> vector<1x128x512xbf16>
    %19 = tpu.concatenate %16, %17 in 2 : vector<1x128x32xbf16>, vector<1x128x32xbf16> -> vector<1x128x64xbf16>
    %20 = tpu.concatenate %18, %19 in 2 : vector<1x128x512xbf16>, vector<1x128x64xbf16> -> vector<1x128x576xbf16>
    %21 = vector.shape_cast %20 : vector<1x128x576xbf16> to vector<128x576xbf16>
    %c0_36 = arith.constant 0 : index
    %c0_37 = arith.constant 0 : index
    %22 = vector.load %arg2[%c0_36, %c0_37] : memref<576x128xbf16, #tpu.memory_space<vmem>>, vector<576x128xbf16>
    %cst = arith.constant dense<0.000000e+00> : vector<128x128xf32>
    %23 = tpu.matmul %21, %22, %cst {dimension_numbers = #tpu.dot_dimension_numbers<[1], [0], [0], [1], [0, 0, 1, 1], [], []>} : vector<128x576xbf16>, vector<576x128xbf16>, vector<128x128xf32> -> vector<128x128xf32>
    %24 = vector.extract_strided_slice %23 {offsets = [0, 0], sizes = [128, 32], strides = [1, 1]} : vector<128x128xf32> to vector<128x32xf32>
    %25 = vector.extract_strided_slice %23 {offsets = [0, 32], sizes = [128, 32], strides = [1, 1]} : vector<128x128xf32> to vector<128x32xf32>
    %26 = arith.maximumf %24, %25 : vector<128x32xf32>
    %27 = vector.extract_strided_slice %23 {offsets = [0, 64], sizes = [128, 32], strides = [1, 1]} : vector<128x128xf32> to vector<128x32xf32>
    %28 = vector.extract_strided_slice %23 {offsets = [0, 96], sizes = [128, 32], strides = [1, 1]} : vector<128x128xf32> to vector<128x32xf32>
    %29 = arith.maximumf %27, %28 : vector<128x32xf32>
    %30 = arith.maximumf %26, %29 : vector<128x32xf32>
    %c0_38 = arith.constant 0 : index
    %c0_39 = arith.constant 0 : index
    %31 = vector.load %arg3[%c0_38, %c0_39] : memref<1x32xf32, #tpu.memory_space<vmem>>, vector<1x32xf32>
    %32 = vector.broadcast %31 : vector<1x32xf32> to vector<128x32xf32>
    %33 = arith.addf %30, %32 : vector<128x32xf32>
    %cst_40 = arith.constant 0.000000e+00 : f32
    %34 = vector.broadcast %cst_40 : f32 to vector<128x32xf32>
    %35 = arith.maximumf %33, %34 : vector<128x32xf32>
    %36 = vector.shape_cast %35 : vector<128x32xf32> to vector<1x128x32xf32>
    %c0_41 = arith.constant 0 : index
    %c0_42 = arith.constant 0 : index
    %c0_43 = arith.constant 0 : index
    %37 = vector.load %arg4[%c0_41, %c0_42, %c0_43] : memref<1x128x32xf32, #tpu.memory_space<vmem>>, vector<1x128x32xf32>
    tpu.vector_store %arg4[%c0_41, %c0_42, %c0_43], %36 {strides = array<i32>} : memref<1x128x32xf32, #tpu.memory_space<vmem>>, vector<1x128x32xf32>,
    return
  }
  func.func @transform_0(%arg0: i32) -> (i32, i32, i32) {
    %c0_i32 = arith.constant 0 : i32
    %c0_i32_0 = arith.constant 0 : i32
    %c0_i32_1 = arith.constant 0 : i32
    return %arg0, %c0_i32, %c0_i32_0 : i32, i32, i32
  }
  func.func @transform_1(%arg0: i32) -> (i32, i32) {
    %c0_i32 = arith.constant 0 : i32
    %c0_i32_0 = arith.constant 0 : i32
    %c0_i32_1 = arith.constant 0 : i32
    return %c0_i32, %c0_i32_0 : i32, i32
  }
  func.func @transform_2(%arg0: i32) -> (i32, i32) {
    %c0_i32 = arith.constant 0 : i32
    %c0_i32_0 = arith.constant 0 : i32
    %c0_i32_1 = arith.constant 0 : i32
    return %c0_i32, %c0_i32_0 : i32, i32
  }
  func.func @transform_3(%arg0: i32) -> (i32, i32, i32) {
    %c0_i32 = arith.constant 0 : i32
    %c0_i32_0 = arith.constant 0 : i32
    %c0_i32_1 = arith.constant 0 : i32
    return %arg0, %c0_i32, %c0_i32_0 : i32, i32, i32
  }
}

module attributes {stable_mosaic.version = 11 : i64} {
  func.func @_conv1_kernel(%arg0: i32, %arg1: memref<1x264x4xbf16, #tpu.memory_space<vmem>>, %arg2: memref<48x128xbf16, #tpu.memory_space<vmem>>, %arg3: memref<1x32xf32, #tpu.memory_space<vmem>>, %arg4: memref<1x176x32xbf16, #tpu.memory_space<vmem>>) attributes {dimension_semantics = [#tpu.dimension_semantics<parallel>], iteration_bounds = array<i64: 2>, scalar_prefetch = 0 : i64, scratch_operands = 0 : i64, tpu.core_type = #tpu.core_type<tc>, window_params = [{transform_indices = @transform_0, window_bounds = array<i64: 1, 264, 4>}, {pipeline_mode = #tpu.pipeline_mode<synchronous>, transform_indices = @transform_1, window_bounds = array<i64: 48, 128>}, {pipeline_mode = #tpu.pipeline_mode<synchronous>, transform_indices = @transform_2, window_bounds = array<i64: 1, 32>}, {transform_indices = @transform_3, window_bounds = array<i64: 1, 176, 32>}]} {
    %c0 = arith.constant 0 : index
    %c0_0 = arith.constant 0 : index
    %c0_1 = arith.constant 0 : index
    %0 = vector.load %arg1[%c0, %c0_0, %c0_1] : memref<1x264x4xbf16, #tpu.memory_space<vmem>>, vector<1x216x4xbf16>
    %c0_2 = arith.constant 0 : index
    %c1 = arith.constant 1 : index
    %c0_3 = arith.constant 0 : index
    %1 = vector.load %arg1[%c0_2, %c1, %c0_3] : memref<1x264x4xbf16, #tpu.memory_space<vmem>>, vector<1x216x4xbf16>
    %c0_4 = arith.constant 0 : index
    %c8 = arith.constant 8 : index
    %c0_5 = arith.constant 0 : index
    %2 = vector.load %arg1[%c0_4, %c8, %c0_5] : memref<1x264x4xbf16, #tpu.memory_space<vmem>>, vector<1x216x4xbf16>
    %c0_6 = arith.constant 0 : index
    %c9 = arith.constant 9 : index
    %c0_7 = arith.constant 0 : index
    %3 = vector.load %arg1[%c0_6, %c9, %c0_7] : memref<1x264x4xbf16, #tpu.memory_space<vmem>>, vector<1x216x4xbf16>
    %c0_8 = arith.constant 0 : index
    %c16 = arith.constant 16 : index
    %c0_9 = arith.constant 0 : index
    %4 = vector.load %arg1[%c0_8, %c16, %c0_9] : memref<1x264x4xbf16, #tpu.memory_space<vmem>>, vector<1x216x4xbf16>
    %c0_10 = arith.constant 0 : index
    %c17 = arith.constant 17 : index
    %c0_11 = arith.constant 0 : index
    %5 = vector.load %arg1[%c0_10, %c17, %c0_11] : memref<1x264x4xbf16, #tpu.memory_space<vmem>>, vector<1x216x4xbf16>
    %c0_12 = arith.constant 0 : index
    %c24 = arith.constant 24 : index
    %c0_13 = arith.constant 0 : index
    %6 = vector.load %arg1[%c0_12, %c24, %c0_13] : memref<1x264x4xbf16, #tpu.memory_space<vmem>>, vector<1x216x4xbf16>
    %c0_14 = arith.constant 0 : index
    %c25 = arith.constant 25 : index
    %c0_15 = arith.constant 0 : index
    %7 = vector.load %arg1[%c0_14, %c25, %c0_15] : memref<1x264x4xbf16, #tpu.memory_space<vmem>>, vector<1x216x4xbf16>
    %c0_16 = arith.constant 0 : index
    %c32 = arith.constant 32 : index
    %c0_17 = arith.constant 0 : index
    %8 = vector.load %arg1[%c0_16, %c32, %c0_17] : memref<1x264x4xbf16, #tpu.memory_space<vmem>>, vector<1x216x4xbf16>
    %c0_18 = arith.constant 0 : index
    %c33 = arith.constant 33 : index
    %c0_19 = arith.constant 0 : index
    %9 = vector.load %arg1[%c0_18, %c33, %c0_19] : memref<1x264x4xbf16, #tpu.memory_space<vmem>>, vector<1x216x4xbf16>
    %c0_20 = arith.constant 0 : index
    %c40 = arith.constant 40 : index
    %c0_21 = arith.constant 0 : index
    %10 = vector.load %arg1[%c0_20, %c40, %c0_21] : memref<1x264x4xbf16, #tpu.memory_space<vmem>>, vector<1x216x4xbf16>
    %c0_22 = arith.constant 0 : index
    %c41 = arith.constant 41 : index
    %c0_23 = arith.constant 0 : index
    %11 = vector.load %arg1[%c0_22, %c41, %c0_23] : memref<1x264x4xbf16, #tpu.memory_space<vmem>>, vector<1x216x4xbf16>
    %12 = tpu.concatenate %0, %1, %2, %3, %4, %5, %6, %7, %8, %9, %10, %11 in 2 : vector<1x216x4xbf16>, vector<1x216x4xbf16>, vector<1x216x4xbf16>, vector<1x216x4xbf16>, vector<1x216x4xbf16>, vector<1x216x4xbf16>, vector<1x216x4xbf16>, vector<1x216x4xbf16>, vector<1x216x4xbf16>, vector<1x216x4xbf16>, vector<1x216x4xbf16>, vector<1x216x4xbf16> -> vector<1x216x48xbf16>
    %13 = vector.shape_cast %12 : vector<1x216x48xbf16> to vector<216x48xbf16>
    %c0_24 = arith.constant 0 : index
    %c0_25 = arith.constant 0 : index
    %14 = vector.load %arg2[%c0_24, %c0_25] : memref<48x128xbf16, #tpu.memory_space<vmem>>, vector<48x128xbf16>
    %cst = arith.constant dense<0.000000e+00> : vector<216x128xf32>
    %15 = tpu.matmul %13, %14, %cst {dimension_numbers = #tpu.dot_dimension_numbers<[1], [0], [0], [1], [0, 0, 1, 1], [], []>} : vector<216x48xbf16>, vector<48x128xbf16>, vector<216x128xf32> -> vector<216x128xf32>
    %16 = vector.extract_strided_slice %15 {offsets = [0, 0], sizes = [216, 32], strides = [1, 1]} : vector<216x128xf32> to vector<216x32xf32>
    %17 = vector.extract_strided_slice %15 {offsets = [0, 32], sizes = [216, 32], strides = [1, 1]} : vector<216x128xf32> to vector<216x32xf32>
    %18 = arith.maximumf %16, %17 : vector<216x32xf32>
    %19 = vector.extract_strided_slice %15 {offsets = [0, 64], sizes = [216, 32], strides = [1, 1]} : vector<216x128xf32> to vector<216x32xf32>
    %20 = vector.extract_strided_slice %15 {offsets = [0, 96], sizes = [216, 32], strides = [1, 1]} : vector<216x128xf32> to vector<216x32xf32>
    %21 = arith.maximumf %19, %20 : vector<216x32xf32>
    %22 = arith.maximumf %18, %21 : vector<216x32xf32>
    %c0_26 = arith.constant 0 : index
    %c0_27 = arith.constant 0 : index
    %23 = vector.load %arg3[%c0_26, %c0_27] : memref<1x32xf32, #tpu.memory_space<vmem>>, vector<1x32xf32>
    %24 = vector.broadcast %23 : vector<1x32xf32> to vector<216x32xf32>
    %25 = arith.addf %22, %24 : vector<216x32xf32>
    %cst_28 = arith.constant 0.000000e+00 : f32
    %26 = vector.broadcast %cst_28 : f32 to vector<216x32xf32>
    %27 = arith.maximumf %25, %26 : vector<216x32xf32>
    %28 = arith.truncf %27 : vector<216x32xf32> to vector<216x32xbf16>
    %29 = vector.shape_cast %28 : vector<216x32xbf16> to vector<1x216x32xbf16>
    %cst_29 = arith.constant 0.000000e+00 : bf16
    %30 = vector.broadcast %cst_29 : bf16 to vector<1x176x32xbf16>
    %c0_30 = arith.constant 0 : index
    %c0_31 = arith.constant 0 : index
    %c0_32 = arith.constant 0 : index
    %31 = vector.load %arg4[%c0_30, %c0_31, %c0_32] : memref<1x176x32xbf16, #tpu.memory_space<vmem>>, vector<1x176x32xbf16>
    tpu.vector_store %arg4[%c0_30, %c0_31, %c0_32], %30 {strides = array<i32>} : memref<1x176x32xbf16, #tpu.memory_space<vmem>>, vector<1x176x32xbf16>,
    %32 = vector.extract_strided_slice %29 {offsets = [0, 0, 0], sizes = [1, 7, 32], strides = [1, 1, 1]} : vector<1x216x32xbf16> to vector<1x7x32xbf16>
    %c0_33 = arith.constant 0 : index
    %c19 = arith.constant 19 : index
    %c0_34 = arith.constant 0 : index
    %33 = vector.load %arg4[%c0_33, %c19, %c0_34] : memref<1x176x32xbf16, #tpu.memory_space<vmem>>, vector<1x7x32xbf16>
    tpu.vector_store %arg4[%c0_33, %c19, %c0_34], %32 {strides = array<i32>} : memref<1x176x32xbf16, #tpu.memory_space<vmem>>, vector<1x7x32xbf16>,
    %34 = vector.extract_strided_slice %29 {offsets = [0, 16, 0], sizes = [1, 7, 32], strides = [1, 1, 1]} : vector<1x216x32xbf16> to vector<1x7x32xbf16>
    %c0_35 = arith.constant 0 : index
    %c28 = arith.constant 28 : index
    %c0_36 = arith.constant 0 : index
    %35 = vector.load %arg4[%c0_35, %c28, %c0_36] : memref<1x176x32xbf16, #tpu.memory_space<vmem>>, vector<1x7x32xbf16>
    tpu.vector_store %arg4[%c0_35, %c28, %c0_36], %34 {strides = array<i32>} : memref<1x176x32xbf16, #tpu.memory_space<vmem>>, vector<1x7x32xbf16>,
    %36 = vector.extract_strided_slice %29 {offsets = [0, 32, 0], sizes = [1, 7, 32], strides = [1, 1, 1]} : vector<1x216x32xbf16> to vector<1x7x32xbf16>
    %c0_37 = arith.constant 0 : index
    %c37 = arith.constant 37 : index
    %c0_38 = arith.constant 0 : index
    %37 = vector.load %arg4[%c0_37, %c37, %c0_38] : memref<1x176x32xbf16, #tpu.memory_space<vmem>>, vector<1x7x32xbf16>
    tpu.vector_store %arg4[%c0_37, %c37, %c0_38], %36 {strides = array<i32>} : memref<1x176x32xbf16, #tpu.memory_space<vmem>>, vector<1x7x32xbf16>,
    %38 = vector.extract_strided_slice %29 {offsets = [0, 48, 0], sizes = [1, 7, 32], strides = [1, 1, 1]} : vector<1x216x32xbf16> to vector<1x7x32xbf16>
    %c0_39 = arith.constant 0 : index
    %c46 = arith.constant 46 : index
    %c0_40 = arith.constant 0 : index
    %39 = vector.load %arg4[%c0_39, %c46, %c0_40] : memref<1x176x32xbf16, #tpu.memory_space<vmem>>, vector<1x7x32xbf16>
    tpu.vector_store %arg4[%c0_39, %c46, %c0_40], %38 {strides = array<i32>} : memref<1x176x32xbf16, #tpu.memory_space<vmem>>, vector<1x7x32xbf16>,
    %40 = vector.extract_strided_slice %29 {offsets = [0, 64, 0], sizes = [1, 7, 32], strides = [1, 1, 1]} : vector<1x216x32xbf16> to vector<1x7x32xbf16>
    %c0_41 = arith.constant 0 : index
    %c55 = arith.constant 55 : index
    %c0_42 = arith.constant 0 : index
    %41 = vector.load %arg4[%c0_41, %c55, %c0_42] : memref<1x176x32xbf16, #tpu.memory_space<vmem>>, vector<1x7x32xbf16>
    tpu.vector_store %arg4[%c0_41, %c55, %c0_42], %40 {strides = array<i32>} : memref<1x176x32xbf16, #tpu.memory_space<vmem>>, vector<1x7x32xbf16>,
    %42 = vector.extract_strided_slice %29 {offsets = [0, 80, 0], sizes = [1, 7, 32], strides = [1, 1, 1]} : vector<1x216x32xbf16> to vector<1x7x32xbf16>
    %c0_43 = arith.constant 0 : index
    %c64 = arith.constant 64 : index
    %c0_44 = arith.constant 0 : index
    %43 = vector.load %arg4[%c0_43, %c64, %c0_44] : memref<1x176x32xbf16, #tpu.memory_space<vmem>>, vector<1x7x32xbf16>
    tpu.vector_store %arg4[%c0_43, %c64, %c0_44], %42 {strides = array<i32>} : memref<1x176x32xbf16, #tpu.memory_space<vmem>>, vector<1x7x32xbf16>,
    %44 = vector.extract_strided_slice %29 {offsets = [0, 96, 0], sizes = [1, 7, 32], strides = [1, 1, 1]} : vector<1x216x32xbf16> to vector<1x7x32xbf16>
    %c0_45 = arith.constant 0 : index
    %c73 = arith.constant 73 : index
    %c0_46 = arith.constant 0 : index
    %45 = vector.load %arg4[%c0_45, %c73, %c0_46] : memref<1x176x32xbf16, #tpu.memory_space<vmem>>, vector<1x7x32xbf16>
    tpu.vector_store %arg4[%c0_45, %c73, %c0_46], %44 {strides = array<i32>} : memref<1x176x32xbf16, #tpu.memory_space<vmem>>, vector<1x7x32xbf16>,
    %46 = vector.extract_strided_slice %29 {offsets = [0, 112, 0], sizes = [1, 7, 32], strides = [1, 1, 1]} : vector<1x216x32xbf16> to vector<1x7x32xbf16>
    %c0_47 = arith.constant 0 : index
    %c82 = arith.constant 82 : index
    %c0_48 = arith.constant 0 : index
    %47 = vector.load %arg4[%c0_47, %c82, %c0_48] : memref<1x176x32xbf16, #tpu.memory_space<vmem>>, vector<1x7x32xbf16>
    tpu.vector_store %arg4[%c0_47, %c82, %c0_48], %46 {strides = array<i32>} : memref<1x176x32xbf16, #tpu.memory_space<vmem>>, vector<1x7x32xbf16>,
    %48 = vector.extract_strided_slice %29 {offsets = [0, 128, 0], sizes = [1, 7, 32], strides = [1, 1, 1]} : vector<1x216x32xbf16> to vector<1x7x32xbf16>
    %c0_49 = arith.constant 0 : index
    %c91 = arith.constant 91 : index
    %c0_50 = arith.constant 0 : index
    %49 = vector.load %arg4[%c0_49, %c91, %c0_50] : memref<1x176x32xbf16, #tpu.memory_space<vmem>>, vector<1x7x32xbf16>
    tpu.vector_store %arg4[%c0_49, %c91, %c0_50], %48 {strides = array<i32>} : memref<1x176x32xbf16, #tpu.memory_space<vmem>>, vector<1x7x32xbf16>,
    %50 = vector.extract_strided_slice %29 {offsets = [0, 144, 0], sizes = [1, 7, 32], strides = [1, 1, 1]} : vector<1x216x32xbf16> to vector<1x7x32xbf16>
    %c0_51 = arith.constant 0 : index
    %c100 = arith.constant 100 : index
    %c0_52 = arith.constant 0 : index
    %51 = vector.load %arg4[%c0_51, %c100, %c0_52] : memref<1x176x32xbf16, #tpu.memory_space<vmem>>, vector<1x7x32xbf16>
    tpu.vector_store %arg4[%c0_51, %c100, %c0_52], %50 {strides = array<i32>} : memref<1x176x32xbf16, #tpu.memory_space<vmem>>, vector<1x7x32xbf16>,
    %52 = vector.extract_strided_slice %29 {offsets = [0, 160, 0], sizes = [1, 7, 32], strides = [1, 1, 1]} : vector<1x216x32xbf16> to vector<1x7x32xbf16>
    %c0_53 = arith.constant 0 : index
    %c109 = arith.constant 109 : index
    %c0_54 = arith.constant 0 : index
    %53 = vector.load %arg4[%c0_53, %c109, %c0_54] : memref<1x176x32xbf16, #tpu.memory_space<vmem>>, vector<1x7x32xbf16>
    tpu.vector_store %arg4[%c0_53, %c109, %c0_54], %52 {strides = array<i32>} : memref<1x176x32xbf16, #tpu.memory_space<vmem>>, vector<1x7x32xbf16>,
    %54 = vector.extract_strided_slice %29 {offsets = [0, 176, 0], sizes = [1, 7, 32], strides = [1, 1, 1]} : vector<1x216x32xbf16> to vector<1x7x32xbf16>
    %c0_55 = arith.constant 0 : index
    %c118 = arith.constant 118 : index
    %c0_56 = arith.constant 0 : index
    %55 = vector.load %arg4[%c0_55, %c118, %c0_56] : memref<1x176x32xbf16, #tpu.memory_space<vmem>>, vector<1x7x32xbf16>
    tpu.vector_store %arg4[%c0_55, %c118, %c0_56], %54 {strides = array<i32>} : memref<1x176x32xbf16, #tpu.memory_space<vmem>>, vector<1x7x32xbf16>,
    %56 = vector.extract_strided_slice %29 {offsets = [0, 192, 0], sizes = [1, 7, 32], strides = [1, 1, 1]} : vector<1x216x32xbf16> to vector<1x7x32xbf16>
    %c0_57 = arith.constant 0 : index
    %c127 = arith.constant 127 : index
    %c0_58 = arith.constant 0 : index
    %57 = vector.load %arg4[%c0_57, %c127, %c0_58] : memref<1x176x32xbf16, #tpu.memory_space<vmem>>, vector<1x7x32xbf16>
    tpu.vector_store %arg4[%c0_57, %c127, %c0_58], %56 {strides = array<i32>} : memref<1x176x32xbf16, #tpu.memory_space<vmem>>, vector<1x7x32xbf16>,
    %58 = vector.extract_strided_slice %29 {offsets = [0, 208, 0], sizes = [1, 7, 32], strides = [1, 1, 1]} : vector<1x216x32xbf16> to vector<1x7x32xbf16>
    %c0_59 = arith.constant 0 : index
    %c136 = arith.constant 136 : index
    %c0_60 = arith.constant 0 : index
    %59 = vector.load %arg4[%c0_59, %c136, %c0_60] : memref<1x176x32xbf16, #tpu.memory_space<vmem>>, vector<1x7x32xbf16>
    tpu.vector_store %arg4[%c0_59, %c136, %c0_60], %58 {strides = array<i32>} : memref<1x176x32xbf16, #tpu.memory_space<vmem>>, vector<1x7x32xbf16>,
    return
  }
  func.func @transform_0(%arg0: i32) -> (i32, i32, i32) {
    %c0_i32 = arith.constant 0 : i32
    %c0_i32_0 = arith.constant 0 : i32
    %c0_i32_1 = arith.constant 0 : i32
    return %arg0, %c0_i32, %c0_i32_0 : i32, i32, i32
  }
  func.func @transform_1(%arg0: i32) -> (i32, i32) {
    %c0_i32 = arith.constant 0 : i32
    %c0_i32_0 = arith.constant 0 : i32
    %c0_i32_1 = arith.constant 0 : i32
    return %c0_i32, %c0_i32_0 : i32, i32
  }
  func.func @transform_2(%arg0: i32) -> (i32, i32) {
    %c0_i32 = arith.constant 0 : i32
    %c0_i32_0 = arith.constant 0 : i32
    %c0_i32_1 = arith.constant 0 : i32
    return %c0_i32, %c0_i32_0 : i32, i32
  }
  func.func @transform_3(%arg0: i32) -> (i32, i32, i32) {
    %c0_i32 = arith.constant 0 : i32
    %c0_i32_0 = arith.constant 0 : i32
    %c0_i32_1 = arith.constant 0 : i32
    return %arg0, %c0_i32, %c0_i32_0 : i32, i32, i32
  }
}

module attributes {stable_mosaic.version = 11 : i64} {
  func.func @_linear_kernel(%arg0: i32, %arg1: memref<2x1568xf32, #tpu.memory_space<vmem>>, %arg2: memref<1568x10xf32, #tpu.memory_space<vmem>>, %arg3: memref<1x10xf32, #tpu.memory_space<vmem>>, %arg4: memref<2x10xf32, #tpu.memory_space<vmem>>) attributes {dimension_semantics = [#tpu.dimension_semantics<parallel>], iteration_bounds = array<i64: 1>, scalar_prefetch = 0 : i64, scratch_operands = 0 : i64, tpu.core_type = #tpu.core_type<tc>, window_params = [{transform_indices = @transform_0, window_bounds = array<i64: 2, 1568>}, {pipeline_mode = #tpu.pipeline_mode<synchronous>, transform_indices = @transform_1, window_bounds = array<i64: 1568, 10>}, {pipeline_mode = #tpu.pipeline_mode<synchronous>, transform_indices = @transform_2, window_bounds = array<i64: 1, 10>}, {transform_indices = @transform_3, window_bounds = array<i64: 2, 10>}]} {
    %c0 = arith.constant 0 : index
    %c0_0 = arith.constant 0 : index
    %0 = vector.load %arg1[%c0, %c0_0] : memref<2x1568xf32, #tpu.memory_space<vmem>>, vector<2x1568xf32>
    %c0_1 = arith.constant 0 : index
    %c0_2 = arith.constant 0 : index
    %1 = vector.load %arg2[%c0_1, %c0_2] : memref<1568x10xf32, #tpu.memory_space<vmem>>, vector<1568x10xf32>
    %cst = arith.constant dense<0.000000e+00> : vector<2x10xf32>
    %2 = tpu.matmul %0, %1, %cst {dimension_numbers = #tpu.dot_dimension_numbers<[1], [0], [0], [1], [0, 0, 1, 1], [], []>} : vector<2x1568xf32>, vector<1568x10xf32>, vector<2x10xf32> -> vector<2x10xf32>
    %c0_3 = arith.constant 0 : index
    %c0_4 = arith.constant 0 : index
    %3 = vector.load %arg3[%c0_3, %c0_4] : memref<1x10xf32, #tpu.memory_space<vmem>>, vector<1x10xf32>
    %4 = vector.broadcast %3 : vector<1x10xf32> to vector<2x10xf32>
    %5 = arith.addf %2, %4 : vector<2x10xf32>
    %c0_5 = arith.constant 0 : index
    %c0_6 = arith.constant 0 : index
    %6 = vector.load %arg4[%c0_5, %c0_6] : memref<2x10xf32, #tpu.memory_space<vmem>>, vector<2x10xf32>
    tpu.vector_store %arg4[%c0_5, %c0_6], %5 {strides = array<i32>} : memref<2x10xf32, #tpu.memory_space<vmem>>, vector<2x10xf32>,
    return
  }
  func.func @transform_0(%arg0: i32) -> (i32, i32) {
    %c0_i32 = arith.constant 0 : i32
    %c0_i32_0 = arith.constant 0 : i32
    return %arg0, %c0_i32 : i32, i32
  }
  func.func @transform_1(%arg0: i32) -> (i32, i32) {
    %c0_i32 = arith.constant 0 : i32
    %c0_i32_0 = arith.constant 0 : i32
    %c0_i32_1 = arith.constant 0 : i32
    return %c0_i32, %c0_i32_0 : i32, i32
  }
  func.func @transform_2(%arg0: i32) -> (i32, i32) {
    %c0_i32 = arith.constant 0 : i32
    %c0_i32_0 = arith.constant 0 : i32
    %c0_i32_1 = arith.constant 0 : i32
    return %c0_i32, %c0_i32_0 : i32, i32
  }
  func.func @transform_3(%arg0: i32) -> (i32, i32) {
    %c0_i32 = arith.constant 0 : i32
    %c0_i32_0 = arith.constant 0 : i32
    return %arg0, %c0_i32 : i32, i32
  }
}

</mosaic_0001>

<llo_original>
// kernel: cnn_forward.5
$region0: #{cnn_forward.5}
  #allocation0 [shape = 'u32[]', space=smem, size = 0x4, offset = 0x4, fixed_abs, tag = 'smem constant byte address 0x4 - core index']
  #allocation1 [shape = 'u32[144,128]{1,0:T(1,128)}', space=vmem, size = 0x12000, scoped, tag = 'internal scratch']
  %s0 = inlined_call_operand.vmem [shape: f32[2,1568], index: 0, kind: input, shape index: {}]
  %s1 = inlined_call_operand.vmem [shape: f32[1568,10], index: 1, kind: input, shape index: {}]
  %s2 = inlined_call_operand.vmem [shape: f32[1,10], index: 2, kind: input, shape index: {}]
  %s3 = inlined_call_operand.hbm [shape: f32[2,10], index: 3, kind: output, shape index: {}]
  %s4 = sld [smem:[#allocation0]]
  $region22: #{cnn_forward.5} parent=0
    _
  %s6 = ssub.s32 1, %s4
  %s7 = scalar_select 0, %s6, %s4
  $region1: #{cnn_forward.5} parent=0
    #allocation2 [shape = 'u8[1024]{0}', space=vmem, size = 0x400, scoped, tag = 'output window, operand 0, single buffered']
    #allocation3 [shape = 's32[1]{0}', space=sflag, size = 0x4, scoped, tag = 'scoped memory for cnn_forward.5']
    %8 = vsyncpa [#allocation3], 0
    // Predicated region
    $region2: #{cnn_forward.5} parent=1 // pred_check
      _
    $region3: #{cnn_forward.5} parent=1 // pred_check_branch
      %10 = sbr.rel (0) target = $region5
    $region4: #{cnn_forward.5} parent=1 // pred_region
      _
    $region5: #{cnn_forward.5} parent=1 // pred_fallthru
      _
    // Predicated region
    $region6: #{cnn_forward.5} parent=1 // pred_check
      _
    $region7: #{cnn_forward.5} parent=1 // pred_check_branch
      %12 = sbr.rel (0) target = $region9
    $region8: #{cnn_forward.5} parent=1 // pred_region
      _
    $region9: #{cnn_forward.5} parent=1 // pred_fallthru
      _
    // Predicated region
    $region10: #{cnn_forward.5} parent=1 // pred_check
      _
    $region11: #{cnn_forward.5} parent=1 // pred_check_branch
      %14 = sbr.rel (0) target = $region13
    $region12: #{cnn_forward.5} parent=1 // pred_region
      _
    $region13: #{cnn_forward.5} parent=1 // pred_fallthru
      _
    %v15 = vld [vmem:[%s0] sm:$0xff]
    %v16 = vld [vmem:[%s0 + $0x8] sm:$0xff]
    %v17 = vld [vmem:[%s0 + $0x10] sm:$0xff]
    %v18 = vld [vmem:[%s0 + $0x18] sm:$0x3]
    %v19 = vld [vmem:[%s1] sm:$0xff]
    %v20 = vld [vmem:[%s1 + $0x8] sm:$0xff]
    %v21 = vld [vmem:[%s1 + $0x10] sm:$0xff]
    %v22 = vld [vmem:[%s1 + $0x18] sm:$0xff]
    %v23 = vld [vmem:[%s1 + $0x20] sm:$0xff]
    %v24 = vld [vmem:[%s1 + $0x28] sm:$0xff]
    %v25 = vld [vmem:[%s1 + $0x30] sm:$0xff]
    %v26 = vld [vmem:[%s1 + $0x38] sm:$0xff]
    %v27 = vld [vmem:[%s1 + $0x40] sm:$0xff]
    %v28 = vld [vmem:[%s1 + $0x48] sm:$0xff]
    %v29 = vld [vmem:[%s1 + $0x50] sm:$0xff]
    %v30 = vld [vmem:[%s1 + $0x58] sm:$0xff]
    %v31 = vld [vmem:[%s1 + $0x60] sm:$0xff]
    %v32 = vld [vmem:[%s1 + $0x68] sm:$0xff]
    %v33 = vld [vmem:[%s1 + $0x70] sm:$0xff]
    %v34 = vld [vmem:[%s1 + $0x78] sm:$0xff]
    %v35 = vld [vmem:[%s1 + $0x80] sm:$0xff]
    %v36 = vld [vmem:[%s1 + $0x88] sm:$0xff]
    %v37 = vld [vmem:[%s1 + $0x90] sm:$0xff]
    %v38 = vld [vmem:[%s1 + $0x98] sm:$0xff]
    %v39 = vld [vmem:[%s1 + $0xa0] sm:$0xff]
    %v40 = vld [vmem:[%s1 + $0xa8] sm:$0xff]
    %v41 = vld [vmem:[%s1 + $0xb0] sm:$0xff]
    %v42 = vld [vmem:[%s1 + $0xb8] sm:$0xff]
    %v43 = vld [vmem:[%s1 + $0xc0] sm:$0xff]
    %v44 = vld [vmem:[%s1 + $0xc8] sm:$0xff]
    %v45 = vld [vmem:[%s1 + $0xd0] sm:$0xff]
    %v46 = vld [vmem:[%s1 + $0xd8] sm:$0xff]
    %v47 = vld [vmem:[%s1 + $0xe0] sm:$0xff]
    %v48 = vld [vmem:[%s1 + $0xe8] sm:$0xff]
    %v49 = vld [vmem:[%s1 + $0xf0] sm:$0xff]
    %v50 = vld [vmem:[%s1 + $0xf8] sm:$0xff]
    %v51 = vld [vmem:[%s1 + $0x100] sm:$0xff]
    %v52 = vld [vmem:[%s1 + $0x108] sm:$0xff]
    %v53 = vld [vmem:[%s1 + $0x110] sm:$0xff]
    %v54 = vld [vmem:[%s1 + $0x118] sm:$0xff]
    %v55 = vld [vmem:[%s1 + $0x120] sm:$0xff]
    %v56 = vld [vmem:[%s1 + $0x128] sm:$0xff]
    %v57 = vld [vmem:[%s1 + $0x130] sm:$0xff]
    %v58 = vld [vmem:[%s1 + $0x138] sm:$0xff]
    %v59 = vld [vmem:[%s1 + $0x140] sm:$0xff]
    %v60 = vld [vmem:[%s1 + $0x148] sm:$0xff]
    %v61 = vld [vmem:[%s1 + $0x150] sm:$0xff]
    %v62 = vld [vmem:[%s1 + $0x158] sm:$0xff]
    %v63 = vld [vmem:[%s1 + $0x160] sm:$0xff]
    %v64 = vld [vmem:[%s1 + $0x168] sm:$0xff]
    %v65 = vld [vmem:[%s1 + $0x170] sm:$0xff]
    %v66 = vld [vmem:[%s1 + $0x178] sm:$0xff]
    %v67 = vld [vmem:[%s1 + $0x180] sm:$0xff]
    %v68 = vld [vmem:[%s1 + $0x188] sm:$0xff]
    %v69 = vld [vmem:[%s1 + $0x190] sm:$0xff]
    %v70 = vld [vmem:[%s1 + $0x198] sm:$0xff]
    %v71 = vld [vmem:[%s1 + $0x1a0] sm:$0xff]
    %v72 = vld [vmem:[%s1 + $0x1a8] sm:$0xff]
    %v73 = vld [vmem:[%s1 + $0x1b0] sm:$0xff]
    %v74 = vld [vmem:[%s1 + $0x1b8] sm:$0xff]
    %v75 = vld [vmem:[%s1 + $0x1c0] sm:$0xff]
    %v76 = vld [vmem:[%s1 + $0x1c8] sm:$0xff]
    %v77 = vld [vmem:[%s1 + $0x1d0] sm:$0xff]
    %v78 = vld [vmem:[%s1 + $0x1d8] sm:$0xff]
    %v79 = vld [vmem:[%s1 + $0x1e0] sm:$0xff]
    %v80 = vld [vmem:[%s1 + $0x1e8] sm:$0xff]
    %v81 = vld [vmem:[%s1 + $0x1f0] sm:$0xff]
    %v82 = vld [vmem:[%s1 + $0x1f8] sm:$0xff]
    %v83 = vld [vmem:[%s1 + $0x200] sm:$0xff]
    %v84 = vld [vmem:[%s1 + $0x208] sm:$0xff]
    %v85 = vld [vmem:[%s1 + $0x210] sm:$0xff]
    %v86 = vld [vmem:[%s1 + $0x218] sm:$0xff]
    %v87 = vld [vmem:[%s1 + $0x220] sm:$0xff]
    %v88 = vld [vmem:[%s1 + $0x228] sm:$0xff]
    %v89 = vld [vmem:[%s1 + $0x230] sm:$0xff]
    %v90 = vld [vmem:[%s1 + $0x238] sm:$0xff]
    %v91 = vld [vmem:[%s1 + $0x240] sm:$0xff]
    %v92 = vld [vmem:[%s1 + $0x248] sm:$0xff]
    %v93 = vld [vmem:[%s1 + $0x250] sm:$0xff]
    %v94 = vld [vmem:[%s1 + $0x258] sm:$0xff]
    %v95 = vld [vmem:[%s1 + $0x260] sm:$0xff]
    %v96 = vld [vmem:[%s1 + $0x268] sm:$0xff]
    %v97 = vld [vmem:[%s1 + $0x270] sm:$0xff]
    %v98 = vld [vmem:[%s1 + $0x278] sm:$0xff]
    %v99 = vld [vmem:[%s1 + $0x280] sm:$0xff]
    %v100 = vld [vmem:[%s1 + $0x288] sm:$0xff]
    %v101 = vld [vmem:[%s1 + $0x290] sm:$0xff]
    %v102 = vld [vmem:[%s1 + $0x298] sm:$0xff]
    %v103 = vld [vmem:[%s1 + $0x2a0] sm:$0xff]
    %v104 = vld [vmem:[%s1 + $0x2a8] sm:$0xff]
    %v105 = vld [vmem:[%s1 + $0x2b0] sm:$0xff]
    %v106 = vld [vmem:[%s1 + $0x2b8] sm:$0xff]
    %v107 = vld [vmem:[%s1 + $0x2c0] sm:$0xff]
    %v108 = vld [vmem:[%s1 + $0x2c8] sm:$0xff]
    %v109 = vld [vmem:[%s1 + $0x2d0] sm:$0xff]
    %v110 = vld [vmem:[%s1 + $0x2d8] sm:$0xff]
    %v111 = vld [vmem:[%s1 + $0x2e0] sm:$0xff]
    %v112 = vld [vmem:[%s1 + $0x2e8] sm:$0xff]
    %v113 = vld [vmem:[%s1 + $0x2f0] sm:$0xff]
    %v114 = vld [vmem:[%s1 + $0x2f8] sm:$0xff]
    %v115 = vld [vmem:[%s1 + $0x300] sm:$0xff]
    %v116 = vld [vmem:[%s1 + $0x308] sm:$0xff]
    %v117 = vld [vmem:[%s1 + $0x310] sm:$0xff]
    %v118 = vld [vmem:[%s1 + $0x318] sm:$0xff]
    %v119 = vld [vmem:[%s1 + $0x320] sm:$0xff]
    %v120 = vld [vmem:[%s1 + $0x328] sm:$0xff]
    %v121 = vld [vmem:[%s1 + $0x330] sm:$0xff]
    %v122 = vld [vmem:[%s1 + $0x338] sm:$0xff]
    %v123 = vld [vmem:[%s1 + $0x340] sm:$0xff]
    %v124 = vld [vmem:[%s1 + $0x348] sm:$0xff]
    %v125 = vld [vmem:[%s1 + $0x350] sm:$0xff]
    %v126 = vld [vmem:[%s1 + $0x358] sm:$0xff]
    %v127 = vld [vmem:[%s1 + $0x360] sm:$0xff]
    %v128 = vld [vmem:[%s1 + $0x368] sm:$0xff]
    %v129 = vld [vmem:[%s1 + $0x370] sm:$0xff]
    %v130 = vld [vmem:[%s1 + $0x378] sm:$0xff]
    %v131 = vld [vmem:[%s1 + $0x380] sm:$0xff]
    %v132 = vld [vmem:[%s1 + $0x388] sm:$0xff]
    %v133 = vld [vmem:[%s1 + $0x390] sm:$0xff]
    %v134 = vld [vmem:[%s1 + $0x398] sm:$0xff]
    %v135 = vld [vmem:[%s1 + $0x3a0] sm:$0xff]
    %v136 = vld [vmem:[%s1 + $0x3a8] sm:$0xff]
    %v137 = vld [vmem:[%s1 + $0x3b0] sm:$0xff]
    %v138 = vld [vmem:[%s1 + $0x3b8] sm:$0xff]
    %v139 = vld [vmem:[%s1 + $0x3c0] sm:$0xff]
    %v140 = vld [vmem:[%s1 + $0x3c8] sm:$0xff]
    %v141 = vld [vmem:[%s1 + $0x3d0] sm:$0xff]
    %v142 = vld [vmem:[%s1 + $0x3d8] sm:$0xff]
    %v143 = vld [vmem:[%s1 + $0x3e0] sm:$0xff]
    %v144 = vld [vmem:[%s1 + $0x3e8] sm:$0xff]
    %v145 = vld [vmem:[%s1 + $0x3f0] sm:$0xff]
    %v146 = vld [vmem:[%s1 + $0x3f8] sm:$0xff]
    %v147 = vld [vmem:[%s1 + $0x400] sm:$0xff]
    %v148 = vld [vmem:[%s1 + $0x408] sm:$0xff]
    %v149 = vld [vmem:[%s1 + $0x410] sm:$0xff]
    %v150 = vld [vmem:[%s1 + $0x418] sm:$0xff]
    %v151 = vld [vmem:[%s1 + $0x420] sm:$0xff]
    %v152 = vld [vmem:[%s1 + $0x428] sm:$0xff]
    %v153 = vld [vmem:[%s1 + $0x430] sm:$0xff]
    %v154 = vld [vmem:[%s1 + $0x438] sm:$0xff]
    %v155 = vld [vmem:[%s1 + $0x440] sm:$0xff]
    %v156 = vld [vmem:[%s1 + $0x448] sm:$0xff]
    %v157 = vld [vmem:[%s1 + $0x450] sm:$0xff]
    %v158 = vld [vmem:[%s1 + $0x458] sm:$0xff]
    %v159 = vld [vmem:[%s1 + $0x460] sm:$0xff]
    %v160 = vld [vmem:[%s1 + $0x468] sm:$0xff]
    %v161 = vld [vmem:[%s1 + $0x470] sm:$0xff]
    %v162 = vld [vmem:[%s1 + $0x478] sm:$0xff]
    %v163 = vld [vmem:[%s1 + $0x480] sm:$0xff]
    %v164 = vld [vmem:[%s1 + $0x488] sm:$0xff]
    %v165 = vld [vmem:[%s1 + $0x490] sm:$0xff]
    %v166 = vld [vmem:[%s1 + $0x498] sm:$0xff]
    %v167 = vld [vmem:[%s1 + $0x4a0] sm:$0xff]
    %v168 = vld [vmem:[%s1 + $0x4a8] sm:$0xff]
    %v169 = vld [vmem:[%s1 + $0x4b0] sm:$0xff]
    %v170 = vld [vmem:[%s1 + $0x4b8] sm:$0xff]
    %v171 = vld [vmem:[%s1 + $0x4c0] sm:$0xff]
    %v172 = vld [vmem:[%s1 + $0x4c8] sm:$0xff]
    %v173 = vld [vmem:[%s1 + $0x4d0] sm:$0xff]
    %v174 = vld [vmem:[%s1 + $0x4d8] sm:$0xff]
    %v175 = vld [vmem:[%s1 + $0x4e0] sm:$0xff]
    %v176 = vld [vmem:[%s1 + $0x4e8] sm:$0xff]
    %v177 = vld [vmem:[%s1 + $0x4f0] sm:$0xff]
    %v178 = vld [vmem:[%s1 + $0x4f8] sm:$0xff]
    %v179 = vld [vmem:[%s1 + $0x500] sm:$0xff]
    %v180 = vld [vmem:[%s1 + $0x508] sm:$0xff]
    %v181 = vld [vmem:[%s1 + $0x510] sm:$0xff]
    %v182 = vld [vmem:[%s1 + $0x518] sm:$0xff]
    %v183 = vld [vmem:[%s1 + $0x520] sm:$0xff]
    %v184 = vld [vmem:[%s1 + $0x528] sm:$0xff]
    %v185 = vld [vmem:[%s1 + $0x530] sm:$0xff]
    %v186 = vld [vmem:[%s1 + $0x538] sm:$0xff]
    %v187 = vld [vmem:[%s1 + $0x540] sm:$0xff]
    %v188 = vld [vmem:[%s1 + $0x548] sm:$0xff]
    %v189 = vld [vmem:[%s1 + $0x550] sm:$0xff]
    %v190 = vld [vmem:[%s1 + $0x558] sm:$0xff]
    %v191 = vld [vmem:[%s1 + $0x560] sm:$0xff]
    %v192 = vld [vmem:[%s1 + $0x568] sm:$0xff]
    %v193 = vld [vmem:[%s1 + $0x570] sm:$0xff]
    %v194 = vld [vmem:[%s1 + $0x578] sm:$0xff]
    %v195 = vld [vmem:[%s1 + $0x580] sm:$0xff]
    %v196 = vld [vmem:[%s1 + $0x588] sm:$0xff]
    %v197 = vld [vmem:[%s1 + $0x590] sm:$0xff]
    %v198 = vld [vmem:[%s1 + $0x598] sm:$0xff]
    %v199 = vld [vmem:[%s1 + $0x5a0] sm:$0xff]
    %v200 = vld [vmem:[%s1 + $0x5a8] sm:$0xff]
    %v201 = vld [vmem:[%s1 + $0x5b0] sm:$0xff]
    %v202 = vld [vmem:[%s1 + $0x5b8] sm:$0xff]
    %v203 = vld [vmem:[%s1 + $0x5c0] sm:$0xff]
    %v204 = vld [vmem:[%s1 + $0x5c8] sm:$0xff]
    %v205 = vld [vmem:[%s1 + $0x5d0] sm:$0xff]
    %v206 = vld [vmem:[%s1 + $0x5d8] sm:$0xff]
    %v207 = vld [vmem:[%s1 + $0x5e0] sm:$0xff]
    %v208 = vld [vmem:[%s1 + $0x5e8] sm:$0xff]
    %v209 = vld [vmem:[%s1 + $0x5f0] sm:$0xff]
    %v210 = vld [vmem:[%s1 + $0x5f8] sm:$0xff]
    %v211 = vld [vmem:[%s1 + $0x600] sm:$0xff]
    %v212 = vld [vmem:[%s1 + $0x608] sm:$0xff]
    %v213 = vld [vmem:[%s1 + $0x610] sm:$0xff]
    %v214 = vld [vmem:[%s1 + $0x618] sm:$0xff]
    %v215 = vld [vmem:[%s2] sm:$0x1]
    %v217 = vlaneseq
    %v218 = vshrl.u32 %v217, 7
    %v219 = vsub.s32 0, %v218
    %v220 = vrot.slane %v215, %v219
    %v226 = vcombine.high %v15, %v15
    %v228 = vunpack.c.l.s4 1983009808
    %v229 = vunpack.c.0.s8 %v228
    %v230 = vlaneseq
    %v231 = vshrl.u32 %v230, 7
    %v232 = vsub.s32 %v229, %v231
    %v233 = vrot.slane %v15, %v232
    %v235 = vunpack.c.l.s4 1983009808
    %v236 = vunpack.c.0.s8 %v235
    %v237 = vlaneseq
    %v238 = vshrl.u32 %v237, 7
    %v239 = vsub.s32 %v236, %v238
    %v240 = vrot.slane %v226, %v239
    %v241 = vcombine.high %v233, %v233
    %v242 = vcombine.high %v240, %v240
    %v243 = vcombine.high %v16, %v16
    %v245 = vunpack.c.l.s4 1983009808
    %v246 = vunpack.c.0.s8 %v245
    %v247 = vlaneseq
    %v248 = vshrl.u32 %v247, 7
    %v249 = vsub.s32 %v246, %v248
    %v250 = vrot.slane %v16, %v249
    %v252 = vunpack.c.l.s4 1983009808
    %v253 = vunpack.c.0.s8 %v252
    %v254 = vlaneseq
    %v255 = vshrl.u32 %v254, 7
    %v256 = vsub.s32 %v253, %v255
    %v257 = vrot.slane %v243, %v256
    %v258 = vcombine.high %v250, %v250
    %v259 = vcombine.high %v257, %v257
    %v260 = vcombine.high %v17, %v17
    %v262 = vunpack.c.l.s4 1983009808
    %v263 = vunpack.c.0.s8 %v262
    %v264 = vlaneseq
    %v265 = vshrl.u32 %v264, 7
    %v266 = vsub.s32 %v263, %v265
    %v267 = vrot.slane %v17, %v266
    %v269 = vunpack.c.l.s4 1983009808
    %v270 = vunpack.c.0.s8 %v269
    %v271 = vlaneseq
    %v272 = vshrl.u32 %v271, 7
    %v273 = vsub.s32 %v270, %v272
    %v274 = vrot.slane %v260, %v273
    %v275 = vcombine.high %v267, %v267
    %v276 = vcombine.high %v274, %v274
    %v278 = vunpack.c.l.s4 1983009808
    %v279 = vunpack.c.0.s8 %v278
    %v280 = vlaneseq
    %v281 = vshrl.u32 %v280, 7
    %v282 = vsub.s32 %v279, %v281
    %v283 = vrot.slane %v18, %v282
    %vm296 = vcmask 261120
    %v297 = vsel %vm296, %v283, 0
    %299 = vmatprep.subr.mxu0 0.0
    %300 = vmatpush1.msra.mxu0 %v19
    %301 = vmatprep.subr.mxu0 0.0
    %302 = vmatpush1.msra.mxu0 %v20
    %303 = vmatprep.subr.mxu0 0.0
    %304 = vmatpush1.msra.mxu0 %v21
    %305 = vmatprep.subr.mxu0 0.0
    %306 = vmatpush1.msra.mxu0 %v22
    %307 = vmatprep.subr.mxu0 0.0
    %308 = vmatpush1.msra.mxu0 %v23
    %309 = vmatprep.subr.mxu0 0.0
    %310 = vmatpush1.msra.mxu0 %v24
    %311 = vmatprep.subr.mxu0 0.0
    %312 = vmatpush1.msra.mxu0 %v25
    %313 = vmatprep.subr.mxu0 0.0
    %314 = vmatpush1.msra.mxu0 %v26
    %315 = vmatprep.subr.mxu0 0.0
    %316 = vmatpush1.msra.mxu0 %v27
    %317 = vmatprep.subr.mxu0 0.0
    %318 = vmatpush1.msra.mxu0 %v28
    %319 = vmatprep.subr.mxu0 0.0
    %320 = vmatpush1.msra.mxu0 %v29
    %321 = vmatprep.subr.mxu0 0.0
    %322 = vmatpush1.msra.mxu0 %v30
    %323 = vmatprep.subr.mxu0 0.0
    %324 = vmatpush1.msra.mxu0 %v31
    %325 = vmatprep.subr.mxu0 0.0
    %326 = vmatpush1.msra.mxu0 %v32
    %327 = vmatprep.subr.mxu0 0.0
    %328 = vmatpush1.msra.mxu0 %v33
    %329 = vmatprep.subr.mxu0 0.0
    %330 = vmatpush1.msra.mxu0 %v34
    %331 = vmatprep.subr.mxu0 0.0
    %332 = vmatpush1.msra.mxu0 %v35
    %333 = vmatprep.subr.mxu0 0.0
    %334 = vmatpush1.msra.mxu0 %v36
    %335 = vmatprep.subr.mxu0 0.0
    %336 = vmatpush1.msra.mxu0 %v37
    %337 = vmatprep.subr.mxu0 0.0
    %338 = vmatpush1.msra.mxu0 %v38
    %339 = vmatprep.subr.mxu0 0.0
    %340 = vmatpush1.msra.mxu0 %v39
    %341 = vmatprep.subr.mxu0 0.0
    %342 = vmatpush1.msra.mxu0 %v40
    %343 = vmatprep.subr.mxu0 0.0
    %344 = vmatpush1.msra.mxu0 %v41
    %345 = vmatprep.subr.mxu0 0.0
    %346 = vmatpush1.msra.mxu0 %v42
    %347 = vmatprep.subr.mxu0 0.0
    %348 = vmatpush1.msra.mxu0 %v43
    %349 = vmatprep.subr.mxu0 0.0
    %350 = vmatpush1.msra.mxu0 %v44
    %351 = vmatprep.subr.mxu0 0.0
    %352 = vmatpush1.msra.mxu0 %v45
    %353 = vmatprep.subr.mxu0 0.0
    %354 = vmatpush1.msra.mxu0 %v46
    %355 = vmatprep.subr.mxu0 0.0
    %356 = vmatpush1.msra.mxu0 %v47
    %357 = vmatprep.subr.mxu0 0.0
    %358 = vmatpush1.msra.mxu0 %v48
    %359 = vmatprep.subr.mxu0 0.0
    %360 = vmatpush1.msra.mxu0 %v49
    %361 = vmatprep.subr.mxu0 0.0
    %362 = vmatpush1.msra.mxu0 %v50
    %363 = vmatprep.mubr.f32.mxu0 %v241
    %364 = vmatmul.mubr.f32.gmra.mrb[0].mxu0 %v233
    %v365 = vpop.f32.mrb[0].mxu0
    %v366 = vadd.f32 %v220, %v365
    %v367 = vpop.f32.mrb[0].mxu0
    %368 = vdwg.mxu0
    %369 = vmatprep.subr.mxu0 0.0
    %370 = vmatpush1.msra.mxu0 %v51
    %371 = vmatprep.subr.mxu0 0.0
    %372 = vmatpush1.msra.mxu0 %v52
    %373 = vmatprep.subr.mxu0 0.0
    %374 = vmatpush1.msra.mxu0 %v53
    %375 = vmatprep.subr.mxu0 0.0
    %376 = vmatpush1.msra.mxu0 %v54
    %377 = vmatprep.subr.mxu0 0.0
    %378 = vmatpush1.msra.mxu0 %v55
    %379 = vmatprep.subr.mxu0 0.0
    %380 = vmatpush1.msra.mxu0 %v56
    %381 = vmatprep.subr.mxu0 0.0
    %382 = vmatpush1.msra.mxu0 %v57
    %383 = vmatprep.subr.mxu0 0.0
    %384 = vmatpush1.msra.mxu0 %v58
    %385 = vmatprep.subr.mxu0 0.0
    %386 = vmatpush1.msra.mxu0 %v59
    %387 = vmatprep.subr.mxu0 0.0
    %388 = vmatpush1.msra.mxu0 %v60
    %389 = vmatprep.subr.mxu0 0.0
    %390 = vmatpush1.msra.mxu0 %v61
    %391 = vmatprep.subr.mxu0 0.0
    %392 = vmatpush1.msra.mxu0 %v62
    %393 = vmatprep.subr.mxu0 0.0
    %394 = vmatpush1.msra.mxu0 %v63
    %395 = vmatprep.subr.mxu0 0.0
    %396 = vmatpush1.msra.mxu0 %v64
    %397 = vmatprep.subr.mxu0 0.0
    %398 = vmatpush1.msra.mxu0 %v65
    %399 = vmatprep.subr.mxu0 0.0
    %400 = vmatpush1.msra.mxu0 %v66
    %401 = vmatprep.subr.mxu0 0.0
    %402 = vmatpush1.msra.mxu0 %v67
    %403 = vmatprep.subr.mxu0 0.0
    %404 = vmatpush1.msra.mxu0 %v68
    %405 = vmatprep.subr.mxu0 0.0
    %406 = vmatpush1.msra.mxu0 %v69
    %407 = vmatprep.subr.mxu0 0.0
    %408 = vmatpush1.msra.mxu0 %v70
    %409 = vmatprep.subr.mxu0 0.0
    %410 = vmatpush1.msra.mxu0 %v71
    %411 = vmatprep.subr.mxu0 0.0
    %412 = vmatpush1.msra.mxu0 %v72
    %413 = vmatprep.subr.mxu0 0.0
    %414 = vmatpush1.msra.mxu0 %v73
    %415 = vmatprep.subr.mxu0 0.0
    %416 = vmatpush1.msra.mxu0 %v74
    %417 = vmatprep.subr.mxu0 0.0
    %418 = vmatpush1.msra.mxu0 %v75
    %419 = vmatprep.subr.mxu0 0.0
    %420 = vmatpush1.msra.mxu0 %v76
    %421 = vmatprep.subr.mxu0 0.0
    %422 = vmatpush1.msra.mxu0 %v77
    %423 = vmatprep.subr.mxu0 0.0
    %424 = vmatpush1.msra.mxu0 %v78
    %425 = vmatprep.subr.mxu0 0.0
    %426 = vmatpush1.msra.mxu0 %v79
    %427 = vmatprep.subr.mxu0 0.0
    %428 = vmatpush1.msra.mxu0 %v80
    %429 = vmatprep.subr.mxu0 0.0
    %430 = vmatpush1.msra.mxu0 %v81
    %431 = vmatprep.subr.mxu0 0.0
    %432 = vmatpush1.msra.mxu0 %v82
    %433 = vmatprep.mubr.f32.mxu0 %v242
    %434 = vmatmul.mubr.f32.gmra.mrb[0].mxu0 %v240
    %v435 = vpop.f32.mrb[0].mxu0
    %v436 = vadd.f32 %v366, %v435
    %v437 = vpop.f32.mrb[0].mxu0
    %438 = vdwg.mxu0
    %439 = vmatprep.subr.mxu0 0.0
    %440 = vmatpush1.msra.mxu0 %v83
    %441 = vmatprep.subr.mxu0 0.0
    %442 = vmatpush1.msra.mxu0 %v84
    %443 = vmatprep.subr.mxu0 0.0
    %444 = vmatpush1.msra.mxu0 %v85
    %445 = vmatprep.subr.mxu0 0.0
    %446 = vmatpush1.msra.mxu0 %v86
    %447 = vmatprep.subr.mxu0 0.0
    %448 = vmatpush1.msra.mxu0 %v87
    %449 = vmatprep.subr.mxu0 0.0
    %450 = vmatpush1.msra.mxu0 %v88
    %451 = vmatprep.subr.mxu0 0.0
    %452 = vmatpush1.msra.mxu0 %v89
    %453 = vmatprep.subr.mxu0 0.0
    %454 = vmatpush1.msra.mxu0 %v90
    %455 = vmatprep.subr.mxu0 0.0
    %456 = vmatpush1.msra.mxu0 %v91
    %457 = vmatprep.subr.mxu0 0.0
    %458 = vmatpush1.msra.mxu0 %v92
    %459 = vmatprep.subr.mxu0 0.0
    %460 = vmatpush1.msra.mxu0 %v93
    %461 = vmatprep.subr.mxu0 0.0
    %462 = vmatpush1.msra.mxu0 %v94
    %463 = vmatprep.subr.mxu0 0.0
    %464 = vmatpush1.msra.mxu0 %v95
    %465 = vmatprep.subr.mxu0 0.0
    %466 = vmatpush1.msra.mxu0 %v96
    %467 = vmatprep.subr.mxu0 0.0
    %468 = vmatpush1.msra.mxu0 %v97
    %469 = vmatprep.subr.mxu0 0.0
    %470 = vmatpush1.msra.mxu0 %v98
    %471 = vmatprep.subr.mxu0 0.0
    %472 = vmatpush1.msra.mxu0 %v99
    %473 = vmatprep.subr.mxu0 0.0
    %474 = vmatpush1.msra.mxu0 %v100
    %475 = vmatprep.subr.mxu0 0.0
    %476 = vmatpush1.msra.mxu0 %v101
    %477 = vmatprep.subr.mxu0 0.0
    %478 = vmatpush1.msra.mxu0 %v102
    %479 = vmatprep.subr.mxu0 0.0
    %480 = vmatpush1.msra.mxu0 %v103
    %481 = vmatprep.subr.mxu0 0.0
    %482 = vmatpush1.msra.mxu0 %v104
    %483 = vmatprep.subr.mxu0 0.0
    %484 = vmatpush1.msra.mxu0 %v105
    %485 = vmatprep.subr.mxu0 0.0
    %486 = vmatpush1.msra.mxu0 %v106
    %487 = vmatprep.subr.mxu0 0.0
    %488 = vmatpush1.msra.mxu0 %v107
    %489 = vmatprep.subr.mxu0 0.0
    %490 = vmatpush1.msra.mxu0 %v108
    %491 = vmatprep.subr.mxu0 0.0
    %492 = vmatpush1.msra.mxu0 %v109
    %493 = vmatprep.subr.mxu0 0.0
    %494 = vmatpush1.msra.mxu0 %v110
    %495 = vmatprep.subr.mxu0 0.0
    %496 = vmatpush1.msra.mxu0 %v111
    %497 = vmatprep.subr.mxu0 0.0
    %498 = vmatpush1.msra.mxu0 %v112
    %499 = vmatprep.subr.mxu0 0.0
    %500 = vmatpush1.msra.mxu0 %v113
    %501 = vmatprep.subr.mxu0 0.0
    %502 = vmatpush1.msra.mxu0 %v114
    %503 = vmatprep.mubr.f32.mxu0 %v258
    %504 = vmatmul.mubr.f32.gmra.mrb[0].mxu0 %v250
    %v505 = vpop.f32.mrb[0].mxu0
    %v506 = vadd.f32 %v436, %v505
    %v507 = vpop.f32.mrb[0].mxu0
    %508 = vdwg.mxu0
    %509 = vmatprep.subr.mxu0 0.0
    %510 = vmatpush1.msra.mxu0 %v115
    %511 = vmatprep.subr.mxu0 0.0
    %512 = vmatpush1.msra.mxu0 %v116
    %513 = vmatprep.subr.mxu0 0.0
    %514 = vmatpush1.msra.mxu0 %v117
    %515 = vmatprep.subr.mxu0 0.0
    %516 = vmatpush1.msra.mxu0 %v118
    %517 = vmatprep.subr.mxu0 0.0
    %518 = vmatpush1.msra.mxu0 %v119
    %519 = vmatprep.subr.mxu0 0.0
    %520 = vmatpush1.msra.mxu0 %v120
    %521 = vmatprep.subr.mxu0 0.0
    %522 = vmatpush1.msra.mxu0 %v121
    %523 = vmatprep.subr.mxu0 0.0
    %524 = vmatpush1.msra.mxu0 %v122
    %525 = vmatprep.subr.mxu0 0.0
    %526 = vmatpush1.msra.mxu0 %v123
    %527 = vmatprep.subr.mxu0 0.0
    %528 = vmatpush1.msra.mxu0 %v124
    %529 = vmatprep.subr.mxu0 0.0
    %530 = vmatpush1.msra.mxu0 %v125
    %531 = vmatprep.subr.mxu0 0.0
    %532 = vmatpush1.msra.mxu0 %v126
    %533 = vmatprep.subr.mxu0 0.0
    %534 = vmatpush1.msra.mxu0 %v127
    %535 = vmatprep.subr.mxu0 0.0
    %536 = vmatpush1.msra.mxu0 %v128
    %537 = vmatprep.subr.mxu0 0.0
    %538 = vmatpush1.msra.mxu0 %v129
    %539 = vmatprep.subr.mxu0 0.0
    %540 = vmatpush1.msra.mxu0 %v130
    %541 = vmatprep.subr.mxu0 0.0
    %542 = vmatpush1.msra.mxu0 %v131
    %543 = vmatprep.subr.mxu0 0.0
    %544 = vmatpush1.msra.mxu0 %v132
    %545 = vmatprep.subr.mxu0 0.0
    %546 = vmatpush1.msra.mxu0 %v133
    %547 = vmatprep.subr.mxu0 0.0
    %548 = vmatpush1.msra.mxu0 %v134
    %549 = vmatprep.subr.mxu0 0.0
    %550 = vmatpush1.msra.mxu0 %v135
    %551 = vmatprep.subr.mxu0 0.0
    %552 = vmatpush1.msra.mxu0 %v136
    %553 = vmatprep.subr.mxu0 0.0
    %554 = vmatpush1.msra.mxu0 %v137
    %555 = vmatprep.subr.mxu0 0.0
    %556 = vmatpush1.msra.mxu0 %v138
    %557 = vmatprep.subr.mxu0 0.0
    %558 = vmatpush1.msra.mxu0 %v139
    %559 = vmatprep.subr.mxu0 0.0
    %560 = vmatpush1.msra.mxu0 %v140
    %561 = vmatprep.subr.mxu0 0.0
    %562 = vmatpush1.msra.mxu0 %v141
    %563 = vmatprep.subr.mxu0 0.0
    %564 = vmatpush1.msra.mxu0 %v142
    %565 = vmatprep.subr.mxu0 0.0
    %566 = vmatpush1.msra.mxu0 %v143
    %567 = vmatprep.subr.mxu0 0.0
    %568 = vmatpush1.msra.mxu0 %v144
    %569 = vmatprep.subr.mxu0 0.0
    %570 = vmatpush1.msra.mxu0 %v145
    %571 = vmatprep.subr.mxu0 0.0
    %572 = vmatpush1.msra.mxu0 %v146
    %573 = vmatprep.mubr.f32.mxu0 %v259
    %574 = vmatmul.mubr.f32.gmra.mrb[0].mxu0 %v257
    %v575 = vpop.f32.mrb[0].mxu0
    %v576 = vadd.f32 %v506, %v575
    %v577 = vpop.f32.mrb[0].mxu0
    %578 = vdwg.mxu0
    %579 = vmatprep.subr.mxu0 0.0
    %580 = vmatpush1.msra.mxu0 %v147
    %581 = vmatprep.subr.mxu0 0.0
    %582 = vmatpush1.msra.mxu0 %v148
    %583 = vmatprep.subr.mxu0 0.0
    %584 = vmatpush1.msra.mxu0 %v149
    %585 = vmatprep.subr.mxu0 0.0
    %586 = vmatpush1.msra.mxu0 %v150
    %587 = vmatprep.subr.mxu0 0.0
    %588 = vmatpush1.msra.mxu0 %v151
    %589 = vmatprep.subr.mxu0 0.0
    %590 = vmatpush1.msra.mxu0 %v152
    %591 = vmatprep.subr.mxu0 0.0
    %592 = vmatpush1.msra.mxu0 %v153
    %593 = vmatprep.subr.mxu0 0.0
    %594 = vmatpush1.msra.mxu0 %v154
    %595 = vmatprep.subr.mxu0 0.0
    %596 = vmatpush1.msra.mxu0 %v155
    %597 = vmatprep.subr.mxu0 0.0
    %598 = vmatpush1.msra.mxu0 %v156
    %599 = vmatprep.subr.mxu0 0.0
    %600 = vmatpush1.msra.mxu0 %v157
    %601 = vmatprep.subr.mxu0 0.0
    %602 = vmatpush1.msra.mxu0 %v158
    %603 = vmatprep.subr.mxu0 0.0
    %604 = vmatpush1.msra.mxu0 %v159
    %605 = vmatprep.subr.mxu0 0.0
    %606 = vmatpush1.msra.mxu0 %v160
    %607 = vmatprep.subr.mxu0 0.0
    %608 = vmatpush1.msra.mxu0 %v161
    %609 = vmatprep.subr.mxu0 0.0
    %610 = vmatpush1.msra.mxu0 %v162
    %611 = vmatprep.subr.mxu0 0.0
    %612 = vmatpush1.msra.mxu0 %v163
    %613 = vmatprep.subr.mxu0 0.0
    %614 = vmatpush1.msra.mxu0 %v164
    %615 = vmatprep.subr.mxu0 0.0
    %616 = vmatpush1.msra.mxu0 %v165
    %617 = vmatprep.subr.mxu0 0.0
    %618 = vmatpush1.msra.mxu0 %v166
    %619 = vmatprep.subr.mxu0 0.0
    %620 = vmatpush1.msra.mxu0 %v167
    %621 = vmatprep.subr.mxu0 0.0
    %622 = vmatpush1.msra.mxu0 %v168
    %623 = vmatprep.subr.mxu0 0.0
    %624 = vmatpush1.msra.mxu0 %v169
    %625 = vmatprep.subr.mxu0 0.0
    %626 = vmatpush1.msra.mxu0 %v170
    %627 = vmatprep.subr.mxu0 0.0
    %628 = vmatpush1.msra.mxu0 %v171
    %629 = vmatprep.subr.mxu0 0.0
    %630 = vmatpush1.msra.mxu0 %v172
    %631 = vmatprep.subr.mxu0 0.0
    %632 = vmatpush1.msra.mxu0 %v173
    %633 = vmatprep.subr.mxu0 0.0
    %634 = vmatpush1.msra.mxu0 %v174
    %635 = vmatprep.subr.mxu0 0.0
    %636 = vmatpush1.msra.mxu0 %v175
    %637 = vmatprep.subr.mxu0 0.0
    %638 = vmatpush1.msra.mxu0 %v176
    %639 = vmatprep.subr.mxu0 0.0
    %640 = vmatpush1.msra.mxu0 %v177
    %641 = vmatprep.subr.mxu0 0.0
    %642 = vmatpush1.msra.mxu0 %v178
    %643 = vmatprep.mubr.f32.mxu0 %v275
    %644 = vmatmul.mubr.f32.gmra.mrb[0].mxu0 %v267
    %v645 = vpop.f32.mrb[0].mxu0
    %v646 = vadd.f32 %v576, %v645
    %v647 = vpop.f32.mrb[0].mxu0
    %648 = vdwg.mxu0
    %649 = vmatprep.subr.mxu0 0.0
    %650 = vmatpush1.msra.mxu0 %v179
    %651 = vmatprep.subr.mxu0 0.0
    %652 = vmatpush1.msra.mxu0 %v180
    %653 = vmatprep.subr.mxu0 0.0
    %654 = vmatpush1.msra.mxu0 %v181
    %655 = vmatprep.subr.mxu0 0.0
    %656 = vmatpush1.msra.mxu0 %v182
    %657 = vmatprep.subr.mxu0 0.0
    %658 = vmatpush1.msra.mxu0 %v183
    %659 = vmatprep.subr.mxu0 0.0
    %660 = vmatpush1.msra.mxu0 %v184
    %661 = vmatprep.subr.mxu0 0.0
    %662 = vmatpush1.msra.mxu0 %v185
    %663 = vmatprep.subr.mxu0 0.0
    %664 = vmatpush1.msra.mxu0 %v186
    %665 = vmatprep.subr.mxu0 0.0
    %666 = vmatpush1.msra.mxu0 %v187
    %667 = vmatprep.subr.mxu0 0.0
    %668 = vmatpush1.msra.mxu0 %v188
    %669 = vmatprep.subr.mxu0 0.0
    %670 = vmatpush1.msra.mxu0 %v189
    %671 = vmatprep.subr.mxu0 0.0
    %672 = vmatpush1.msra.mxu0 %v190
    %673 = vmatprep.subr.mxu0 0.0
    %674 = vmatpush1.msra.mxu0 %v191
    %675 = vmatprep.subr.mxu0 0.0
    %676 = vmatpush1.msra.mxu0 %v192
    %677 = vmatprep.subr.mxu0 0.0
    %678 = vmatpush1.msra.mxu0 %v193
    %679 = vmatprep.subr.mxu0 0.0
    %680 = vmatpush1.msra.mxu0 %v194
    %681 = vmatprep.subr.mxu0 0.0
    %682 = vmatpush1.msra.mxu0 %v195
    %683 = vmatprep.subr.mxu0 0.0
    %684 = vmatpush1.msra.mxu0 %v196
    %685 = vmatprep.subr.mxu0 0.0
    %686 = vmatpush1.msra.mxu0 %v197
    %687 = vmatprep.subr.mxu0 0.0
    %688 = vmatpush1.msra.mxu0 %v198
    %689 = vmatprep.subr.mxu0 0.0
    %690 = vmatpush1.msra.mxu0 %v199
    %691 = vmatprep.subr.mxu0 0.0
    %692 = vmatpush1.msra.mxu0 %v200
    %693 = vmatprep.subr.mxu0 0.0
    %694 = vmatpush1.msra.mxu0 %v201
    %695 = vmatprep.subr.mxu0 0.0
    %696 = vmatpush1.msra.mxu0 %v202
    %697 = vmatprep.subr.mxu0 0.0
    %698 = vmatpush1.msra.mxu0 %v203
    %699 = vmatprep.subr.mxu0 0.0
    %700 = vmatpush1.msra.mxu0 %v204
    %701 = vmatprep.subr.mxu0 0.0
    %702 = vmatpush1.msra.mxu0 %v205
    %703 = vmatprep.subr.mxu0 0.0
    %704 = vmatpush1.msra.mxu0 %v206
    %705 = vmatprep.subr.mxu0 0.0
    %706 = vmatpush1.msra.mxu0 %v207
    %707 = vmatprep.subr.mxu0 0.0
    %708 = vmatpush1.msra.mxu0 %v208
    %709 = vmatprep.subr.mxu0 0.0
    %710 = vmatpush1.msra.mxu0 %v209
    %711 = vmatprep.subr.mxu0 0.0
    %712 = vmatpush1.msra.mxu0 %v210
    %713 = vmatprep.mubr.f32.mxu0 %v276
    %714 = vmatmul.mubr.f32.gmra.mrb[0].mxu0 %v274
    %v715 = vpop.f32.mrb[0].mxu0
    %v716 = vadd.f32 %v646, %v715
    %v717 = vpop.f32.mrb[0].mxu0
    %718 = vdwg.mxu0
    %719 = vmatprep.subr.mxu0 0.0
    %720 = vmatpush1.msra.mxu0 %v211
    %721 = vmatprep.subr.mxu0 0.0
    %722 = vmatpush1.msra.mxu0 %v212
    %723 = vmatprep.subr.mxu0 0.0
    %724 = vmatpush1.msra.mxu0 %v213
    %725 = vmatprep.subr.mxu0 0.0
    %726 = vmatpush1.msra.mxu0 %v214
    %727 = vmatprep.subr.mxu0 0.0
    %728 = vmatpush1.msra.mxu0 0.0
    %729 = vmatprep.subr.mxu0 0.0
    %730 = vmatpush1.msra.mxu0 0.0
    %731 = vmatprep.subr.mxu0 0.0
    %732 = vmatpush1.msra.mxu0 0.0
    %733 = vmatprep.subr.mxu0 0.0
    %734 = vmatpush1.msra.mxu0 0.0
    %735 = vmatprep.subr.mxu0 0.0
    %736 = vmatpush1.msra.mxu0 0.0
    %737 = vmatprep.subr.mxu0 0.0
    %738 = vmatpush1.msra.mxu0 0.0
    %739 = vmatprep.subr.mxu0 0.0
    %740 = vmatpush1.msra.mxu0 0.0
    %741 = vmatprep.subr.mxu0 0.0
    %742 = vmatpush1.msra.mxu0 0.0
    %743 = vmatprep.subr.mxu0 0.0
    %744 = vmatpush1.msra.mxu0 0.0
    %745 = vmatprep.subr.mxu0 0.0
    %746 = vmatpush1.msra.mxu0 0.0
    %747 = vmatprep.subr.mxu0 0.0
    %748 = vmatpush1.msra.mxu0 0.0
    %749 = vmatprep.subr.mxu0 0.0
    %750 = vmatpush1.msra.mxu0 0.0
    %751 = vmatprep.subr.mxu0 0.0
    %752 = vmatpush1.msra.mxu0 0.0
    %753 = vmatprep.subr.mxu0 0.0
    %754 = vmatpush1.msra.mxu0 0.0
    %755 = vmatprep.subr.mxu0 0.0
    %756 = vmatpush1.msra.mxu0 0.0
    %757 = vmatprep.subr.mxu0 0.0
    %758 = vmatpush1.msra.mxu0 0.0
    %759 = vmatprep.subr.mxu0 0.0
    %760 = vmatpush1.msra.mxu0 0.0
    %761 = vmatprep.subr.mxu0 0.0
    %762 = vmatpush1.msra.mxu0 0.0
    %763 = vmatprep.subr.mxu0 0.0
    %764 = vmatpush1.msra.mxu0 0.0
    %765 = vmatprep.subr.mxu0 0.0
    %766 = vmatpush1.msra.mxu0 0.0
    %767 = vmatprep.subr.mxu0 0.0
    %768 = vmatpush1.msra.mxu0 0.0
    %769 = vmatprep.subr.mxu0 0.0
    %770 = vmatpush1.msra.mxu0 0.0
    %771 = vmatprep.subr.mxu0 0.0
    %772 = vmatpush1.msra.mxu0 0.0
    %773 = vmatprep.subr.mxu0 0.0
    %774 = vmatpush1.msra.mxu0 0.0
    %775 = vmatprep.subr.mxu0 0.0
    %776 = vmatpush1.msra.mxu0 0.0
    %777 = vmatprep.subr.mxu0 0.0
    %778 = vmatpush1.msra.mxu0 0.0
    %779 = vmatprep.subr.mxu0 0.0
    %780 = vmatpush1.msra.mxu0 0.0
    %781 = vmatprep.subr.mxu0 0.0
    %782 = vmatpush1.msra.mxu0 0.0
    %783 = vmatprep.mubr.f32.mxu0 0.0
    %784 = vmatmul.mubr.f32.gmra.mrb[0].mxu0 %v297
    %v785 = vpop.f32.mrb[0].mxu0
    %v786 = vadd.f32 %v716, %v785
    %v787 = vpop.f32.mrb[0].mxu0
    %788 = vdwg.mxu0
    %vm789 = vcmask 74752
    %790 = vst.msk [vmem:[#allocation2] sm:$0x3] %vm789, %v786
    // Predicated region
    $region14: #{cnn_forward.5} parent=1 // pred_check
      _
    $region15: #{cnn_forward.5} parent=1 // pred_check_branch
      %792 = sbr.rel (0) target = $region17
    $region16: #{cnn_forward.5} parent=1 // pred_region
      %s794 = ssub.s32 32, 32
      %795 = vsyncadd [#allocation3], %s794
      %s797 = sshll.u32 [#allocation2], 4
      %s798 = int_to_ptr.vmem [resolvable:$true] %s797
      %800 = dma.vmem_to_hbm [thread:$0]  %s798, 32, %s3, [#allocation3]
    $region17: #{cnn_forward.5} parent=1 // pred_fallthru
      _
    // Predicated region
    $region18: #{cnn_forward.5} parent=1 // pred_check
      _
    $region19: #{cnn_forward.5} parent=1 // pred_check_branch
      %802 = sbr.rel (0) target = $region21
    $region20: #{cnn_forward.5} parent=1 // pred_region
      %803 = dma.done [#allocation3], 32
    $region21: #{cnn_forward.5} parent=1 // pred_fallthru
      _
    %804 = vsyncpa [#allocation3], 1

// kernel: cnn_forward.4
$region0: #{cnn_forward.4}
  #allocation0 [shape = 'u32[]', space=smem, size = 0x4, offset = 0x4, fixed_abs, tag = 'smem constant byte address 0x4 - core index']
  #allocation1 [shape = 'u32[144,128]{1,0:T(1,128)}', space=vmem, size = 0x12000, scoped, tag = 'internal scratch']
  %s0 = inlined_call_operand.vmem [shape: bf16[2,176,32], index: 0, kind: input, shape index: {}]
  %s1 = inlined_call_operand.vmem [shape: bf16[576,128], index: 1, kind: input, shape index: {}]
  %s2 = inlined_call_operand.vmem [shape: f32[1,32], index: 2, kind: input, shape index: {}]
  %s3 = inlined_call_operand.vmem [shape: f32[2,128,32], index: 3, kind: output, shape index: {}]
  %s4 = sld [smem:[#allocation0]]
  $region45: #{cnn_forward.4} parent=0
    _
  %s6 = ssub.s32 1, %s4
  %s7 = scalar_select 0, %s6, %s4
  loop: start=0, step=1, limit=4
  $region2: #{cnn_forward.4} parent=0 // loop_pre_header
    _
  $region3: #{cnn_forward.4} parent=0 // loop_header
    %s9 = sphi 0, %s13
    %p10 = scmp.ge.s32.totalorder %s9, 4
    %s19 = sphi 0, %s21
    %s22 = sphi 0, %s19
    %s23 = sphi 0, %s22
    %s39 = sphi 0, %s23
    %s43 = sphi 0, %s43
    %s45 = sphi 0, %s43
    %s46 = sphi 0, %s45
    %s60 = sphi 0, %s46
    %s64 = sphi 0, %s64
    %s66 = sphi 0, %s64
    %s67 = sphi 0, %s66
    %s81 = sphi 0, %s67
    %s87 = sphi 0, %s89
    %s90 = sphi 0, %s87
    %s91 = sphi 0, %s90
    %s107 = sphi 0, %s91
  $region4: #{cnn_forward.4} parent=0 // loop_header_branch
    %12 = sbr.rel (%p10) target = $region8
  $region5: #{cnn_forward.4} parent=0 // loop_body
    %s14 = ssub.s32 %s9, 1
    %s15 = ssub.s32 %s9, 2
    %s16 = sadd.s32 %s9, 1
    %s17 = ssub.s32 %s9, %s16
    %p18 = scmp.eq.s32.totalorder %s17, 0
    %s20 = sadd.s32 %s19, 1
    %s21 = scalar_select %p18, %s19, %s20
    %p24 = pneg %p18
    %p25 = scmp.eq.s32.totalorder %s9, 1
    %p26 = por %p24, %p25
    %p27 = scmp.ne.s32.totalorder %s19, %s22
    %p28 = scmp.eq.s32.totalorder %s9, 0
    %p29 = por %p27, %p28
    %p30 = scmp.ne.s32.totalorder %s19, %s22
    %p31 = scmp.eq.s32.totalorder %s14, 1
    %p32 = por %p30, %p31
    %p33 = scmp.ne.s32.totalorder %s22, %s23
    %p34 = scmp.eq.s32.totalorder %s14, 0
    %p35 = por %p33, %p34
    %p36 = scmp.ne.s32.totalorder %s22, %s23
    %p37 = scmp.eq.s32.totalorder %s15, 1
    %p38 = por %p36, %p37
    %p40 = scmp.ne.s32.totalorder %s23, %s39
    %p41 = scmp.eq.s32.totalorder %s15, 0
    %p42 = por %p40, %p41
    %s44 = sadd.s32 %s43, 1
    %p47 = scmp.eq.s32.totalorder %s9, 1
    %p48 = scmp.ne.s32.totalorder %s43, %s45
    %p49 = scmp.eq.s32.totalorder %s9, 0
    %p50 = por %p48, %p49
    %p51 = scmp.ne.s32.totalorder %s43, %s45
    %p52 = scmp.eq.s32.totalorder %s14, 1
    %p53 = por %p51, %p52
    %p54 = scmp.ne.s32.totalorder %s45, %s46
    %p55 = scmp.eq.s32.totalorder %s14, 0
    %p56 = por %p54, %p55
    %p57 = scmp.ne.s32.totalorder %s45, %s46
    %p58 = scmp.eq.s32.totalorder %s15, 1
    %p59 = por %p57, %p58
    %p61 = scmp.ne.s32.totalorder %s46, %s60
    %p62 = scmp.eq.s32.totalorder %s15, 0
    %p63 = por %p61, %p62
    %s65 = sadd.s32 %s64, 1
    %p68 = scmp.eq.s32.totalorder %s9, 1
    %p69 = scmp.ne.s32.totalorder %s64, %s66
    %p70 = scmp.eq.s32.totalorder %s9, 0
    %p71 = por %p69, %p70
    %p72 = scmp.ne.s32.totalorder %s64, %s66
    %p73 = scmp.eq.s32.totalorder %s14, 1
    %p74 = por %p72, %p73
    %p75 = scmp.ne.s32.totalorder %s66, %s67
    %p76 = scmp.eq.s32.totalorder %s14, 0
    %p77 = por %p75, %p76
    %p78 = scmp.ne.s32.totalorder %s66, %s67
    %p79 = scmp.eq.s32.totalorder %s15, 1
    %p80 = por %p78, %p79
    %p82 = scmp.ne.s32.totalorder %s67, %s81
    %p83 = scmp.eq.s32.totalorder %s15, 0
    %p84 = por %p82, %p83
    %s85 = ssub.s32 %s9, %s16
    %p86 = scmp.eq.s32.totalorder %s85, 0
    %s88 = sadd.s32 %s87, 1
    %s89 = scalar_select %p86, %s87, %s88
    %p92 = pneg %p86
    %p93 = scmp.eq.s32.totalorder %s9, 1
    %p94 = por %p92, %p93
    %p95 = scmp.ne.s32.totalorder %s87, %s90
    %p96 = scmp.eq.s32.totalorder %s9, 0
    %p97 = por %p95, %p96
    %p98 = scmp.ne.s32.totalorder %s87, %s90
    %p99 = scmp.eq.s32.totalorder %s14, 1
    %p100 = por %p98, %p99
    %p101 = scmp.ne.s32.totalorder %s90, %s91
    %p102 = scmp.eq.s32.totalorder %s14, 0
    %p103 = por %p101, %p102
    %p104 = scmp.ne.s32.totalorder %s90, %s91
    %p105 = scmp.eq.s32.totalorder %s15, 1
    %p106 = por %p104, %p105
    %p108 = scmp.ne.s32.totalorder %s91, %s107
    %p109 = scmp.eq.s32.totalorder %s15, 0
    %p110 = por %p108, %p109
    %p111 = scmp.le.s32.totalorder 1, %s9
    %p112 = scmp.lt.s32.totalorder %s9, 3
    %p113 = pnand %p111, %p112
    %p114 = pneg %p113
    // Predicated region
    $region9: #{cnn_forward.4} parent=5 // pred_check
      _
    $region10: #{cnn_forward.4} parent=5 // pred_check_branch
      %116 = sbr.rel (%p113) target = $region12
    $region11: #{cnn_forward.4} parent=5 // pred_region
      %s117 = ssub.s32 %s9, 1
      // Predicated region
      $region13: #{cnn_forward.4} parent=11 // pred_check
        %p118 = pneg %p56
      $region14: #{cnn_forward.4} parent=11 // pred_check_branch
        %120 = sbr.rel (%p118) target = $region16
      $region15: #{cnn_forward.4} parent=11 // pred_region
        _
      $region16: #{cnn_forward.4} parent=11 // pred_fallthru
        _
      // Predicated region
      $region17: #{cnn_forward.4} parent=11 // pred_check
        %p121 = pneg %p77
      $region18: #{cnn_forward.4} parent=11 // pred_check_branch
        %123 = sbr.rel (%p121) target = $region20
      $region19: #{cnn_forward.4} parent=11 // pred_region
        _
      $region20: #{cnn_forward.4} parent=11 // pred_fallthru
        _
    $region12: #{cnn_forward.4} parent=5 // pred_fallthru
      _
    %p124 = scmp.lt.s32.totalorder %s9, 2
    // Predicated region
    $region21: #{cnn_forward.4} parent=5 // pred_check
      %p125 = pneg %p124
    $region22: #{cnn_forward.4} parent=5 // pred_check_branch
      %127 = sbr.rel (%p125) target = $region24
    $region23: #{cnn_forward.4} parent=5 // pred_region
      // Predicated region
      $region25: #{cnn_forward.4} parent=23 // pred_check
        %p128 = pneg %p29
      $region26: #{cnn_forward.4} parent=23 // pred_check_branch
        %130 = sbr.rel (%p128) target = $region28
      $region27: #{cnn_forward.4} parent=23 // pred_region
        %p131 = scmp.lt.s32.totalorder %s9, 1
        %s132 = scalar_select %p131, %s9, 1
        %s133 = smul.addr %s132, 22
        %s134 = smul.addr %s133, 4
        %s135 = scalar_lea.vmem %s0, %s134
      $region28: #{cnn_forward.4} parent=23 // pred_fallthru
        _
    $region24: #{cnn_forward.4} parent=5 // pred_fallthru
      _
    %p136 = scmp.le.s32.totalorder 1, %s9
    %p137 = scmp.lt.s32.totalorder %s9, 3
    %p138 = pnand %p136, %p137
    %p139 = pneg %p138
    // Predicated region
    $region29: #{cnn_forward.4} parent=5 // pred_check
      _
    $region30: #{cnn_forward.4} parent=5 // pred_check_branch
      %141 = sbr.rel (%p138) target = $region32
    $region31: #{cnn_forward.4} parent=5 // pred_region
      %s142 = ssub.s32 %s9, 1
      %p143 = scmp.lt.s32.totalorder %s14, 1
      %s144 = scalar_select %p143, %s14, 1
      %s145 = smul.addr %s144, 22
      %s146 = smul.addr %s145, 4
      %s147 = scalar_lea.vmem %s0, %s146
      %p148 = pneg %p35
      %p149 = pneg %p32
      %p150 = pneg %p56
      %p151 = pneg %p53
      %p152 = pneg %p77
      %p153 = pneg %p74
      %p154 = pneg %p103
      %p155 = pneg %p100
      %p156 = scmp.lt.s32.totalorder %s14, 1
      %s157 = scalar_select %p156, %s14, 1
      %s158 = smul.addr %s157, 16
      %s159 = smul.addr %s158, 8
      %s160 = scalar_lea.vmem %s3, %s159
      %p161 = scmp.lt.s32.totalorder %s14, 1
      %s162 = scalar_select %p161, %s14, 1
      %s163 = smul.addr %s162, 22
      %s164 = smul.addr %s163, 4
      %s165 = scalar_lea.vmem %s0, %s164
      %p166 = scmp.lt.s32.totalorder %s14, 1
      %s167 = scalar_select %p166, %s14, 1
      %s168 = smul.addr %s167, 16
      %s169 = smul.addr %s168, 8
      %s170 = scalar_lea.vmem %s3, %s169
      %v172 = vld [vmem:[%s165] sm:$0xf]
      %v173 = vld [vmem:[%s165 + $0x4] sm:$0xf]
      %v174 = vld [vmem:[%s165 + $0x8] sm:$0xf]
      %v175 = vld [vmem:[%s165 + $0xc] sm:$0xf]
      %v176 = vld [vmem:[%s165 + $0x10] sm:$0xf]
      %v177 = vld [vmem:[%s165 + $0x14] sm:$0xf]
      %v178 = vld [vmem:[%s165 + $0x18] sm:$0xf]
      %v179 = vld [vmem:[%s165 + $0x1c] sm:$0xf]
      %v180 = vld [vmem:[%s165 + $0x20] sm:$0xf]
      %v181 = vld [vmem:[%s165 + $0x24] sm:$0xf]
      %v182 = vld [vmem:[%s165 + $0x28] sm:$0xf]
      %v183 = vld [vmem:[%s165 + $0x2c] sm:$0xf]
      %v184 = vld [vmem:[%s165 + $0x30] sm:$0xf]
      %v185 = vld [vmem:[%s165 + $0x34] sm:$0xf]
      %v186 = vld [vmem:[%s165 + $0x38] sm:$0xf]
      %v187 = vld [vmem:[%s165 + $0x3c] sm:$0xf]
      %v188 = vld [vmem:[%s165 + $0x40] sm:$0x1]
      %v189 = vld [vmem:[%s165] sm:$0xe]
      %v190 = vld [vmem:[%s165 + $0x40] sm:$0xf]
      %v191 = vld [vmem:[%s165 + $0x44] sm:$0x1]
      %v192 = vld [vmem:[%s165 + $0x4] sm:$0xe]
      %v193 = vld [vmem:[%s165 + $0x44] sm:$0x3]
      %v194 = vld [vmem:[%s165 + $0x8] sm:$0xe]
      %v195 = vld [vmem:[%s165 + $0x44] sm:$0xf]
      %v196 = vld [vmem:[%s165 + $0x48] sm:$0x1]
      %v197 = vld [vmem:[%s165 + $0x48] sm:$0x3]
      %v198 = vld [vmem:[%s165 + $0x8] sm:$0xc]
      %v199 = vld [vmem:[%s165 + $0xc] sm:$0xe]
      %v200 = vld [vmem:[%s165 + $0x48] sm:$0xf]
      %v201 = vld [vmem:[%s165 + $0x4c] sm:$0x3]
      %v202 = vld [vmem:[%s165 + $0xc] sm:$0xc]
      %v203 = vld [vmem:[%s165 + $0x4c] sm:$0x7]
      %v204 = vld [vmem:[%s165 + $0x10] sm:$0xc]
      %v205 = vld [vmem:[%s165 + $0x4c] sm:$0xf]
      %v206 = vld [vmem:[%s165 + $0x50] sm:$0x3]
      %v207 = vld [vmem:[%s165 + $0x50] sm:$0x7]
      %v208 = vld [vmem:[%s165 + $0x10] sm:$0x8]
      %v209 = vld [vmem:[%s165 + $0x14] sm:$0xc]
      %v210 = vld [vmem:[%s165 + $0x50] sm:$0xf]
      %v211 = vld [vmem:[%s165 + $0x54] sm:$0x7]
      %v212 = vld [vmem:[%s165 + $0x14] sm:$0x8]
      %v213 = vld [vmem:[%s165 + $0x54] sm:$0xf]
      %v230 = vunpack.c.l.b16 %v172
      %v231 = vunpack.c.l.b16 %v173
      %v232 = vunpack.c.l.b16 %v174
      %v233 = vunpack.c.l.b16 %v175
      %v234 = vunpack.c.l.b16 %v176
      %v235 = vunpack.c.l.b16 %v177
      %v236 = vunpack.c.l.b16 %v178
      %v237 = vunpack.c.l.b16 %v179
      %v238 = vunpack.c.l.b16 %v180
      %v239 = vunpack.c.l.b16 %v181
      %v240 = vunpack.c.l.b16 %v182
      %v241 = vunpack.c.l.b16 %v183
      %v242 = vunpack.c.l.b16 %v184
      %v243 = vunpack.c.l.b16 %v185
      %v244 = vunpack.c.l.b16 %v186
      %v245 = vunpack.c.l.b16 %v187
      %v246 = vpack.c.b16 %v231, %v230
      %v247 = vpack.c.b16 %v233, %v232
      %v248 = vpack.c.b16 %v235, %v234
      %v249 = vpack.c.b16 %v237, %v236
      %v250 = vpack.c.b16 %v239, %v238
      %v251 = vpack.c.b16 %v241, %v240
      %v252 = vpack.c.b16 %v243, %v242
      %v253 = vpack.c.b16 %v245, %v244
      %v255 = vunpack.c.l.b16 %v188
      %v256 = vpack.c.b16 %v255, %v255
      %vm257 = vsmask.f32 7424
      %v259 = vshrl.u32 %v246, 16
      %v261 = vshll.u32 %v246, 16
      %v263 = vrot.slane %v261, 1
      %v264 = vor.u32 %v259, %v263
      %v266 = vshll.u32 %v247, 16
      %v268 = vrot.slane %v266, 1
      %v269 = vsel %vm257, %v264, %v268
      %v270 = vshrl.u32 %v247, 16
      %v272 = vor.u32 %v270, %v268
      %v274 = vshll.u32 %v248, 16
      %v276 = vrot.slane %v274, 1
      %v277 = vsel %vm257, %v272, %v276
      %v278 = vshrl.u32 %v248, 16
      %v280 = vor.u32 %v278, %v276
      %v282 = vshll.u32 %v249, 16
      %v284 = vrot.slane %v282, 1
      %v285 = vsel %vm257, %v280, %v284
      %v286 = vshrl.u32 %v249, 16
      %v288 = vor.u32 %v286, %v284
      %v290 = vshll.u32 %v250, 16
      %v292 = vrot.slane %v290, 1
      %v293 = vsel %vm257, %v288, %v292
      %v294 = vshrl.u32 %v250, 16
      %v296 = vor.u32 %v294, %v292
      %v298 = vshll.u32 %v251, 16
      %v300 = vrot.slane %v298, 1
      %v301 = vsel %vm257, %v296, %v300
      %v302 = vshrl.u32 %v251, 16
      %v304 = vor.u32 %v302, %v300
      %v306 = vshll.u32 %v252, 16
      %v308 = vrot.slane %v306, 1
      %v309 = vsel %vm257, %v304, %v308
      %v310 = vshrl.u32 %v252, 16
      %v312 = vor.u32 %v310, %v308
      %v314 = vshll.u32 %v253, 16
      %v316 = vrot.slane %v314, 1
      %v317 = vsel %vm257, %v312, %v316
      %v318 = vshrl.u32 %v253, 16
      %v320 = vor.u32 %v318, %v316
      %v322 = vshll.u32 %v256, 16
      %v324 = vrot.slane %v322, 1
      %v325 = vsel %vm257, %v320, %v324
      %326 = vrot.lane.b32.xlu0 %v269, 32
      %v327 = vpop.permute.xlu0 %326
      %328 = vrot.lane.b32.xlu0 %v277, 32
      %v329 = vpop.permute.xlu0 %328
      %330 = vrot.lane.b32.xlu0 %v285, 32
      %v331 = vpop.permute.xlu0 %330
      %332 = vrot.lane.b32.xlu0 %v293, 32
      %v333 = vpop.permute.xlu0 %332
      %334 = vrot.lane.b32.xlu0 %v301, 32
      %v335 = vpop.permute.xlu0 %334
      %336 = vrot.lane.b32.xlu0 %v309, 32
      %v337 = vpop.permute.xlu0 %336
      %338 = vrot.lane.b32.xlu0 %v317, 32
      %v339 = vpop.permute.xlu0 %338
      %340 = vrot.lane.b32.xlu0 %v325, 32
      %v341 = vpop.permute.xlu0 %340
      %v343 = vunpack.c.l.b16 %v189
      %v344 = vpack.c.b16 %v231, %v343
      %vm345 = vcmask 1046528
      %v346 = vrot.slane %v344, 1
      %v347 = vrot.slane %v247, 1
      %v348 = vsel %vm345, %v346, %v347
      %v349 = vrot.slane %v248, 1
      %v350 = vsel %vm345, %v347, %v349
      %v351 = vrot.slane %v249, 1
      %v352 = vsel %vm345, %v349, %v351
      %v353 = vrot.slane %v250, 1
      %v354 = vsel %vm345, %v351, %v353
      %v355 = vrot.slane %v251, 1
      %v356 = vsel %vm345, %v353, %v355
      %v357 = vrot.slane %v252, 1
      %v358 = vsel %vm345, %v355, %v357
      %v359 = vrot.slane %v253, 1
      %v360 = vsel %vm345, %v357, %v359
      %v361 = vrot.slane %v256, 1
      %v362 = vsel %vm345, %v359, %v361
      %363 = vrot.lane.b32.xlu0 %v348, 64
      %v364 = vpop.permute.xlu0 %363
      %365 = vrot.lane.b32.xlu0 %v350, 64
      %v366 = vpop.permute.xlu0 %365
      %367 = vrot.lane.b32.xlu0 %v352, 64
      %v368 = vpop.permute.xlu0 %367
      %369 = vrot.lane.b32.xlu0 %v354, 64
      %v370 = vpop.permute.xlu0 %369
      %371 = vrot.lane.b32.xlu0 %v356, 64
      %v372 = vpop.permute.xlu0 %371
      %373 = vrot.lane.b32.xlu0 %v358, 64
      %v374 = vpop.permute.xlu0 %373
      %375 = vrot.lane.b32.xlu0 %v360, 64
      %v376 = vpop.permute.xlu0 %375
      %377 = vrot.lane.b32.xlu0 %v362, 64
      %v378 = vpop.permute.xlu0 %377
      %v381 = vunpack.c.l.b16 %v190
      %v382 = vunpack.c.l.b16 %v191
      %v383 = vpack.c.b16 %v232, %v231
      %v384 = vpack.c.b16 %v234, %v233
      %v385 = vpack.c.b16 %v236, %v235
      %v386 = vpack.c.b16 %v238, %v237
      %v387 = vpack.c.b16 %v240, %v239
      %v388 = vpack.c.b16 %v242, %v241
      %v389 = vpack.c.b16 %v244, %v243
      %v390 = vpack.c.b16 %v381, %v245
      %v391 = vpack.c.b16 %v382, %v382
      %v393 = vshrl.u32 %v383, 16
      %v395 = vshll.u32 %v383, 16
      %v397 = vrot.slane %v395, 1
      %v398 = vor.u32 %v393, %v397
      %v400 = vshll.u32 %v384, 16
      %v402 = vrot.slane %v400, 1
      %v403 = vsel %vm257, %v398, %v402
      %v404 = vshrl.u32 %v384, 16
      %v406 = vor.u32 %v404, %v402
      %v408 = vshll.u32 %v385, 16
      %v410 = vrot.slane %v408, 1
      %v411 = vsel %vm257, %v406, %v410
      %v412 = vshrl.u32 %v385, 16
      %v414 = vor.u32 %v412, %v410
      %v416 = vshll.u32 %v386, 16
      %v418 = vrot.slane %v416, 1
      %v419 = vsel %vm257, %v414, %v418
      %v420 = vshrl.u32 %v386, 16
      %v422 = vor.u32 %v420, %v418
      %v424 = vshll.u32 %v387, 16
      %v426 = vrot.slane %v424, 1
      %v427 = vsel %vm257, %v422, %v426
      %v428 = vshrl.u32 %v387, 16
      %v430 = vor.u32 %v428, %v426
      %v432 = vshll.u32 %v388, 16
      %v434 = vrot.slane %v432, 1
      %v435 = vsel %vm257, %v430, %v434
      %v436 = vshrl.u32 %v388, 16
      %v438 = vor.u32 %v436, %v434
      %v440 = vshll.u32 %v389, 16
      %v442 = vrot.slane %v440, 1
      %v443 = vsel %vm257, %v438, %v442
      %v444 = vshrl.u32 %v389, 16
      %v446 = vor.u32 %v444, %v442
      %v448 = vshll.u32 %v390, 16
      %v450 = vrot.slane %v448, 1
      %v451 = vsel %vm257, %v446, %v450
      %v452 = vshrl.u32 %v390, 16
      %v454 = vor.u32 %v452, %v450
      %v456 = vshll.u32 %v391, 16
      %v458 = vrot.slane %v456, 1
      %v459 = vsel %vm257, %v454, %v458
      %460 = vrot.lane.b32.xlu0 %v403, 96
      %v461 = vpop.permute.xlu0 %460
      %462 = vrot.lane.b32.xlu0 %v411, 96
      %v463 = vpop.permute.xlu0 %462
      %464 = vrot.lane.b32.xlu0 %v419, 96
      %v465 = vpop.permute.xlu0 %464
      %466 = vrot.lane.b32.xlu0 %v427, 96
      %v467 = vpop.permute.xlu0 %466
      %468 = vrot.lane.b32.xlu0 %v435, 96
      %v469 = vpop.permute.xlu0 %468
      %470 = vrot.lane.b32.xlu0 %v443, 96
      %v471 = vpop.permute.xlu0 %470
      %472 = vrot.lane.b32.xlu0 %v451, 96
      %v473 = vpop.permute.xlu0 %472
      %474 = vrot.lane.b32.xlu0 %v459, 96
      %v475 = vpop.permute.xlu0 %474
      %v477 = vunpack.c.l.b16 %v192
      %v478 = vpack.c.b16 %v232, %v477
      %v479 = vrot.slane %v478, 1
      %v480 = vrot.slane %v384, 1
      %v481 = vsel %vm345, %v479, %v480
      %v482 = vrot.slane %v385, 1
      %v483 = vsel %vm345, %v480, %v482
      %v484 = vrot.slane %v386, 1
      %v485 = vsel %vm345, %v482, %v484
      %v486 = vrot.slane %v387, 1
      %v487 = vsel %vm345, %v484, %v486
      %v488 = vrot.slane %v388, 1
      %v489 = vsel %vm345, %v486, %v488
      %v490 = vrot.slane %v389, 1
      %v491 = vsel %vm345, %v488, %v490
      %v492 = vrot.slane %v390, 1
      %v493 = vsel %vm345, %v490, %v492
      %v494 = vrot.slane %v391, 1
      %v495 = vsel %vm345, %v492, %v494
      %v497 = vunpack.c.l.b16 %v193
      %v498 = vpack.c.b16 %v497, %v497
      %vm499 = vsmask.f32 6400
      %v501 = vshrl.u32 %v478, 16
      %v503 = vrot.slane %v501, 1
      %v504 = vshll.u32 %v478, 16
      %v506 = vrot.slane %v504, 2
      %v507 = vor.u32 %v503, %v506
      %v508 = vrot.slane %v404, 1
      %v509 = vrot.slane %v400, 2
      %v510 = vor.u32 %v508, %v509
      %v511 = vsel %vm499, %v507, %v510
      %v512 = vrot.slane %v412, 1
      %v513 = vrot.slane %v408, 2
      %v514 = vor.u32 %v512, %v513
      %v515 = vsel %vm499, %v510, %v514
      %v516 = vrot.slane %v420, 1
      %v517 = vrot.slane %v416, 2
      %v518 = vor.u32 %v516, %v517
      %v519 = vsel %vm499, %v514, %v518
      %v520 = vrot.slane %v428, 1
      %v521 = vrot.slane %v424, 2
      %v522 = vor.u32 %v520, %v521
      %v523 = vsel %vm499, %v518, %v522
      %v524 = vrot.slane %v436, 1
      %v525 = vrot.slane %v432, 2
      %v526 = vor.u32 %v524, %v525
      %v527 = vsel %vm499, %v522, %v526
      %v528 = vrot.slane %v444, 1
      %v529 = vrot.slane %v440, 2
      %v530 = vor.u32 %v528, %v529
      %v531 = vsel %vm499, %v526, %v530
      %v532 = vrot.slane %v452, 1
      %v533 = vrot.slane %v448, 2
      %v534 = vor.u32 %v532, %v533
      %v535 = vsel %vm499, %v530, %v534
      %v537 = vshrl.u32 %v498, 16
      %v539 = vrot.slane %v537, 1
      %v540 = vshll.u32 %v498, 16
      %v542 = vrot.slane %v540, 2
      %v543 = vor.u32 %v539, %v542
      %v544 = vsel %vm499, %v534, %v543
      %545 = vrot.lane.b32.xlu0 %v511, 32
      %v546 = vpop.permute.xlu0 %545
      %547 = vrot.lane.b32.xlu0 %v515, 32
      %v548 = vpop.permute.xlu0 %547
      %549 = vrot.lane.b32.xlu0 %v519, 32
      %v550 = vpop.permute.xlu0 %549
      %551 = vrot.lane.b32.xlu0 %v523, 32
      %v552 = vpop.permute.xlu0 %551
      %553 = vrot.lane.b32.xlu0 %v527, 32
      %v554 = vpop.permute.xlu0 %553
      %555 = vrot.lane.b32.xlu0 %v531, 32
      %v556 = vpop.permute.xlu0 %555
      %557 = vrot.lane.b32.xlu0 %v535, 32
      %v558 = vpop.permute.xlu0 %557
      %559 = vrot.lane.b32.xlu0 %v544, 32
      %v560 = vpop.permute.xlu0 %559
      %v564 = vunpack.c.l.b16 %v194
      %v565 = vunpack.c.l.b16 %v195
      %v566 = vunpack.c.l.b16 %v196
      %v567 = vpack.c.b16 %v233, %v564
      %v568 = vpack.c.b16 %v565, %v381
      %v569 = vpack.c.b16 %v566, %v566
      %v570 = vrot.slane %v567, 1
      %v571 = vsel %vm345, %v570, %v349
      %v572 = vrot.slane %v568, 1
      %v573 = vsel %vm345, %v359, %v572
      %v574 = vrot.slane %v569, 1
      %v575 = vsel %vm345, %v572, %v574
      %576 = vrot.lane.b32.xlu0 %v571, 64
      %v577 = vpop.permute.xlu0 %576
      %578 = vrot.lane.b32.xlu0 %v573, 64
      %v579 = vpop.permute.xlu0 %578
      %580 = vrot.lane.b32.xlu0 %v575, 64
      %v581 = vpop.permute.xlu0 %580
      %v583 = vunpack.c.l.b16 %v197
      %v584 = vpack.c.b16 %v583, %v583
      %v586 = vshrl.u32 %v567, 16
      %v588 = vrot.slane %v586, 1
      %v589 = vshll.u32 %v567, 16
      %v591 = vrot.slane %v589, 2
      %v592 = vor.u32 %v588, %v591
      %v593 = vrot.slane %v278, 1
      %v594 = vrot.slane %v274, 2
      %v595 = vor.u32 %v593, %v594
      %v596 = vsel %vm499, %v592, %v595
      %v597 = vrot.slane %v286, 1
      %v598 = vrot.slane %v282, 2
      %v599 = vor.u32 %v597, %v598
      %v600 = vsel %vm499, %v595, %v599
      %v601 = vrot.slane %v294, 1
      %v602 = vrot.slane %v290, 2
      %v603 = vor.u32 %v601, %v602
      %v604 = vsel %vm499, %v599, %v603
      %v605 = vrot.slane %v302, 1
      %v606 = vrot.slane %v298, 2
      %v607 = vor.u32 %v605, %v606
      %v608 = vsel %vm499, %v603, %v607
      %v609 = vrot.slane %v310, 1
      %v610 = vrot.slane %v306, 2
      %v611 = vor.u32 %v609, %v610
      %v612 = vsel %vm499, %v607, %v611
      %v613 = vrot.slane %v318, 1
      %v614 = vrot.slane %v314, 2
      %v615 = vor.u32 %v613, %v614
      %v616 = vsel %vm499, %v611, %v615
      %v618 = vshrl.u32 %v568, 16
      %v620 = vrot.slane %v618, 1
      %v621 = vshll.u32 %v568, 16
      %v623 = vrot.slane %v621, 2
      %v624 = vor.u32 %v620, %v623
      %v625 = vsel %vm499, %v615, %v624
      %v627 = vshrl.u32 %v584, 16
      %v629 = vrot.slane %v627, 1
      %v630 = vshll.u32 %v584, 16
      %v632 = vrot.slane %v630, 2
      %v633 = vor.u32 %v629, %v632
      %v634 = vsel %vm499, %v624, %v633
      %635 = vrot.lane.b32.xlu0 %v596, 96
      %v636 = vpop.permute.xlu0 %635
      %637 = vrot.lane.b32.xlu0 %v600, 96
      %v638 = vpop.permute.xlu0 %637
      %639 = vrot.lane.b32.xlu0 %v604, 96
      %v640 = vpop.permute.xlu0 %639
      %641 = vrot.lane.b32.xlu0 %v608, 96
      %v642 = vpop.permute.xlu0 %641
      %643 = vrot.lane.b32.xlu0 %v612, 96
      %v644 = vpop.permute.xlu0 %643
      %645 = vrot.lane.b32.xlu0 %v616, 96
      %v646 = vpop.permute.xlu0 %645
      %647 = vrot.lane.b32.xlu0 %v625, 96
      %v648 = vpop.permute.xlu0 %647
      %649 = vrot.lane.b32.xlu0 %v634, 96
      %v650 = vpop.permute.xlu0 %649
      %v652 = vunpack.c.l.b16 %v198
      %v653 = vpack.c.b16 %v233, %v652
      %vm654 = vcmask 1045504
      %v655 = vrot.slane %v653, 2
      %v656 = vrot.slane %v248, 2
      %v657 = vsel %vm654, %v655, %v656
      %v658 = vrot.slane %v249, 2
      %v659 = vsel %vm654, %v656, %v658
      %v660 = vrot.slane %v250, 2
      %v661 = vsel %vm654, %v658, %v660
      %v662 = vrot.slane %v251, 2
      %v663 = vsel %vm654, %v660, %v662
      %v664 = vrot.slane %v252, 2
      %v665 = vsel %vm654, %v662, %v664
      %v666 = vrot.slane %v253, 2
      %v667 = vsel %vm654, %v664, %v666
      %v668 = vrot.slane %v568, 2
      %v669 = vsel %vm654, %v666, %v668
      %v670 = vrot.slane %v584, 2
      %v671 = vsel %vm654, %v668, %v670
      %v675 = vunpack.c.l.b16 %v199
      %v676 = vunpack.c.l.b16 %v200
      %v677 = vunpack.c.l.b16 %v201
      %v678 = vpack.c.b16 %v234, %v675
      %v679 = vpack.c.b16 %v676, %v565
      %v680 = vpack.c.b16 %v677, %v677
      %v682 = vshrl.u32 %v678, 16
      %v684 = vrot.slane %v682, 1
      %v685 = vshll.u32 %v678, 16
      %v687 = vrot.slane %v685, 2
      %v688 = vor.u32 %v684, %v687
      %v689 = vsel %vm499, %v688, %v514
      %v691 = vshrl.u32 %v679, 16
      %v693 = vrot.slane %v691, 1
      %v694 = vshll.u32 %v679, 16
      %v696 = vrot.slane %v694, 2
      %v697 = vor.u32 %v693, %v696
      %v698 = vsel %vm499, %v534, %v697
      %v700 = vshrl.u32 %v680, 16
      %v702 = vrot.slane %v700, 1
      %v703 = vshll.u32 %v680, 16
      %v705 = vrot.slane %v703, 2
      %v706 = vor.u32 %v702, %v705
      %v707 = vsel %vm499, %v697, %v706
      %708 = vrot.lane.b32.xlu0 %v689, 32
      %v709 = vpop.permute.xlu0 %708
      %710 = vrot.lane.b32.xlu0 %v698, 32
      %v711 = vpop.permute.xlu0 %710
      %712 = vrot.lane.b32.xlu0 %v707, 32
      %v713 = vpop.permute.xlu0 %712
      %v715 = vunpack.c.l.b16 %v202
      %v716 = vpack.c.b16 %v234, %v715
      %v717 = vrot.slane %v716, 2
      %v718 = vrot.slane %v385, 2
      %v719 = vsel %vm654, %v717, %v718
      %v720 = vrot.slane %v386, 2
      %v721 = vsel %vm654, %v718, %v720
      %v722 = vrot.slane %v387, 2
      %v723 = vsel %vm654, %v720, %v722
      %v724 = vrot.slane %v388, 2
      %v725 = vsel %vm654, %v722, %v724
      %v726 = vrot.slane %v389, 2
      %v727 = vsel %vm654, %v724, %v726
      %v728 = vrot.slane %v390, 2
      %v729 = vsel %vm654, %v726, %v728
      %v730 = vrot.slane %v679, 2
      %v731 = vsel %vm654, %v728, %v730
      %v732 = vrot.slane %v680, 2
      %v733 = vsel %vm654, %v730, %v732
      %734 = vrot.lane.b32.xlu0 %v719, 64
      %v735 = vpop.permute.xlu0 %734
      %736 = vrot.lane.b32.xlu0 %v721, 64
      %v737 = vpop.permute.xlu0 %736
      %738 = vrot.lane.b32.xlu0 %v723, 64
      %v739 = vpop.permute.xlu0 %738
      %740 = vrot.lane.b32.xlu0 %v725, 64
      %v741 = vpop.permute.xlu0 %740
      %742 = vrot.lane.b32.xlu0 %v727, 64
      %v743 = vpop.permute.xlu0 %742
      %744 = vrot.lane.b32.xlu0 %v729, 64
      %v745 = vpop.permute.xlu0 %744
      %746 = vrot.lane.b32.xlu0 %v731, 64
      %v747 = vpop.permute.xlu0 %746
      %748 = vrot.lane.b32.xlu0 %v733, 64
      %v749 = vpop.permute.xlu0 %748
      %v751 = vunpack.c.l.b16 %v203
      %v752 = vpack.c.b16 %v751, %v751
      %vm753 = vsmask.f32 5376
      %v755 = vshrl.u32 %v716, 16
      %v757 = vrot.slane %v755, 2
      %v758 = vshll.u32 %v716, 16
      %v760 = vrot.slane %v758, 3
      %v761 = vor.u32 %v757, %v760
      %v762 = vrot.slane %v412, 2
      %v763 = vrot.slane %v408, 3
      %v764 = vor.u32 %v762, %v763
      %v765 = vsel %vm753, %v761, %v764
      %v766 = vrot.slane %v420, 2
      %v767 = vrot.slane %v416, 3
      %v768 = vor.u32 %v766, %v767
      %v769 = vsel %vm753, %v764, %v768
      %v770 = vrot.slane %v428, 2
      %v771 = vrot.slane %v424, 3
      %v772 = vor.u32 %v770, %v771
      %v773 = vsel %vm753, %v768, %v772
      %v774 = vrot.slane %v436, 2
      %v775 = vrot.slane %v432, 3
      %v776 = vor.u32 %v774, %v775
      %v777 = vsel %vm753, %v772, %v776
      %v778 = vrot.slane %v444, 2
      %v779 = vrot.slane %v440, 3
      %v780 = vor.u32 %v778, %v779
      %v781 = vsel %vm753, %v776, %v780
      %v782 = vrot.slane %v452, 2
      %v783 = vrot.slane %v448, 3
      %v784 = vor.u32 %v782, %v783
      %v785 = vsel %vm753, %v780, %v784
      %v786 = vrot.slane %v691, 2
      %v787 = vrot.slane %v694, 3
      %v788 = vor.u32 %v786, %v787
      %v789 = vsel %vm753, %v784, %v788
      %v791 = vshrl.u32 %v752, 16
      %v793 = vrot.slane %v791, 2
      %v794 = vshll.u32 %v752, 16
      %v796 = vrot.slane %v794, 3
      %v797 = vor.u32 %v793, %v796
      %v798 = vsel %vm753, %v788, %v797
      %799 = vrot.lane.b32.xlu0 %v765, 96
      %v800 = vpop.permute.xlu0 %799
      %801 = vrot.lane.b32.xlu0 %v769, 96
      %v802 = vpop.permute.xlu0 %801
      %803 = vrot.lane.b32.xlu0 %v773, 96
      %v804 = vpop.permute.xlu0 %803
      %805 = vrot.lane.b32.xlu0 %v777, 96
      %v806 = vpop.permute.xlu0 %805
      %807 = vrot.lane.b32.xlu0 %v781, 96
      %v808 = vpop.permute.xlu0 %807
      %809 = vrot.lane.b32.xlu0 %v785, 96
      %v810 = vpop.permute.xlu0 %809
      %811 = vrot.lane.b32.xlu0 %v789, 96
      %v812 = vpop.permute.xlu0 %811
      %813 = vrot.lane.b32.xlu0 %v798, 96
      %v814 = vpop.permute.xlu0 %813
      %v818 = vunpack.c.l.b16 %v204
      %v819 = vunpack.c.l.b16 %v205
      %v820 = vunpack.c.l.b16 %v206
      %v821 = vpack.c.b16 %v235, %v818
      %v822 = vpack.c.b16 %v819, %v676
      %v823 = vpack.c.b16 %v820, %v820
      %v824 = vrot.slane %v821, 2
      %v825 = vsel %vm654, %v824, %v658
      %v826 = vrot.slane %v822, 2
      %v827 = vsel %vm654, %v668, %v826
      %v828 = vrot.slane %v823, 2
      %v829 = vsel %vm654, %v826, %v828
      %v831 = vunpack.c.l.b16 %v207
      %v832 = vpack.c.b16 %v831, %v831
      %v834 = vshrl.u32 %v821, 16
      %v836 = vrot.slane %v834, 2
      %v837 = vshll.u32 %v821, 16
      %v839 = vrot.slane %v837, 3
      %v840 = vor.u32 %v836, %v839
      %v841 = vrot.slane %v286, 2
      %v842 = vrot.slane %v282, 3
      %v843 = vor.u32 %v841, %v842
      %v844 = vsel %vm753, %v840, %v843
      %v845 = vrot.slane %v294, 2
      %v846 = vrot.slane %v290, 3
      %v847 = vor.u32 %v845, %v846
      %v848 = vsel %vm753, %v843, %v847
      %v849 = vrot.slane %v302, 2
      %v850 = vrot.slane %v298, 3
      %v851 = vor.u32 %v849, %v850
      %v852 = vsel %vm753, %v847, %v851
      %v853 = vrot.slane %v310, 2
      %v854 = vrot.slane %v306, 3
      %v855 = vor.u32 %v853, %v854
      %v856 = vsel %vm753, %v851, %v855
      %v857 = vrot.slane %v318, 2
      %v858 = vrot.slane %v314, 3
      %v859 = vor.u32 %v857, %v858
      %v860 = vsel %vm753, %v855, %v859
      %v861 = vrot.slane %v618, 2
      %v862 = vrot.slane %v621, 3
      %v863 = vor.u32 %v861, %v862
      %v864 = vsel %vm753, %v859, %v863
      %v866 = vshrl.u32 %v822, 16
      %v868 = vrot.slane %v866, 2
      %v869 = vshll.u32 %v822, 16
      %v871 = vrot.slane %v869, 3
      %v872 = vor.u32 %v868, %v871
      %v873 = vsel %vm753, %v863, %v872
      %v875 = vshrl.u32 %v832, 16
      %v877 = vrot.slane %v875, 2
      %v878 = vshll.u32 %v832, 16
      %v880 = vrot.slane %v878, 3
      %v881 = vor.u32 %v877, %v880
      %v882 = vsel %vm753, %v872, %v881
      %883 = vrot.lane.b32.xlu0 %v844, 32
      %v884 = vpop.permute.xlu0 %883
      %885 = vrot.lane.b32.xlu0 %v848, 32
      %v886 = vpop.permute.xlu0 %885
      %887 = vrot.lane.b32.xlu0 %v852, 32
      %v888 = vpop.permute.xlu0 %887
      %889 = vrot.lane.b32.xlu0 %v856, 32
      %v890 = vpop.permute.xlu0 %889
      %891 = vrot.lane.b32.xlu0 %v860, 32
      %v892 = vpop.permute.xlu0 %891
      %893 = vrot.lane.b32.xlu0 %v864, 32
      %v894 = vpop.permute.xlu0 %893
      %895 = vrot.lane.b32.xlu0 %v873, 32
      %v896 = vpop.permute.xlu0 %895
      %897 = vrot.lane.b32.xlu0 %v882, 32
      %v898 = vpop.permute.xlu0 %897
      %v900 = vunpack.c.l.b16 %v208
      %v901 = vpack.c.b16 %v235, %v900
      %vm902 = vcmask 1044480
      %v903 = vrot.slane %v901, 3
      %v904 = vrot.slane %v249, 3
      %v905 = vsel %vm902, %v903, %v904
      %v906 = vrot.slane %v250, 3
      %v907 = vsel %vm902, %v904, %v906
      %v908 = vrot.slane %v251, 3
      %v909 = vsel %vm902, %v906, %v908
      %v910 = vrot.slane %v252, 3
      %v911 = vsel %vm902, %v908, %v910
      %v912 = vrot.slane %v253, 3
      %v913 = vsel %vm902, %v910, %v912
      %v914 = vrot.slane %v568, 3
      %v915 = vsel %vm902, %v912, %v914
      %v916 = vrot.slane %v822, 3
      %v917 = vsel %vm902, %v914, %v916
      %v918 = vrot.slane %v832, 3
      %v919 = vsel %vm902, %v916, %v918
      %920 = vrot.lane.b32.xlu0 %v905, 64
      %v921 = vpop.permute.xlu0 %920
      %922 = vrot.lane.b32.xlu0 %v907, 64
      %v923 = vpop.permute.xlu0 %922
      %924 = vrot.lane.b32.xlu0 %v909, 64
      %v925 = vpop.permute.xlu0 %924
      %926 = vrot.lane.b32.xlu0 %v911, 64
      %v927 = vpop.permute.xlu0 %926
      %928 = vrot.lane.b32.xlu0 %v913, 64
      %v929 = vpop.permute.xlu0 %928
      %930 = vrot.lane.b32.xlu0 %v915, 64
      %v931 = vpop.permute.xlu0 %930
      %932 = vrot.lane.b32.xlu0 %v917, 64
      %v933 = vpop.permute.xlu0 %932
      %934 = vrot.lane.b32.xlu0 %v919, 64
      %v935 = vpop.permute.xlu0 %934
      %v939 = vunpack.c.l.b16 %v209
      %v940 = vunpack.c.l.b16 %v210
      %v941 = vunpack.c.l.b16 %v211
      %v942 = vpack.c.b16 %v236, %v939
      %v943 = vpack.c.b16 %v940, %v819
      %v944 = vpack.c.b16 %v941, %v941
      %v946 = vshrl.u32 %v942, 16
      %v948 = vrot.slane %v946, 2
      %v949 = vshll.u32 %v942, 16
      %v951 = vrot.slane %v949, 3
      %v952 = vor.u32 %v948, %v951
      %v953 = vsel %vm753, %v952, %v768
      %v955 = vshrl.u32 %v943, 16
      %v957 = vrot.slane %v955, 2
      %v958 = vshll.u32 %v943, 16
      %v960 = vrot.slane %v958, 3
      %v961 = vor.u32 %v957, %v960
      %v962 = vsel %vm753, %v788, %v961
      %v964 = vshrl.u32 %v944, 16
      %v966 = vrot.slane %v964, 2
      %v967 = vshll.u32 %v944, 16
      %v969 = vrot.slane %v967, 3
      %v970 = vor.u32 %v966, %v969
      %v971 = vsel %vm753, %v961, %v970
      %972 = vrot.lane.b32.xlu0 %v953, 96
      %v973 = vpop.permute.xlu0 %972
      %974 = vrot.lane.b32.xlu0 %v962, 96
      %v975 = vpop.permute.xlu0 %974
      %976 = vrot.lane.b32.xlu0 %v971, 96
      %v977 = vpop.permute.xlu0 %976
      %vm978 = vcmask 261120
      %v980 = vsel %vm978, %v246, %v327
      %v982 = vsel %vm978, %v247, %v329
      %v984 = vsel %vm978, %v248, %v331
      %v986 = vsel %vm978, %v249, %v333
      %v988 = vsel %vm978, %v250, %v335
      %v990 = vsel %vm978, %v251, %v337
      %v992 = vsel %vm978, %v252, %v339
      %v994 = vsel %vm978, %v253, %v341
      %vm995 = vcmask 523264
      %v997 = vsel %vm995, %v980, %v364
      %v999 = vsel %vm995, %v982, %v366
      %v1001 = vsel %vm995, %v984, %v368
      %v1003 = vsel %vm995, %v986, %v370
      %v1005 = vsel %vm995, %v988, %v372
      %v1007 = vsel %vm995, %v990, %v374
      %v1009 = vsel %vm995, %v992, %v376
      %v1011 = vsel %vm995, %v994, %v378
      %vm1012 = vcmask 785408
      %v1014 = vsel %vm1012, %v997, %v461
      %v1017 = vsel %vm1012, %v999, %v463
      %v1020 = vsel %vm1012, %v1001, %v465
      %v1023 = vsel %vm1012, %v1003, %v467
      %v1026 = vsel %vm1012, %v1005, %v469
      %v1029 = vsel %vm1012, %v1007, %v471
      %v1032 = vsel %vm1012, %v1009, %v473
      %v1035 = vsel %vm1012, %v1011, %v475
      %v1039 = vsel %vm978, %v481, %v546
      %v1042 = vsel %vm978, %v483, %v548
      %v1045 = vsel %vm978, %v485, %v550
      %v1048 = vsel %vm978, %v487, %v552
      %v1051 = vsel %vm978, %v489, %v554
      %v1054 = vsel %vm978, %v491, %v556
      %v1057 = vsel %vm978, %v493, %v558
      %v1060 = vsel %vm978, %v495, %v560
      %v1062 = vsel %vm995, %v1039, %v577
      %v1063 = vsel %vm995, %v1042, %v368
      %v1064 = vsel %vm995, %v1045, %v370
      %v1065 = vsel %vm995, %v1048, %v372
      %v1066 = vsel %vm995, %v1051, %v374
      %v1067 = vsel %vm995, %v1054, %v376
      %v1069 = vsel %vm995, %v1057, %v579
      %v1071 = vsel %vm995, %v1060, %v581
      %v1073 = vsel %vm1012, %v1062, %v636
      %v1076 = vsel %vm1012, %v1063, %v638
      %v1079 = vsel %vm1012, %v1064, %v640
      %v1082 = vsel %vm1012, %v1065, %v642
      %v1085 = vsel %vm1012, %v1066, %v644
      %v1088 = vsel %vm1012, %v1067, %v646
      %v1091 = vsel %vm1012, %v1069, %v648
      %v1094 = vsel %vm1012, %v1071, %v650
      %v1098 = vsel %vm978, %v657, %v709
      %v1100 = vsel %vm978, %v659, %v550
      %v1102 = vsel %vm978, %v661, %v552
      %v1104 = vsel %vm978, %v663, %v554
      %v1106 = vsel %vm978, %v665, %v556
      %v1108 = vsel %vm978, %v667, %v558
      %v1111 = vsel %vm978, %v669, %v711
      %v1114 = vsel %vm978, %v671, %v713
      %v1116 = vsel %vm995, %v1098, %v735
      %v1118 = vsel %vm995, %v1100, %v737
      %v1120 = vsel %vm995, %v1102, %v739
      %v1122 = vsel %vm995, %v1104, %v741
      %v1124 = vsel %vm995, %v1106, %v743
      %v1126 = vsel %vm995, %v1108, %v745
      %v1128 = vsel %vm995, %v1111, %v747
      %v1130 = vsel %vm995, %v1114, %v749
      %v1132 = vsel %vm1012, %v1116, %v800
      %v1135 = vsel %vm1012, %v1118, %v802
      %v1138 = vsel %vm1012, %v1120, %v804
      %v1141 = vsel %vm1012, %v1122, %v806
      %v1144 = vsel %vm1012, %v1124, %v808
      %v1147 = vsel %vm1012, %v1126, %v810
      %v1150 = vsel %vm1012, %v1128, %v812
      %v1153 = vsel %vm1012, %v1130, %v814
      %v1157 = vsel %vm978, %v825, %v884
      %v1159 = vsel %vm978, %v661, %v886
      %v1161 = vsel %vm978, %v663, %v888
      %v1163 = vsel %vm978, %v665, %v890
      %v1165 = vsel %vm978, %v667, %v892
      %v1167 = vsel %vm978, %v669, %v894
      %v1170 = vsel %vm978, %v827, %v896
      %v1173 = vsel %vm978, %v829, %v898
      %v1175 = vsel %vm995, %v1157, %v921
      %v1177 = vsel %vm995, %v1159, %v923
      %v1179 = vsel %vm995, %v1161, %v925
      %v1181 = vsel %vm995, %v1163, %v927
      %v1183 = vsel %vm995, %v1165, %v929
      %v1185 = vsel %vm995, %v1167, %v931
      %v1187 = vsel %vm995, %v1170, %v933
      %v1189 = vsel %vm995, %v1173, %v935
      %v1191 = vsel %vm1012, %v1175, %v973
      %v1193 = vsel %vm1012, %v1177, %v804
      %v1195 = vsel %vm1012, %v1179, %v806
      %v1197 = vsel %vm1012, %v1181, %v808
      %v1199 = vsel %vm1012, %v1183, %v810
      %v1201 = vsel %vm1012, %v1185, %v812
      %v1204 = vsel %vm1012, %v1187, %v975
      %v1207 = vsel %vm1012, %v1189, %v977
      %v1210 = vunpack.c.l.b16 %v212
      %v1211 = vpack.c.b16 %v236, %v1210
      %v1213 = vunpack.c.l.b16 %v213
      %v1214 = vpack.c.b16 %v1213, %v1213
      %v1216 = vshrl.u32 %v1211, 16
      %v1218 = vshll.u32 %v1211, 16
      %v1220 = vrot.slane %v1218, 1
      %v1221 = vor.u32 %v1216, %v1220
      %v1222 = vsel %vm257, %v1221, %v418
      %v1223 = vrot.slane %v694, 1
      %v1224 = vsel %vm257, %v454, %v1223
      %v1225 = vor.u32 %v691, %v1223
      %v1226 = vrot.slane %v958, 1
      %v1227 = vsel %vm257, %v1225, %v1226
      %v1228 = vor.u32 %v955, %v1226
      %v1230 = vshll.u32 %v1214, 16
      %v1232 = vrot.slane %v1230, 1
      %v1233 = vsel %vm257, %v1228, %v1232
      %v1234 = vshrl.u32 %v1214, 16
      %v1236 = vor.u32 %v1234, %v1232
      %1237 = vrot.lane.b32.xlu0 %v1222, 32
      %v1238 = vpop.permute.xlu0 %1237
      %1239 = vrot.lane.b32.xlu0 %v427, 32
      %v1240 = vpop.permute.xlu0 %1239
      %1241 = vrot.lane.b32.xlu0 %v435, 32
      %v1242 = vpop.permute.xlu0 %1241
      %1243 = vrot.lane.b32.xlu0 %v443, 32
      %v1244 = vpop.permute.xlu0 %1243
      %1245 = vrot.lane.b32.xlu0 %v451, 32
      %v1246 = vpop.permute.xlu0 %1245
      %1247 = vrot.lane.b32.xlu0 %v1224, 32
      %v1248 = vpop.permute.xlu0 %1247
      %1249 = vrot.lane.b32.xlu0 %v1227, 32
      %v1250 = vpop.permute.xlu0 %1249
      %1251 = vrot.lane.b32.xlu0 %v1233, 32
      %v1252 = vpop.permute.xlu0 %1251
      %1253 = vrot.lane.b32.xlu0 %v1236, 32
      %v1254 = vpop.permute.xlu0 %1253
      %v1256 = vsel %vm978, %v1211, %v1238
      %v1258 = vsel %vm978, %v386, %v1240
      %v1260 = vsel %vm978, %v387, %v1242
      %v1262 = vsel %vm978, %v388, %v1244
      %v1264 = vsel %vm978, %v389, %v1246
      %v1266 = vsel %vm978, %v390, %v1248
      %v1268 = vsel %vm978, %v679, %v1250
      %v1270 = vsel %vm978, %v943, %v1252
      %v1272 = vsel %vm978, %v944, %v1254
      %v1282 = vrot.slane %v1256, 3
      %v1283 = vrot.slane %v1258, 3
      %v1284 = vsel %vm902, %v1282, %v1283
      %v1285 = vrot.slane %v1260, 3
      %v1286 = vsel %vm902, %v1283, %v1285
      %v1287 = vrot.slane %v1262, 3
      %v1288 = vsel %vm902, %v1285, %v1287
      %v1289 = vrot.slane %v1264, 3
      %v1290 = vsel %vm902, %v1287, %v1289
      %v1291 = vrot.slane %v1266, 3
      %v1292 = vsel %vm902, %v1289, %v1291
      %v1293 = vrot.slane %v1268, 3
      %v1294 = vsel %vm902, %v1291, %v1293
      %v1295 = vrot.slane %v1270, 3
      %v1296 = vsel %vm902, %v1293, %v1295
      %v1297 = vrot.slane %v1272, 3
      %v1298 = vsel %vm902, %v1295, %v1297
      %v1299 = vld [vmem:[%s1] sm:$0xf]
      %v1300 = vld [vmem:[%s1 + $0x4] sm:$0xf]
      %v1301 = vld [vmem:[%s1 + $0x8] sm:$0xf]
      %v1302 = vld [vmem:[%s1 + $0xc] sm:$0xf]
      %v1303 = vld [vmem:[%s1 + $0x10] sm:$0xf]
      %v1304 = vld [vmem:[%s1 + $0x14] sm:$0xf]
      %v1305 = vld [vmem:[%s1 + $0x18] sm:$0xf]
      %v1306 = vld [vmem:[%s1 + $0x1c] sm:$0xf]
      %v1307 = vld [vmem:[%s1 + $0x20] sm:$0xf]
      %v1308 = vld [vmem:[%s1 + $0x24] sm:$0xf]
      %v1309 = vld [vmem:[%s1 + $0x28] sm:$0xf]
      %v1310 = vld [vmem:[%s1 + $0x2c] sm:$0xf]
      %v1311 = vld [vmem:[%s1 + $0x30] sm:$0xf]
      %v1312 = vld [vmem:[%s1 + $0x34] sm:$0xf]
      %v1313 = vld [vmem:[%s1 + $0x38] sm:$0xf]
      %v1314 = vld [vmem:[%s1 + $0x3c] sm:$0xf]
      %v1315 = vld [vmem:[%s1 + $0x40] sm:$0xf]
      %v1316 = vld [vmem:[%s1 + $0x44] sm:$0xf]
      %v1317 = vld [vmem:[%s1 + $0x48] sm:$0xf]
      %v1318 = vld [vmem:[%s1 + $0x4c] sm:$0xf]
      %v1319 = vld [vmem:[%s1 + $0x50] sm:$0xf]
      %v1320 = vld [vmem:[%s1 + $0x54] sm:$0xf]
      %v1321 = vld [vmem:[%s1 + $0x58] sm:$0xf]
      %v1322 = vld [vmem:[%s1 + $0x5c] sm:$0xf]
      %v1323 = vld [vmem:[%s1 + $0x60] sm:$0xf]
      %v1324 = vld [vmem:[%s1 + $0x64] sm:$0xf]
      %v1325 = vld [vmem:[%s1 + $0x68] sm:$0xf]
      %v1326 = vld [vmem:[%s1 + $0x6c] sm:$0xf]
      %v1327 = vld [vmem:[%s1 + $0x70] sm:$0xf]
      %v1328 = vld [vmem:[%s1 + $0x74] sm:$0xf]
      %v1329 = vld [vmem:[%s1 + $0x78] sm:$0xf]
      %v1330 = vld [vmem:[%s1 + $0x7c] sm:$0xf]
      %v1331 = vld [vmem:[%s1 + $0x80] sm:$0xf]
      %v1332 = vld [vmem:[%s1 + $0x84] sm:$0xf]
      %v1333 = vld [vmem:[%s1 + $0x88] sm:$0xf]
      %v1334 = vld [vmem:[%s1 + $0x8c] sm:$0xf]
      %v1335 = vld [vmem:[%s1 + $0x90] sm:$0xf]
      %v1336 = vld [vmem:[%s1 + $0x94] sm:$0xf]
      %v1337 = vld [vmem:[%s1 + $0x98] sm:$0xf]
      %v1338 = vld [vmem:[%s1 + $0x9c] sm:$0xf]
      %v1339 = vld [vmem:[%s1 + $0xa0] sm:$0xf]
      %v1340 = vld [vmem:[%s1 + $0xa4] sm:$0xf]
      %v1341 = vld [vmem:[%s1 + $0xa8] sm:$0xf]
      %v1342 = vld [vmem:[%s1 + $0xac] sm:$0xf]
      %v1343 = vld [vmem:[%s1 + $0xb0] sm:$0xf]
      %v1344 = vld [vmem:[%s1 + $0xb4] sm:$0xf]
      %v1345 = vld [vmem:[%s1 + $0xb8] sm:$0xf]
      %v1346 = vld [vmem:[%s1 + $0xbc] sm:$0xf]
      %v1347 = vld [vmem:[%s1 + $0xc0] sm:$0xf]
      %v1348 = vld [vmem:[%s1 + $0xc4] sm:$0xf]
      %v1349 = vld [vmem:[%s1 + $0xc8] sm:$0xf]
      %v1350 = vld [vmem:[%s1 + $0xcc] sm:$0xf]
      %v1351 = vld [vmem:[%s1 + $0xd0] sm:$0xf]
      %v1352 = vld [vmem:[%s1 + $0xd4] sm:$0xf]
      %v1353 = vld [vmem:[%s1 + $0xd8] sm:$0xf]
      %v1354 = vld [vmem:[%s1 + $0xdc] sm:$0xf]
      %v1355 = vld [vmem:[%s1 + $0xe0] sm:$0xf]
      %v1356 = vld [vmem:[%s1 + $0xe4] sm:$0xf]
      %v1357 = vld [vmem:[%s1 + $0xe8] sm:$0xf]
      %v1358 = vld [vmem:[%s1 + $0xec] sm:$0xf]
      %v1359 = vld [vmem:[%s1 + $0xf0] sm:$0xf]
      %v1360 = vld [vmem:[%s1 + $0xf4] sm:$0xf]
      %v1361 = vld [vmem:[%s1 + $0xf8] sm:$0xf]
      %v1362 = vld [vmem:[%s1 + $0xfc] sm:$0xf]
      %v1363 = vld [vmem:[%s1 + $0x100] sm:$0xf]
      %v1364 = vld [vmem:[%s1 + $0x104] sm:$0xf]
      %v1365 = vld [vmem:[%s1 + $0x108] sm:$0xf]
      %v1366 = vld [vmem:[%s1 + $0x10c] sm:$0xf]
      %v1367 = vld [vmem:[%s1 + $0x110] sm:$0xf]
      %v1368 = vld [vmem:[%s1 + $0x114] sm:$0xf]
      %v1369 = vld [vmem:[%s1 + $0x118] sm:$0xf]
      %v1370 = vld [vmem:[%s1 + $0x11c] sm:$0xf]
      %v1443 = vunpack.c.l.b16 %v1299
      %v1444 = vunpack.c.l.b16 %v1300
      %v1445 = vunpack.c.l.b16 %v1301
      %v1446 = vunpack.c.l.b16 %v1302
      %v1447 = vunpack.c.l.b16 %v1303
      %v1448 = vunpack.c.l.b16 %v1304
      %v1449 = vunpack.c.l.b16 %v1305
      %v1450 = vunpack.c.l.b16 %v1306
      %v1451 = vunpack.c.l.b16 %v1307
      %v1452 = vunpack.c.l.b16 %v1308
      %v1453 = vunpack.c.l.b16 %v1309
      %v1454 = vunpack.c.l.b16 %v1310
      %v1455 = vunpack.c.l.b16 %v1311
      %v1456 = vunpack.c.l.b16 %v1312
      %v1457 = vunpack.c.l.b16 %v1313
      %v1458 = vunpack.c.l.b16 %v1314
      %v1459 = vunpack.c.l.b16 %v1315
      %v1460 = vunpack.c.l.b16 %v1316
      %v1461 = vunpack.c.l.b16 %v1317
      %v1462 = vunpack.c.l.b16 %v1318
      %v1463 = vunpack.c.l.b16 %v1319
      %v1464 = vunpack.c.l.b16 %v1320
      %v1465 = vunpack.c.l.b16 %v1321
      %v1466 = vunpack.c.l.b16 %v1322
      %v1467 = vunpack.c.l.b16 %v1323
      %v1468 = vunpack.c.l.b16 %v1324
      %v1469 = vunpack.c.l.b16 %v1325
      %v1470 = vunpack.c.l.b16 %v1326
      %v1471 = vunpack.c.l.b16 %v1327
      %v1472 = vunpack.c.l.b16 %v1328
      %v1473 = vunpack.c.l.b16 %v1329
      %v1474 = vunpack.c.l.b16 %v1330
      %v1475 = vunpack.c.l.b16 %v1331
      %v1476 = vunpack.c.l.b16 %v1332
      %v1477 = vunpack.c.l.b16 %v1333
      %v1478 = vunpack.c.l.b16 %v1334
      %v1479 = vunpack.c.l.b16 %v1335
      %v1480 = vunpack.c.l.b16 %v1336
      %v1481 = vunpack.c.l.b16 %v1337
      %v1482 = vunpack.c.l.b16 %v1338
      %v1483 = vunpack.c.l.b16 %v1339
      %v1484 = vunpack.c.l.b16 %v1340
      %v1485 = vunpack.c.l.b16 %v1341
      %v1486 = vunpack.c.l.b16 %v1342
      %v1487 = vunpack.c.l.b16 %v1343
      %v1488 = vunpack.c.l.b16 %v1344
      %v1489 = vunpack.c.l.b16 %v1345
      %v1490 = vunpack.c.l.b16 %v1346
      %v1491 = vunpack.c.l.b16 %v1347
      %v1492 = vunpack.c.l.b16 %v1348
      %v1493 = vunpack.c.l.b16 %v1349
      %v1494 = vunpack.c.l.b16 %v1350
      %v1495 = vunpack.c.l.b16 %v1351
      %v1496 = vunpack.c.l.b16 %v1352
      %v1497 = vunpack.c.l.b16 %v1353
      %v1498 = vunpack.c.l.b16 %v1354
      %v1499 = vunpack.c.l.b16 %v1355
      %v1500 = vunpack.c.l.b16 %v1356
      %v1501 = vunpack.c.l.b16 %v1357
      %v1502 = vunpack.c.l.b16 %v1358
      %v1503 = vunpack.c.l.b16 %v1359
      %v1504 = vunpack.c.l.b16 %v1360
      %v1505 = vunpack.c.l.b16 %v1361
      %v1506 = vunpack.c.l.b16 %v1362
      %v1507 = vunpack.c.l.b16 %v1363
      %v1508 = vunpack.c.l.b16 %v1364
      %v1509 = vunpack.c.l.b16 %v1365
      %v1510 = vunpack.c.l.b16 %v1366
      %v1511 = vunpack.c.l.b16 %v1367
      %v1512 = vunpack.c.l.b16 %v1368
      %v1513 = vunpack.c.l.b16 %v1369
      %v1514 = vunpack.c.l.b16 %v1370
      %v1515 = vpack.c.b16 %v1444, %v1443
      %v1516 = vpack.c.b16 %v1446, %v1445
      %v1517 = vpack.c.b16 %v1448, %v1447
      %v1518 = vpack.c.b16 %v1450, %v1449
      %v1519 = vpack.c.b16 %v1452, %v1451
      %v1520 = vpack.c.b16 %v1454, %v1453
      %v1521 = vpack.c.b16 %v1456, %v1455
      %v1522 = vpack.c.b16 %v1458, %v1457
      %v1523 = vpack.c.b16 %v1460, %v1459
      %v1524 = vpack.c.b16 %v1462, %v1461
      %v1525 = vpack.c.b16 %v1464, %v1463
      %v1526 = vpack.c.b16 %v1466, %v1465
      %v1527 = vpack.c.b16 %v1468, %v1467
      %v1528 = vpack.c.b16 %v1470, %v1469
      %v1529 = vpack.c.b16 %v1472, %v1471
      %v1530 = vpack.c.b16 %v1474, %v1473
      %v1531 = vpack.c.b16 %v1476, %v1475
      %v1532 = vpack.c.b16 %v1478, %v1477
      %v1533 = vpack.c.b16 %v1480, %v1479
      %v1534 = vpack.c.b16 %v1482, %v1481
      %v1535 = vpack.c.b16 %v1484, %v1483
      %v1536 = vpack.c.b16 %v1486, %v1485
      %v1537 = vpack.c.b16 %v1488, %v1487
      %v1538 = vpack.c.b16 %v1490, %v1489
      %v1539 = vpack.c.b16 %v1492, %v1491
      %v1540 = vpack.c.b16 %v1494, %v1493
      %v1541 = vpack.c.b16 %v1496, %v1495
      %v1542 = vpack.c.b16 %v1498, %v1497
      %v1543 = vpack.c.b16 %v1500, %v1499
      %v1544 = vpack.c.b16 %v1502, %v1501
      %v1545 = vpack.c.b16 %v1504, %v1503
      %v1546 = vpack.c.b16 %v1506, %v1505
      %v1547 = vpack.c.b16 %v1508, %v1507
      %v1548 = vpack.c.b16 %v1510, %v1509
      %v1549 = vpack.c.b16 %v1512, %v1511
      %v1550 = vpack.c.b16 %v1514, %v1513
      %v1588 = vsel %vm995, %v1284, 0
      %v1591 = vsel %vm995, %v1286, 0
      %v1594 = vsel %vm995, %v1288, 0
      %v1597 = vsel %vm995, %v1290, 0
      %v1600 = vsel %vm995, %v1292, 0
      %v1603 = vsel %vm995, %v1294, 0
      %v1606 = vsel %vm995, %v1296, 0
      %v1609 = vsel %vm995, %v1298, 0
      %1611 = vmatprep.subr.bf16.mxu0 0
      %1612 = vmatpush1.bf16.msra.mxu0 %v1515
      %1613 = vmatprep.subr.bf16.mxu0 0
      %1614 = vmatpush1.bf16.msra.mxu0 %v1516
      %1615 = vmatprep.subr.bf16.mxu0 0
      %1616 = vmatpush1.bf16.msra.mxu0 %v1517
      %1617 = vmatprep.subr.bf16.mxu0 0
      %1618 = vmatpush1.bf16.msra.mxu0 %v1518
      %1619 = vmatprep.subr.bf16.mxu0 0
      %1620 = vmatpush1.bf16.msra.mxu0 %v1519
      %1621 = vmatprep.subr.bf16.mxu0 0
      %1622 = vmatpush1.bf16.msra.mxu0 %v1520
      %1623 = vmatprep.subr.bf16.mxu0 0
      %1624 = vmatpush1.bf16.msra.mxu0 %v1521
      %1625 = vmatprep.subr.bf16.mxu0 0
      %1626 = vmatpush1.bf16.msra.mxu0 %v1522
      %1627 = vmatprep.subr.bf16.mxu0 0
      %1628 = vmatpush1.bf16.msra.mxu0 %v1523
      %1629 = vmatprep.subr.bf16.mxu0 0
      %1630 = vmatpush1.bf16.msra.mxu0 %v1524
      %1631 = vmatprep.subr.bf16.mxu0 0
      %1632 = vmatpush1.bf16.msra.mxu0 %v1525
      %1633 = vmatprep.subr.bf16.mxu0 0
      %1634 = vmatpush1.bf16.msra.mxu0 %v1526
      %1635 = vmatprep.subr.bf16.mxu0 0
      %1636 = vmatpush1.bf16.msra.mxu0 %v1527
      %1637 = vmatprep.subr.bf16.mxu0 0
      %1638 = vmatpush1.bf16.msra.mxu0 %v1528
      %1639 = vmatprep.subr.bf16.mxu0 0
      %1640 = vmatpush1.bf16.msra.mxu0 %v1529
      %1641 = vmatprep.subr.bf16.mxu0 0
      %1642 = vmatpush1.bf16.msra.mxu0 %v1530
      %1643 = vmatprep.mubr.bf16.mxu0 %v1073
      %1644 = vmatmul.mubr.bf16.gmra.mrb[0].mxu0 %v1014
      %v1645 = vpop.f32.mrb[0].mxu0
      %v1646 = vadd.f32 0.0, %v1645
      %v1647 = vpop.f32.mrb[0].mxu0
      %v1648 = vpop.f32.mrb[0].mxu0
      %v1649 = vadd.f32 0.0, %v1648
      %v1650 = vpop.f32.mrb[0].mxu0
      %1651 = vmatprep.mubr.bf16.mxu0 %v1076
      %1652 = vmatmul.mubr.bf16.gmra.mrb[0].mxu0 %v1017
      %v1653 = vpop.f32.mrb[0].mxu0
      %v1654 = vadd.f32 0.0, %v1653
      %v1655 = vpop.f32.mrb[0].mxu0
      %v1656 = vpop.f32.mrb[0].mxu0
      %v1657 = vadd.f32 0.0, %v1656
      %v1658 = vpop.f32.mrb[0].mxu0
      %1659 = vmatprep.mubr.bf16.mxu0 %v1079
      %1660 = vmatmul.mubr.bf16.gmra.mrb[0].mxu0 %v1020
      %v1661 = vpop.f32.mrb[0].mxu0
      %v1662 = vadd.f32 0.0, %v1661
      %v1663 = vpop.f32.mrb[0].mxu0
      %v1664 = vpop.f32.mrb[0].mxu0
      %v1665 = vadd.f32 0.0, %v1664
      %v1666 = vpop.f32.mrb[0].mxu0
      %1667 = vmatprep.mubr.bf16.mxu0 %v1082
      %1668 = vmatmul.mubr.bf16.gmra.mrb[0].mxu0 %v1023
      %v1669 = vpop.f32.mrb[0].mxu0
      %v1670 = vadd.f32 0.0, %v1669
      %v1671 = vpop.f32.mrb[0].mxu0
      %v1672 = vpop.f32.mrb[0].mxu0
      %v1673 = vadd.f32 0.0, %v1672
      %v1674 = vpop.f32.mrb[0].mxu0
      %1675 = vmatprep.mubr.bf16.mxu0 %v1085
      %1676 = vmatmul.mubr.bf16.gmra.mrb[0].mxu0 %v1026
      %v1677 = vpop.f32.mrb[0].mxu0
      %v1678 = vadd.f32 0.0, %v1677
      %v1679 = vpop.f32.mrb[0].mxu0
      %v1680 = vpop.f32.mrb[0].mxu0
      %v1681 = vadd.f32 0.0, %v1680
      %v1682 = vpop.f32.mrb[0].mxu0
      %1683 = vmatprep.mubr.bf16.mxu0 %v1088
      %1684 = vmatmul.mubr.bf16.gmra.mrb[0].mxu0 %v1029
      %v1685 = vpop.f32.mrb[0].mxu0
      %v1686 = vadd.f32 0.0, %v1685
      %v1687 = vpop.f32.mrb[0].mxu0
      %v1688 = vpop.f32.mrb[0].mxu0
      %v1689 = vadd.f32 0.0, %v1688
      %v1690 = vpop.f32.mrb[0].mxu0
      %1691 = vmatprep.mubr.bf16.mxu0 %v1091
      %1692 = vmatmul.mubr.bf16.gmra.mrb[0].mxu0 %v1032
      %v1693 = vpop.f32.mrb[0].mxu0
      %v1694 = vadd.f32 0.0, %v1693
      %v1695 = vpop.f32.mrb[0].mxu0
      %v1696 = vpop.f32.mrb[0].mxu0
      %v1697 = vadd.f32 0.0, %v1696
      %v1698 = vpop.f32.mrb[0].mxu0
      %1699 = vmatprep.mubr.bf16.mxu0 %v1094
      %1700 = vmatmul.mubr.bf16.gmra.mrb[0].mxu0 %v1035
      %v1701 = vpop.f32.mrb[0].mxu0
      %v1702 = vadd.f32 0.0, %v1701
      %v1703 = vpop.f32.mrb[0].mxu0
      %v1704 = vpop.f32.mrb[0].mxu0
      %v1705 = vadd.f32 0.0, %v1704
      %v1706 = vpop.f32.mrb[0].mxu0
      %1707 = vdwg.mxu0
      %1708 = vmatprep.subr.bf16.mxu0 0
      %1709 = vmatpush1.bf16.msra.mxu0 %v1531
      %1710 = vmatprep.subr.bf16.mxu0 0
      %1711 = vmatpush1.bf16.msra.mxu0 %v1532
      %1712 = vmatprep.subr.bf16.mxu0 0
      %1713 = vmatpush1.bf16.msra.mxu0 %v1533
      %1714 = vmatprep.subr.bf16.mxu0 0
      %1715 = vmatpush1.bf16.msra.mxu0 %v1534
      %1716 = vmatprep.subr.bf16.mxu0 0
      %1717 = vmatpush1.bf16.msra.mxu0 %v1535
      %1718 = vmatprep.subr.bf16.mxu0 0
      %1719 = vmatpush1.bf16.msra.mxu0 %v1536
      %1720 = vmatprep.subr.bf16.mxu0 0
      %1721 = vmatpush1.bf16.msra.mxu0 %v1537
      %1722 = vmatprep.subr.bf16.mxu0 0
      %1723 = vmatpush1.bf16.msra.mxu0 %v1538
      %1724 = vmatprep.subr.bf16.mxu0 0
      %1725 = vmatpush1.bf16.msra.mxu0 %v1539
      %1726 = vmatprep.subr.bf16.mxu0 0
      %1727 = vmatpush1.bf16.msra.mxu0 %v1540
      %1728 = vmatprep.subr.bf16.mxu0 0
      %1729 = vmatpush1.bf16.msra.mxu0 %v1541
      %1730 = vmatprep.subr.bf16.mxu0 0
      %1731 = vmatpush1.bf16.msra.mxu0 %v1542
      %1732 = vmatprep.subr.bf16.mxu0 0
      %1733 = vmatpush1.bf16.msra.mxu0 %v1543
      %1734 = vmatprep.subr.bf16.mxu0 0
      %1735 = vmatpush1.bf16.msra.mxu0 %v1544
      %1736 = vmatprep.subr.bf16.mxu0 0
      %1737 = vmatpush1.bf16.msra.mxu0 %v1545
      %1738 = vmatprep.subr.bf16.mxu0 0
      %1739 = vmatpush1.bf16.msra.mxu0 %v1546
      %1740 = vmatprep.mubr.bf16.mxu0 %v1191
      %1741 = vmatmul.mubr.bf16.gmra.mrb[0].mxu0 %v1132
      %v1742 = vpop.f32.mrb[0].mxu0
      %v1743 = vadd.f32 %v1646, %v1742
      %v1744 = vpop.f32.mrb[0].mxu0
      %v1745 = vpop.f32.mrb[0].mxu0
      %v1746 = vadd.f32 %v1649, %v1745
      %v1747 = vpop.f32.mrb[0].mxu0
      %1748 = vmatprep.mubr.bf16.mxu0 %v1193
      %1749 = vmatmul.mubr.bf16.gmra.mrb[0].mxu0 %v1135
      %v1750 = vpop.f32.mrb[0].mxu0
      %v1751 = vadd.f32 %v1654, %v1750
      %v1752 = vpop.f32.mrb[0].mxu0
      %v1753 = vpop.f32.mrb[0].mxu0
      %v1754 = vadd.f32 %v1657, %v1753
      %v1755 = vpop.f32.mrb[0].mxu0
      %1756 = vmatprep.mubr.bf16.mxu0 %v1195
      %1757 = vmatmul.mubr.bf16.gmra.mrb[0].mxu0 %v1138
      %v1758 = vpop.f32.mrb[0].mxu0
      %v1759 = vadd.f32 %v1662, %v1758
      %v1760 = vpop.f32.mrb[0].mxu0
      %v1761 = vpop.f32.mrb[0].mxu0
      %v1762 = vadd.f32 %v1665, %v1761
      %v1763 = vpop.f32.mrb[0].mxu0
      %1764 = vmatprep.mubr.bf16.mxu0 %v1197
      %1765 = vmatmul.mubr.bf16.gmra.mrb[0].mxu0 %v1141
      %v1766 = vpop.f32.mrb[0].mxu0
      %v1767 = vadd.f32 %v1670, %v1766
      %v1768 = vpop.f32.mrb[0].mxu0
      %v1769 = vpop.f32.mrb[0].mxu0
      %v1770 = vadd.f32 %v1673, %v1769
      %v1771 = vpop.f32.mrb[0].mxu0
      %1772 = vmatprep.mubr.bf16.mxu0 %v1199
      %1773 = vmatmul.mubr.bf16.gmra.mrb[0].mxu0 %v1144
      %v1774 = vpop.f32.mrb[0].mxu0
      %v1775 = vadd.f32 %v1678, %v1774
      %v1776 = vpop.f32.mrb[0].mxu0
      %v1777 = vpop.f32.mrb[0].mxu0
      %v1778 = vadd.f32 %v1681, %v1777
      %v1779 = vpop.f32.mrb[0].mxu0
      %1780 = vmatprep.mubr.bf16.mxu0 %v1201
      %1781 = vmatmul.mubr.bf16.gmra.mrb[0].mxu0 %v1147
      %v1782 = vpop.f32.mrb[0].mxu0
      %v1783 = vadd.f32 %v1686, %v1782
      %v1784 = vpop.f32.mrb[0].mxu0
      %v1785 = vpop.f32.mrb[0].mxu0
      %v1786 = vadd.f32 %v1689, %v1785
      %v1787 = vpop.f32.mrb[0].mxu0
      %1788 = vmatprep.mubr.bf16.mxu0 %v1204
      %1789 = vmatmul.mubr.bf16.gmra.mrb[0].mxu0 %v1150
      %v1790 = vpop.f32.mrb[0].mxu0
      %v1791 = vadd.f32 %v1694, %v1790
      %v1792 = vpop.f32.mrb[0].mxu0
      %v1793 = vpop.f32.mrb[0].mxu0
      %v1794 = vadd.f32 %v1697, %v1793
      %v1795 = vpop.f32.mrb[0].mxu0
      %1796 = vmatprep.mubr.bf16.mxu0 %v1207
      %1797 = vmatmul.mubr.bf16.gmra.mrb[0].mxu0 %v1153
      %v1798 = vpop.f32.mrb[0].mxu0
      %v1799 = vadd.f32 %v1702, %v1798
      %v1800 = vpop.f32.mrb[0].mxu0
      %v1801 = vpop.f32.mrb[0].mxu0
      %v1802 = vadd.f32 %v1705, %v1801
      %v1803 = vpop.f32.mrb[0].mxu0
      %1804 = vdwg.mxu0
      %1805 = vmatprep.subr.bf16.mxu0 0
      %1806 = vmatpush1.bf16.msra.mxu0 %v1547
      %1807 = vmatprep.subr.bf16.mxu0 0
      %1808 = vmatpush1.bf16.msra.mxu0 %v1548
      %1809 = vmatprep.subr.bf16.mxu0 0
      %1810 = vmatpush1.bf16.msra.mxu0 %v1549
      %1811 = vmatprep.subr.bf16.mxu0 0
      %1812 = vmatpush1.bf16.msra.mxu0 %v1550
      %1813 = vmatprep.subr.bf16.mxu0 0
      %1814 = vmatpush1.bf16.msra.mxu0 0
      %1815 = vmatprep.subr.bf16.mxu0 0
      %1816 = vmatpush1.bf16.msra.mxu0 0
      %1817 = vmatprep.subr.bf16.mxu0 0
      %1818 = vmatpush1.bf16.msra.mxu0 0
      %1819 = vmatprep.subr.bf16.mxu0 0
      %1820 = vmatpush1.bf16.msra.mxu0 0
      %1821 = vmatprep.subr.bf16.mxu0 0
      %1822 = vmatpush1.bf16.msra.mxu0 0
      %1823 = vmatprep.subr.bf16.mxu0 0
      %1824 = vmatpush1.bf16.msra.mxu0 0
      %1825 = vmatprep.subr.bf16.mxu0 0
      %1826 = vmatpush1.bf16.msra.mxu0 0
      %1827 = vmatprep.subr.bf16.mxu0 0
      %1828 = vmatpush1.bf16.msra.mxu0 0
      %1829 = vmatprep.subr.bf16.mxu0 0
      %1830 = vmatpush1.bf16.msra.mxu0 0
      %1831 = vmatprep.subr.bf16.mxu0 0
      %1832 = vmatpush1.bf16.msra.mxu0 0
      %1833 = vmatprep.subr.bf16.mxu0 0
      %1834 = vmatpush1.bf16.msra.mxu0 0
      %1835 = vmatprep.subr.bf16.mxu0 0
      %1836 = vmatpush1.bf16.msra.mxu0 0
      %1837 = vmatprep.mubr.bf16.mxu0 0
      %1838 = vmatmul.mubr.bf16.gmra.mrb[0].mxu0 %v1588
      %v1839 = vpop.f32.mrb[0].mxu0
      %v1840 = vadd.f32 %v1743, %v1839
      %v1841 = vpop.f32.mrb[0].mxu0
      %v1842 = vpop.f32.mrb[0].mxu0
      %v1843 = vadd.f32 %v1746, %v1842
      %v1844 = vpop.f32.mrb[0].mxu0
      %1845 = vmatprep.mubr.bf16.mxu0 0
      %1846 = vmatmul.mubr.bf16.gmra.mrb[0].mxu0 %v1591
      %v1847 = vpop.f32.mrb[0].mxu0
      %v1848 = vadd.f32 %v1751, %v1847
      %v1849 = vpop.f32.mrb[0].mxu0
      %v1850 = vpop.f32.mrb[0].mxu0
      %v1851 = vadd.f32 %v1754, %v1850
      %v1852 = vpop.f32.mrb[0].mxu0
      %1853 = vmatprep.mubr.bf16.mxu0 0
      %1854 = vmatmul.mubr.bf16.gmra.mrb[0].mxu0 %v1594
      %v1855 = vpop.f32.mrb[0].mxu0
      %v1856 = vadd.f32 %v1759, %v1855
      %v1857 = vpop.f32.mrb[0].mxu0
      %v1858 = vpop.f32.mrb[0].mxu0
      %v1859 = vadd.f32 %v1762, %v1858
      %v1860 = vpop.f32.mrb[0].mxu0
      %1861 = vmatprep.mubr.bf16.mxu0 0
      %1862 = vmatmul.mubr.bf16.gmra.mrb[0].mxu0 %v1597
      %v1863 = vpop.f32.mrb[0].mxu0
      %v1864 = vadd.f32 %v1767, %v1863
      %v1865 = vpop.f32.mrb[0].mxu0
      %v1866 = vpop.f32.mrb[0].mxu0
      %v1867 = vadd.f32 %v1770, %v1866
      %v1868 = vpop.f32.mrb[0].mxu0
      %1869 = vmatprep.mubr.bf16.mxu0 0
      %1870 = vmatmul.mubr.bf16.gmra.mrb[0].mxu0 %v1600
      %v1871 = vpop.f32.mrb[0].mxu0
      %v1872 = vadd.f32 %v1775, %v1871
      %v1873 = vpop.f32.mrb[0].mxu0
      %v1874 = vpop.f32.mrb[0].mxu0
      %v1875 = vadd.f32 %v1778, %v1874
      %v1876 = vpop.f32.mrb[0].mxu0
      %1877 = vmatprep.mubr.bf16.mxu0 0
      %1878 = vmatmul.mubr.bf16.gmra.mrb[0].mxu0 %v1603
      %v1879 = vpop.f32.mrb[0].mxu0
      %v1880 = vadd.f32 %v1783, %v1879
      %v1881 = vpop.f32.mrb[0].mxu0
      %v1882 = vpop.f32.mrb[0].mxu0
      %v1883 = vadd.f32 %v1786, %v1882
      %v1884 = vpop.f32.mrb[0].mxu0
      %1885 = vmatprep.mubr.bf16.mxu0 0
      %1886 = vmatmul.mubr.bf16.gmra.mrb[0].mxu0 %v1606
      %v1887 = vpop.f32.mrb[0].mxu0
      %v1888 = vadd.f32 %v1791, %v1887
      %v1889 = vpop.f32.mrb[0].mxu0
      %v1890 = vpop.f32.mrb[0].mxu0
      %v1891 = vadd.f32 %v1794, %v1890
      %v1892 = vpop.f32.mrb[0].mxu0
      %1893 = vmatprep.mubr.bf16.mxu0 0
      %1894 = vmatmul.mubr.bf16.gmra.mrb[0].mxu0 %v1609
      %v1895 = vpop.f32.mrb[0].mxu0
      %v1896 = vadd.f32 %v1799, %v1895
      %v1897 = vpop.f32.mrb[0].mxu0
      %v1898 = vpop.f32.mrb[0].mxu0
      %v1899 = vadd.f32 %v1802, %v1898
      %v1900 = vpop.f32.mrb[0].mxu0
      %1901 = vdwg.mxu0
      %1918 = vrot.lane.b32.xlu0 %v1840, 96
      %v1919 = vpop.permute.xlu0 %1918
      %1920 = vrot.lane.b32.xlu0 %v1843, 96
      %v1921 = vpop.permute.xlu0 %1920
      %1922 = vrot.lane.b32.xlu0 %v1848, 96
      %v1923 = vpop.permute.xlu0 %1922
      %1924 = vrot.lane.b32.xlu0 %v1851, 96
      %v1925 = vpop.permute.xlu0 %1924
      %1926 = vrot.lane.b32.xlu0 %v1856, 96
      %v1927 = vpop.permute.xlu0 %1926
      %1928 = vrot.lane.b32.xlu0 %v1859, 96
      %v1929 = vpop.permute.xlu0 %1928
      %1930 = vrot.lane.b32.xlu0 %v1864, 96
      %v1931 = vpop.permute.xlu0 %1930
      %1932 = vrot.lane.b32.xlu0 %v1867, 96
      %v1933 = vpop.permute.xlu0 %1932
      %1934 = vrot.lane.b32.xlu0 %v1872, 96
      %v1935 = vpop.permute.xlu0 %1934
      %1936 = vrot.lane.b32.xlu0 %v1875, 96
      %v1937 = vpop.permute.xlu0 %1936
      %1938 = vrot.lane.b32.xlu0 %v1880, 96
      %v1939 = vpop.permute.xlu0 %1938
      %1940 = vrot.lane.b32.xlu0 %v1883, 96
      %v1941 = vpop.permute.xlu0 %1940
      %1942 = vrot.lane.b32.xlu0 %v1888, 96
      %v1943 = vpop.permute.xlu0 %1942
      %1944 = vrot.lane.b32.xlu0 %v1891, 96
      %v1945 = vpop.permute.xlu0 %1944
      %1946 = vrot.lane.b32.xlu0 %v1896, 96
      %v1947 = vpop.permute.xlu0 %1946
      %1948 = vrot.lane.b32.xlu0 %v1899, 96
      %v1949 = vpop.permute.xlu0 %1948
      %v1966 = vmax.f32 %v1840, %v1919
      %v1967 = vmax.f32 %v1843, %v1921
      %v1968 = vmax.f32 %v1848, %v1923
      %v1969 = vmax.f32 %v1851, %v1925
      %v1970 = vmax.f32 %v1856, %v1927
      %v1971 = vmax.f32 %v1859, %v1929
      %v1972 = vmax.f32 %v1864, %v1931
      %v1973 = vmax.f32 %v1867, %v1933
      %v1974 = vmax.f32 %v1872, %v1935
      %v1975 = vmax.f32 %v1875, %v1937
      %v1976 = vmax.f32 %v1880, %v1939
      %v1977 = vmax.f32 %v1883, %v1941
      %v1978 = vmax.f32 %v1888, %v1943
      %v1979 = vmax.f32 %v1891, %v1945
      %v1980 = vmax.f32 %v1896, %v1947
      %v1981 = vmax.f32 %v1899, %v1949
      %1998 = vrot.lane.b32.xlu0 %v1966, 64
      %v1999 = vpop.permute.xlu0 %1998
      %2000 = vrot.lane.b32.xlu0 %v1967, 64
      %v2001 = vpop.permute.xlu0 %2000
      %2002 = vrot.lane.b32.xlu0 %v1968, 64
      %v2003 = vpop.permute.xlu0 %2002
      %2004 = vrot.lane.b32.xlu0 %v1969, 64
      %v2005 = vpop.permute.xlu0 %2004
      %2006 = vrot.lane.b32.xlu0 %v1970, 64
      %v2007 = vpop.permute.xlu0 %2006
      %2008 = vrot.lane.b32.xlu0 %v1971, 64
      %v2009 = vpop.permute.xlu0 %2008
      %2010 = vrot.lane.b32.xlu0 %v1972, 64
      %v2011 = vpop.permute.xlu0 %2010
      %2012 = vrot.lane.b32.xlu0 %v1973, 64
      %v2013 = vpop.permute.xlu0 %2012
      %2014 = vrot.lane.b32.xlu0 %v1974, 64
      %v2015 = vpop.permute.xlu0 %2014
      %2016 = vrot.lane.b32.xlu0 %v1975, 64
      %v2017 = vpop.permute.xlu0 %2016
      %2018 = vrot.lane.b32.xlu0 %v1976, 64
      %v2019 = vpop.permute.xlu0 %2018
      %2020 = vrot.lane.b32.xlu0 %v1977, 64
      %v2021 = vpop.permute.xlu0 %2020
      %2022 = vrot.lane.b32.xlu0 %v1978, 64
      %v2023 = vpop.permute.xlu0 %2022
      %2024 = vrot.lane.b32.xlu0 %v1979, 64
      %v2025 = vpop.permute.xlu0 %2024
      %2026 = vrot.lane.b32.xlu0 %v1980, 64
      %v2027 = vpop.permute.xlu0 %2026
      %2028 = vrot.lane.b32.xlu0 %v1981, 64
      %v2029 = vpop.permute.xlu0 %2028
      %v2046 = vmax.f32 %v1966, %v1999
      %v2047 = vmax.f32 %v1967, %v2001
      %v2048 = vmax.f32 %v1968, %v2003
      %v2049 = vmax.f32 %v1969, %v2005
      %v2050 = vmax.f32 %v1970, %v2007
      %v2051 = vmax.f32 %v1971, %v2009
      %v2052 = vmax.f32 %v1972, %v2011
      %v2053 = vmax.f32 %v1973, %v2013
      %v2054 = vmax.f32 %v1974, %v2015
      %v2055 = vmax.f32 %v1975, %v2017
      %v2056 = vmax.f32 %v1976, %v2019
      %v2057 = vmax.f32 %v1977, %v2021
      %v2058 = vmax.f32 %v1978, %v2023
      %v2059 = vmax.f32 %v1979, %v2025
      %v2060 = vmax.f32 %v1980, %v2027
      %v2061 = vmax.f32 %v1981, %v2029
      %v2062 = vld [vmem:[%s2] sm:$0x1]
      %v2064 = vlaneseq
      %v2065 = vshrl.u32 %v2064, 7
      %v2066 = vsub.s32 0, %v2065
      %v2067 = vrot.slane %v2062, %v2066
      %v2069 = vadd.f32 %v2046, %v2067
      %v2070 = vadd.f32 %v2047, %v2067
      %v2071 = vadd.f32 %v2048, %v2067
      %v2072 = vadd.f32 %v2049, %v2067
      %v2073 = vadd.f32 %v2050, %v2067
      %v2074 = vadd.f32 %v2051, %v2067
      %v2075 = vadd.f32 %v2052, %v2067
      %v2076 = vadd.f32 %v2053, %v2067
      %v2077 = vadd.f32 %v2054, %v2067
      %v2078 = vadd.f32 %v2055, %v2067
      %v2079 = vadd.f32 %v2056, %v2067
      %v2080 = vadd.f32 %v2057, %v2067
      %v2081 = vadd.f32 %v2058, %v2067
      %v2082 = vadd.f32 %v2059, %v2067
      %v2083 = vadd.f32 %v2060, %v2067
      %v2084 = vadd.f32 %v2061, %v2067
      %v2085 = vmax.f32 %v2069, 0.0
      %v2086 = vmax.f32 %v2070, 0.0
      %v2087 = vmax.f32 %v2071, 0.0
      %v2088 = vmax.f32 %v2072, 0.0
      %v2089 = vmax.f32 %v2073, 0.0
      %v2090 = vmax.f32 %v2074, 0.0
      %v2091 = vmax.f32 %v2075, 0.0
      %v2092 = vmax.f32 %v2076, 0.0
      %v2093 = vmax.f32 %v2077, 0.0
      %v2094 = vmax.f32 %v2078, 0.0
      %v2095 = vmax.f32 %v2079, 0.0
      %v2096 = vmax.f32 %v2080, 0.0
      %v2097 = vmax.f32 %v2081, 0.0
      %v2098 = vmax.f32 %v2082, 0.0
      %v2099 = vmax.f32 %v2083, 0.0
      %v2100 = vmax.f32 %v2084, 0.0
      %2101 = vst.msk [vmem:[%s170] sm:$0xff] %vm978, %v2085
      %2102 = vst.msk [vmem:[%s170 + $0x8] sm:$0xff] %vm978, %v2086
      %2103 = vst.msk [vmem:[%s170 + $0x10] sm:$0xff] %vm978, %v2087
      %2104 = vst.msk [vmem:[%s170 + $0x18] sm:$0xff] %vm978, %v2088
      %2105 = vst.msk [vmem:[%s170 + $0x20] sm:$0xff] %vm978, %v2089
      %2106 = vst.msk [vmem:[%s170 + $0x28] sm:$0xff] %vm978, %v2090
      %2107 = vst.msk [vmem:[%s170 + $0x30] sm:$0xff] %vm978, %v2091
      %2108 = vst.msk [vmem:[%s170 + $0x38] sm:$0xff] %vm978, %v2092
      %2109 = vst.msk [vmem:[%s170 + $0x40] sm:$0xff] %vm978, %v2093
      %2110 = vst.msk [vmem:[%s170 + $0x48] sm:$0xff] %vm978, %v2094
      %2111 = vst.msk [vmem:[%s170 + $0x50] sm:$0xff] %vm978, %v2095
      %2112 = vst.msk [vmem:[%s170 + $0x58] sm:$0xff] %vm978, %v2096
      %2113 = vst.msk [vmem:[%s170 + $0x60] sm:$0xff] %vm978, %v2097
      %2114 = vst.msk [vmem:[%s170 + $0x68] sm:$0xff] %vm978, %v2098
      %2115 = vst.msk [vmem:[%s170 + $0x70] sm:$0xff] %vm978, %v2099
      %2116 = vst.msk [vmem:[%s170 + $0x78] sm:$0xff] %vm978, %v2100
      %p2117 = scmp.lt.s32.totalorder %s14, 1
      %s2118 = scalar_select %p2117, %s14, 1
      %s2119 = smul.addr %s2118, 16
      %s2120 = smul.addr %s2119, 8
      %s2121 = scalar_lea.vmem %s3, %s2120
      // Predicated region
      $region33: #{cnn_forward.4} parent=31 // pred_check
        %p2122 = pneg %p100
      $region34: #{cnn_forward.4} parent=31 // pred_check_branch
        %2124 = sbr.rel (%p2122) target = $region36
      $region35: #{cnn_forward.4} parent=31 // pred_region
        _
      $region36: #{cnn_forward.4} parent=31 // pred_fallthru
        _
    $region32: #{cnn_forward.4} parent=5 // pred_fallthru
      _
    %p2125 = scmp.le.s32.totalorder 2, %s9
    // Predicated region
    $region37: #{cnn_forward.4} parent=5 // pred_check
      %p2126 = pneg %p2125
    $region38: #{cnn_forward.4} parent=5 // pred_check_branch
      %2128 = sbr.rel (%p2126) target = $region40
    $region39: #{cnn_forward.4} parent=5 // pred_region
      %s2129 = ssub.s32 %s9, 2
      // Predicated region
      $region41: #{cnn_forward.4} parent=39 // pred_check
        %p2130 = pneg %p106
      $region42: #{cnn_forward.4} parent=39 // pred_check_branch
        %2132 = sbr.rel (%p2130) target = $region44
      $region43: #{cnn_forward.4} parent=39 // pred_region
        %p2133 = scmp.lt.s32.totalorder %s15, 1
        %s2134 = scalar_select %p2133, %s15, 1
        %s2135 = smul.addr %s2134, 16
        %s2136 = smul.addr %s2135, 8
        %s2137 = scalar_lea.vmem %s3, %s2136
      $region44: #{cnn_forward.4} parent=39 // pred_fallthru
        _
    $region40: #{cnn_forward.4} parent=5 // pred_fallthru
      _
  $region6: #{cnn_forward.4} parent=0 // loop_footer
    %s13 = sadd.s32 1, %s9
  $region7: #{cnn_forward.4} parent=0 // loop_footer_branch
    %8 = sbr.rel target = $region3
  $region8: #{cnn_forward.4} parent=0 // loop_exit
    _

// kernel: cnn_forward.3
$region0: #{cnn_forward.3}
  #allocation0 [shape = 'u32[]', space=smem, size = 0x4, offset = 0x4, fixed_abs, tag = 'smem constant byte address 0x4 - core index']
  #allocation1 [shape = 'u32[144,128]{1,0:T(1,128)}', space=vmem, size = 0x12000, scoped, tag = 'internal scratch']
  %s0 = inlined_call_operand.vmem [shape: bf16[2,264,4], index: 0, kind: input, shape index: {}]
  %s1 = inlined_call_operand.vmem [shape: bf16[48,128], index: 1, kind: input, shape index: {}]
  %s2 = inlined_call_operand.vmem [shape: f32[1,32], index: 2, kind: input, shape index: {}]
  %s3 = inlined_call_operand.vmem [shape: bf16[2,176,32], index: 3, kind: output, shape index: {}]
  %s4 = sld [smem:[#allocation0]]
  $region45: #{cnn_forward.3} parent=0
    _
  %s6 = ssub.s32 1, %s4
  %s7 = scalar_select 0, %s6, %s4
  loop: start=0, step=1, limit=4
  $region2: #{cnn_forward.3} parent=0 // loop_pre_header
    _
  $region3: #{cnn_forward.3} parent=0 // loop_header
    %s9 = sphi 0, %s13
    %p10 = scmp.ge.s32.totalorder %s9, 4
    %s19 = sphi 0, %s21
    %s22 = sphi 0, %s19
    %s23 = sphi 0, %s22
    %s39 = sphi 0, %s23
    %s43 = sphi 0, %s43
    %s45 = sphi 0, %s43
    %s46 = sphi 0, %s45
    %s60 = sphi 0, %s46
    %s64 = sphi 0, %s64
    %s66 = sphi 0, %s64
    %s67 = sphi 0, %s66
    %s81 = sphi 0, %s67
    %s87 = sphi 0, %s89
    %s90 = sphi 0, %s87
    %s91 = sphi 0, %s90
    %s107 = sphi 0, %s91
  $region4: #{cnn_forward.3} parent=0 // loop_header_branch
    %12 = sbr.rel (%p10) target = $region8
  $region5: #{cnn_forward.3} parent=0 // loop_body
    %s14 = ssub.s32 %s9, 1
    %s15 = ssub.s32 %s9, 2
    %s16 = sadd.s32 %s9, 1
    %s17 = ssub.s32 %s9, %s16
    %p18 = scmp.eq.s32.totalorder %s17, 0
    %s20 = sadd.s32 %s19, 1
    %s21 = scalar_select %p18, %s19, %s20
    %p24 = pneg %p18
    %p25 = scmp.eq.s32.totalorder %s9, 1
    %p26 = por %p24, %p25
    %p27 = scmp.ne.s32.totalorder %s19, %s22
    %p28 = scmp.eq.s32.totalorder %s9, 0
    %p29 = por %p27, %p28
    %p30 = scmp.ne.s32.totalorder %s19, %s22
    %p31 = scmp.eq.s32.totalorder %s14, 1
    %p32 = por %p30, %p31
    %p33 = scmp.ne.s32.totalorder %s22, %s23
    %p34 = scmp.eq.s32.totalorder %s14, 0
    %p35 = por %p33, %p34
    %p36 = scmp.ne.s32.totalorder %s22, %s23
    %p37 = scmp.eq.s32.totalorder %s15, 1
    %p38 = por %p36, %p37
    %p40 = scmp.ne.s32.totalorder %s23, %s39
    %p41 = scmp.eq.s32.totalorder %s15, 0
    %p42 = por %p40, %p41
    %s44 = sadd.s32 %s43, 1
    %p47 = scmp.eq.s32.totalorder %s9, 1
    %p48 = scmp.ne.s32.totalorder %s43, %s45
    %p49 = scmp.eq.s32.totalorder %s9, 0
    %p50 = por %p48, %p49
    %p51 = scmp.ne.s32.totalorder %s43, %s45
    %p52 = scmp.eq.s32.totalorder %s14, 1
    %p53 = por %p51, %p52
    %p54 = scmp.ne.s32.totalorder %s45, %s46
    %p55 = scmp.eq.s32.totalorder %s14, 0
    %p56 = por %p54, %p55
    %p57 = scmp.ne.s32.totalorder %s45, %s46
    %p58 = scmp.eq.s32.totalorder %s15, 1
    %p59 = por %p57, %p58
    %p61 = scmp.ne.s32.totalorder %s46, %s60
    %p62 = scmp.eq.s32.totalorder %s15, 0
    %p63 = por %p61, %p62
    %s65 = sadd.s32 %s64, 1
    %p68 = scmp.eq.s32.totalorder %s9, 1
    %p69 = scmp.ne.s32.totalorder %s64, %s66
    %p70 = scmp.eq.s32.totalorder %s9, 0
    %p71 = por %p69, %p70
    %p72 = scmp.ne.s32.totalorder %s64, %s66
    %p73 = scmp.eq.s32.totalorder %s14, 1
    %p74 = por %p72, %p73
    %p75 = scmp.ne.s32.totalorder %s66, %s67
    %p76 = scmp.eq.s32.totalorder %s14, 0
    %p77 = por %p75, %p76
    %p78 = scmp.ne.s32.totalorder %s66, %s67
    %p79 = scmp.eq.s32.totalorder %s15, 1
    %p80 = por %p78, %p79
    %p82 = scmp.ne.s32.totalorder %s67, %s81
    %p83 = scmp.eq.s32.totalorder %s15, 0
    %p84 = por %p82, %p83
    %s85 = ssub.s32 %s9, %s16
    %p86 = scmp.eq.s32.totalorder %s85, 0
    %s88 = sadd.s32 %s87, 1
    %s89 = scalar_select %p86, %s87, %s88
    %p92 = pneg %p86
    %p93 = scmp.eq.s32.totalorder %s9, 1
    %p94 = por %p92, %p93
    %p95 = scmp.ne.s32.totalorder %s87, %s90
    %p96 = scmp.eq.s32.totalorder %s9, 0
    %p97 = por %p95, %p96
    %p98 = scmp.ne.s32.totalorder %s87, %s90
    %p99 = scmp.eq.s32.totalorder %s14, 1
    %p100 = por %p98, %p99
    %p101 = scmp.ne.s32.totalorder %s90, %s91
    %p102 = scmp.eq.s32.totalorder %s14, 0
    %p103 = por %p101, %p102
    %p104 = scmp.ne.s32.totalorder %s90, %s91
    %p105 = scmp.eq.s32.totalorder %s15, 1
    %p106 = por %p104, %p105
    %p108 = scmp.ne.s32.totalorder %s91, %s107
    %p109 = scmp.eq.s32.totalorder %s15, 0
    %p110 = por %p108, %p109
    %p111 = scmp.le.s32.totalorder 1, %s9
    %p112 = scmp.lt.s32.totalorder %s9, 3
    %p113 = pnand %p111, %p112
    %p114 = pneg %p113
    // Predicated region
    $region9: #{cnn_forward.3} parent=5 // pred_check
      _
    $region10: #{cnn_forward.3} parent=5 // pred_check_branch
      %116 = sbr.rel (%p113) target = $region12
    $region11: #{cnn_forward.3} parent=5 // pred_region
      %s117 = ssub.s32 %s9, 1
      // Predicated region
      $region13: #{cnn_forward.3} parent=11 // pred_check
        %p118 = pneg %p56
      $region14: #{cnn_forward.3} parent=11 // pred_check_branch
        %120 = sbr.rel (%p118) target = $region16
      $region15: #{cnn_forward.3} parent=11 // pred_region
        _
      $region16: #{cnn_forward.3} parent=11 // pred_fallthru
        _
      // Predicated region
      $region17: #{cnn_forward.3} parent=11 // pred_check
        %p121 = pneg %p77
      $region18: #{cnn_forward.3} parent=11 // pred_check_branch
        %123 = sbr.rel (%p121) target = $region20
      $region19: #{cnn_forward.3} parent=11 // pred_region
        _
      $region20: #{cnn_forward.3} parent=11 // pred_fallthru
        _
    $region12: #{cnn_forward.3} parent=5 // pred_fallthru
      _
    %p124 = scmp.lt.s32.totalorder %s9, 2
    // Predicated region
    $region21: #{cnn_forward.3} parent=5 // pred_check
      %p125 = pneg %p124
    $region22: #{cnn_forward.3} parent=5 // pred_check_branch
      %127 = sbr.rel (%p125) target = $region24
    $region23: #{cnn_forward.3} parent=5 // pred_region
      // Predicated region
      $region25: #{cnn_forward.3} parent=23 // pred_check
        %p128 = pneg %p29
      $region26: #{cnn_forward.3} parent=23 // pred_check_branch
        %130 = sbr.rel (%p128) target = $region28
      $region27: #{cnn_forward.3} parent=23 // pred_region
        %p131 = scmp.lt.s32.totalorder %s9, 1
        %s132 = scalar_select %p131, %s9, 1
        %s133 = smul.addr %s132, 33
        %s134 = smul.addr %s133, 4
        %s135 = scalar_lea.vmem %s0, %s134
      $region28: #{cnn_forward.3} parent=23 // pred_fallthru
        _
    $region24: #{cnn_forward.3} parent=5 // pred_fallthru
      _
    %p136 = scmp.le.s32.totalorder 1, %s9
    %p137 = scmp.lt.s32.totalorder %s9, 3
    %p138 = pnand %p136, %p137
    %p139 = pneg %p138
    // Predicated region
    $region29: #{cnn_forward.3} parent=5 // pred_check
      _
    $region30: #{cnn_forward.3} parent=5 // pred_check_branch
      %141 = sbr.rel (%p138) target = $region32
    $region31: #{cnn_forward.3} parent=5 // pred_region
      %s142 = ssub.s32 %s9, 1
      %p143 = scmp.lt.s32.totalorder %s14, 1
      %s144 = scalar_select %p143, %s14, 1
      %s145 = smul.addr %s144, 33
      %s146 = smul.addr %s145, 4
      %s147 = scalar_lea.vmem %s0, %s146
      %p148 = pneg %p35
      %p149 = pneg %p32
      %p150 = pneg %p56
      %p151 = pneg %p53
      %p152 = pneg %p77
      %p153 = pneg %p74
      %p154 = pneg %p103
      %p155 = pneg %p100
      %p156 = scmp.lt.s32.totalorder %s14, 1
      %s157 = scalar_select %p156, %s14, 1
      %s158 = smul.addr %s157, 22
      %s159 = smul.addr %s158, 4
      %s160 = scalar_lea.vmem %s3, %s159
      %p161 = scmp.lt.s32.totalorder %s14, 1
      %s162 = scalar_select %p161, %s14, 1
      %s163 = smul.addr %s162, 33
      %s164 = smul.addr %s163, 4
      %s165 = scalar_lea.vmem %s0, %s164
      %p166 = scmp.lt.s32.totalorder %s14, 1
      %s167 = scalar_select %p166, %s14, 1
      %s168 = smul.addr %s167, 22
      %s169 = smul.addr %s168, 4
      %s170 = scalar_lea.vmem %s3, %s169
      %v172 = vld [vmem:[%s165] sm:$0xf]
      %v173 = vld [vmem:[%s165 + $0x4] sm:$0xf]
      %v174 = vld [vmem:[%s165 + $0x8] sm:$0xf]
      %v175 = vld [vmem:[%s165 + $0xc] sm:$0xf]
      %v176 = vld [vmem:[%s165 + $0x10] sm:$0xf]
      %v177 = vld [vmem:[%s165 + $0x14] sm:$0xf]
      %v178 = vld [vmem:[%s165 + $0x18] sm:$0xf]
      %v179 = vld [vmem:[%s165 + $0x1c] sm:$0xf]
      %v180 = vld [vmem:[%s165 + $0x20] sm:$0xf]
      %v181 = vld [vmem:[%s165 + $0x24] sm:$0xf]
      %v182 = vld [vmem:[%s165 + $0x28] sm:$0xf]
      %v183 = vld [vmem:[%s165 + $0x2c] sm:$0xf]
      %v184 = vld [vmem:[%s165 + $0x30] sm:$0xf]
      %v185 = vld [vmem:[%s165 + $0x34] sm:$0xf]
      %v186 = vld [vmem:[%s165 + $0x38] sm:$0xf]
      %v187 = vld [vmem:[%s165 + $0x3c] sm:$0xf]
      %v188 = vld [vmem:[%s165 + $0x40] sm:$0xf]
      %v189 = vld [vmem:[%s165 + $0x44] sm:$0xf]
      %v190 = vld [vmem:[%s165 + $0x48] sm:$0xf]
      %v191 = vld [vmem:[%s165 + $0x4c] sm:$0xf]
      %v192 = vld [vmem:[%s165 + $0x50] sm:$0xf]
      %v193 = vld [vmem:[%s165 + $0x54] sm:$0xf]
      %v194 = vld [vmem:[%s165 + $0x58] sm:$0xf]
      %v195 = vld [vmem:[%s165 + $0x5c] sm:$0xf]
      %v196 = vld [vmem:[%s165 + $0x60] sm:$0xf]
      %v197 = vld [vmem:[%s165 + $0x64] sm:$0xf]
      %v198 = vld [vmem:[%s165 + $0x68] sm:$0xf]
      %v199 = vld [vmem:[%s165 + $0x6c] sm:$0x1]
      %v200 = vld [vmem:[%s165 + $0x6c] sm:$0xf]
      %v201 = vld [vmem:[%s165 + $0x70] sm:$0x1]
      %v202 = vld [vmem:[%s165 + $0x70] sm:$0xf]
      %v203 = vld [vmem:[%s165 + $0x74] sm:$0x1]
      %v204 = vld [vmem:[%s165 + $0x74] sm:$0xf]
      %v205 = vld [vmem:[%s165 + $0x78] sm:$0x1]
      %v206 = vld [vmem:[%s165 + $0x78] sm:$0xf]
      %v207 = vld [vmem:[%s165 + $0x7c] sm:$0x1]
      %v208 = vld [vmem:[%s165 + $0x7c] sm:$0xf]
      %v209 = vld [vmem:[%s165 + $0x80] sm:$0x1]
      %v237 = vunpack.c.l.b16 %v172
      %v238 = vunpack.c.l.b16 %v173
      %v239 = vunpack.c.l.b16 %v174
      %v240 = vunpack.c.l.b16 %v175
      %v241 = vunpack.c.l.b16 %v176
      %v242 = vunpack.c.l.b16 %v177
      %v243 = vunpack.c.l.b16 %v178
      %v244 = vunpack.c.l.b16 %v179
      %v245 = vunpack.c.l.b16 %v180
      %v246 = vunpack.c.l.b16 %v181
      %v247 = vunpack.c.l.b16 %v182
      %v248 = vunpack.c.l.b16 %v183
      %v249 = vunpack.c.l.b16 %v184
      %v250 = vunpack.c.l.b16 %v185
      %v251 = vunpack.c.l.b16 %v186
      %v252 = vunpack.c.l.b16 %v187
      %v253 = vunpack.c.l.b16 %v188
      %v254 = vunpack.c.l.b16 %v189
      %v255 = vunpack.c.l.b16 %v190
      %v256 = vunpack.c.l.b16 %v191
      %v257 = vunpack.c.l.b16 %v192
      %v258 = vunpack.c.l.b16 %v193
      %v259 = vunpack.c.l.b16 %v194
      %v260 = vunpack.c.l.b16 %v195
      %v261 = vunpack.c.l.b16 %v196
      %v262 = vunpack.c.l.b16 %v197
      %v263 = vunpack.c.l.b16 %v198
      %v264 = vpack.c.b16 %v238, %v237
      %v265 = vpack.c.b16 %v240, %v239
      %v266 = vpack.c.b16 %v242, %v241
      %v267 = vpack.c.b16 %v244, %v243
      %v268 = vpack.c.b16 %v246, %v245
      %v269 = vpack.c.b16 %v248, %v247
      %v270 = vpack.c.b16 %v250, %v249
      %v271 = vpack.c.b16 %v252, %v251
      %v272 = vpack.c.b16 %v254, %v253
      %v273 = vpack.c.b16 %v256, %v255
      %v274 = vpack.c.b16 %v258, %v257
      %v275 = vpack.c.b16 %v260, %v259
      %v276 = vpack.c.b16 %v262, %v261
      %v277 = vpack.c.b16 %v263, %v263
      %v279 = vunpack.c.l.b16 %v199
      %v280 = vpack.c.b16 %v279, %v263
      %vm281 = vsmask.f32 7424
      %v283 = vshrl.u32 %v264, 16
      %v285 = vshll.u32 %v264, 16
      %v287 = vrot.slane %v285, 1
      %v288 = vor.u32 %v283, %v287
      %v290 = vshll.u32 %v265, 16
      %v292 = vrot.slane %v290, 1
      %v293 = vsel %vm281, %v288, %v292
      %v294 = vshrl.u32 %v265, 16
      %v296 = vor.u32 %v294, %v292
      %v298 = vshll.u32 %v266, 16
      %v300 = vrot.slane %v298, 1
      %v301 = vsel %vm281, %v296, %v300
      %v302 = vshrl.u32 %v266, 16
      %v304 = vor.u32 %v302, %v300
      %v306 = vshll.u32 %v267, 16
      %v308 = vrot.slane %v306, 1
      %v309 = vsel %vm281, %v304, %v308
      %v310 = vshrl.u32 %v267, 16
      %v312 = vor.u32 %v310, %v308
      %v314 = vshll.u32 %v268, 16
      %v316 = vrot.slane %v314, 1
      %v317 = vsel %vm281, %v312, %v316
      %v318 = vshrl.u32 %v268, 16
      %v320 = vor.u32 %v318, %v316
      %v322 = vshll.u32 %v269, 16
      %v324 = vrot.slane %v322, 1
      %v325 = vsel %vm281, %v320, %v324
      %v326 = vshrl.u32 %v269, 16
      %v328 = vor.u32 %v326, %v324
      %v330 = vshll.u32 %v270, 16
      %v332 = vrot.slane %v330, 1
      %v333 = vsel %vm281, %v328, %v332
      %v334 = vshrl.u32 %v270, 16
      %v336 = vor.u32 %v334, %v332
      %v338 = vshll.u32 %v271, 16
      %v340 = vrot.slane %v338, 1
      %v341 = vsel %vm281, %v336, %v340
      %v342 = vshrl.u32 %v271, 16
      %v344 = vor.u32 %v342, %v340
      %v346 = vshll.u32 %v272, 16
      %v348 = vrot.slane %v346, 1
      %v349 = vsel %vm281, %v344, %v348
      %v350 = vshrl.u32 %v272, 16
      %v352 = vor.u32 %v350, %v348
      %v354 = vshll.u32 %v273, 16
      %v356 = vrot.slane %v354, 1
      %v357 = vsel %vm281, %v352, %v356
      %v358 = vshrl.u32 %v273, 16
      %v360 = vor.u32 %v358, %v356
      %v362 = vshll.u32 %v274, 16
      %v364 = vrot.slane %v362, 1
      %v365 = vsel %vm281, %v360, %v364
      %v366 = vshrl.u32 %v274, 16
      %v368 = vor.u32 %v366, %v364
      %v370 = vshll.u32 %v275, 16
      %v372 = vrot.slane %v370, 1
      %v373 = vsel %vm281, %v368, %v372
      %v374 = vshrl.u32 %v275, 16
      %v376 = vor.u32 %v374, %v372
      %v378 = vshll.u32 %v276, 16
      %v380 = vrot.slane %v378, 1
      %v381 = vsel %vm281, %v376, %v380
      %v382 = vshrl.u32 %v276, 16
      %v384 = vor.u32 %v382, %v380
      %v386 = vshll.u32 %v280, 16
      %v388 = vrot.slane %v386, 1
      %v389 = vsel %vm281, %v384, %v388
      %v390 = vshrl.u32 %v280, 16
      %v392 = vor.u32 %v390, %v388
      %393 = vrot.lane.b32.xlu0 %v293, 4
      %v394 = vpop.permute.xlu0 %393
      %395 = vrot.lane.b32.xlu0 %v301, 4
      %v396 = vpop.permute.xlu0 %395
      %397 = vrot.lane.b32.xlu0 %v309, 4
      %v398 = vpop.permute.xlu0 %397
      %399 = vrot.lane.b32.xlu0 %v317, 4
      %v400 = vpop.permute.xlu0 %399
      %401 = vrot.lane.b32.xlu0 %v325, 4
      %v402 = vpop.permute.xlu0 %401
      %403 = vrot.lane.b32.xlu0 %v333, 4
      %v404 = vpop.permute.xlu0 %403
      %405 = vrot.lane.b32.xlu0 %v341, 4
      %v406 = vpop.permute.xlu0 %405
      %407 = vrot.lane.b32.xlu0 %v349, 4
      %v408 = vpop.permute.xlu0 %407
      %409 = vrot.lane.b32.xlu0 %v357, 4
      %v410 = vpop.permute.xlu0 %409
      %411 = vrot.lane.b32.xlu0 %v365, 4
      %v412 = vpop.permute.xlu0 %411
      %413 = vrot.lane.b32.xlu0 %v373, 4
      %v414 = vpop.permute.xlu0 %413
      %415 = vrot.lane.b32.xlu0 %v381, 4
      %v416 = vpop.permute.xlu0 %415
      %417 = vrot.lane.b32.xlu0 %v389, 4
      %v418 = vpop.permute.xlu0 %417
      %419 = vrot.lane.b32.xlu0 %v392, 4
      %v420 = vpop.permute.xlu0 %419
      %v422 = vunpack.c.l.b16 %v200
      %v423 = vpack.c.b16 %v239, %v238
      %v424 = vpack.c.b16 %v241, %v240
      %v425 = vpack.c.b16 %v243, %v242
      %v426 = vpack.c.b16 %v245, %v244
      %v427 = vpack.c.b16 %v247, %v246
      %v428 = vpack.c.b16 %v249, %v248
      %v429 = vpack.c.b16 %v251, %v250
      %v430 = vpack.c.b16 %v253, %v252
      %v431 = vpack.c.b16 %v255, %v254
      %v432 = vpack.c.b16 %v257, %v256
      %v433 = vpack.c.b16 %v259, %v258
      %v434 = vpack.c.b16 %v261, %v260
      %v435 = vpack.c.b16 %v263, %v262
      %v436 = vpack.c.b16 %v422, %v422
      %437 = vrot.lane.b32.xlu0 %v423, 8
      %v438 = vpop.permute.xlu0 %437
      %439 = vrot.lane.b32.xlu0 %v424, 8
      %v440 = vpop.permute.xlu0 %439
      %441 = vrot.lane.b32.xlu0 %v425, 8
      %v442 = vpop.permute.xlu0 %441
      %443 = vrot.lane.b32.xlu0 %v426, 8
      %v444 = vpop.permute.xlu0 %443
      %445 = vrot.lane.b32.xlu0 %v427, 8
      %v446 = vpop.permute.xlu0 %445
      %447 = vrot.lane.b32.xlu0 %v428, 8
      %v448 = vpop.permute.xlu0 %447
      %449 = vrot.lane.b32.xlu0 %v429, 8
      %v450 = vpop.permute.xlu0 %449
      %451 = vrot.lane.b32.xlu0 %v430, 8
      %v452 = vpop.permute.xlu0 %451
      %453 = vrot.lane.b32.xlu0 %v431, 8
      %v454 = vpop.permute.xlu0 %453
      %455 = vrot.lane.b32.xlu0 %v432, 8
      %v456 = vpop.permute.xlu0 %455
      %457 = vrot.lane.b32.xlu0 %v433, 8
      %v458 = vpop.permute.xlu0 %457
      %459 = vrot.lane.b32.xlu0 %v434, 8
      %v460 = vpop.permute.xlu0 %459
      %461 = vrot.lane.b32.xlu0 %v435, 8
      %v462 = vpop.permute.xlu0 %461
      %463 = vrot.lane.b32.xlu0 %v436, 8
      %v464 = vpop.permute.xlu0 %463
      %v466 = vunpack.c.l.b16 %v201
      %v467 = vpack.c.b16 %v466, %v422
      %v469 = vshrl.u32 %v423, 16
      %v471 = vshll.u32 %v423, 16
      %v473 = vrot.slane %v471, 1
      %v474 = vor.u32 %v469, %v473
      %v476 = vshll.u32 %v424, 16
      %v478 = vrot.slane %v476, 1
      %v479 = vsel %vm281, %v474, %v478
      %v480 = vshrl.u32 %v424, 16
      %v482 = vor.u32 %v480, %v478
      %v484 = vshll.u32 %v425, 16
      %v486 = vrot.slane %v484, 1
      %v487 = vsel %vm281, %v482, %v486
      %v488 = vshrl.u32 %v425, 16
      %v490 = vor.u32 %v488, %v486
      %v492 = vshll.u32 %v426, 16
      %v494 = vrot.slane %v492, 1
      %v495 = vsel %vm281, %v490, %v494
      %v496 = vshrl.u32 %v426, 16
      %v498 = vor.u32 %v496, %v494
      %v500 = vshll.u32 %v427, 16
      %v502 = vrot.slane %v500, 1
      %v503 = vsel %vm281, %v498, %v502
      %v504 = vshrl.u32 %v427, 16
      %v506 = vor.u32 %v504, %v502
      %v508 = vshll.u32 %v428, 16
      %v510 = vrot.slane %v508, 1
      %v511 = vsel %vm281, %v506, %v510
      %v512 = vshrl.u32 %v428, 16
      %v514 = vor.u32 %v512, %v510
      %v516 = vshll.u32 %v429, 16
      %v518 = vrot.slane %v516, 1
      %v519 = vsel %vm281, %v514, %v518
      %v520 = vshrl.u32 %v429, 16
      %v522 = vor.u32 %v520, %v518
      %v524 = vshll.u32 %v430, 16
      %v526 = vrot.slane %v524, 1
      %v527 = vsel %vm281, %v522, %v526
      %v528 = vshrl.u32 %v430, 16
      %v530 = vor.u32 %v528, %v526
      %v532 = vshll.u32 %v431, 16
      %v534 = vrot.slane %v532, 1
      %v535 = vsel %vm281, %v530, %v534
      %v536 = vshrl.u32 %v431, 16
      %v538 = vor.u32 %v536, %v534
      %v540 = vshll.u32 %v432, 16
      %v542 = vrot.slane %v540, 1
      %v543 = vsel %vm281, %v538, %v542
      %v544 = vshrl.u32 %v432, 16
      %v546 = vor.u32 %v544, %v542
      %v548 = vshll.u32 %v433, 16
      %v550 = vrot.slane %v548, 1
      %v551 = vsel %vm281, %v546, %v550
      %v552 = vshrl.u32 %v433, 16
      %v554 = vor.u32 %v552, %v550
      %v556 = vshll.u32 %v434, 16
      %v558 = vrot.slane %v556, 1
      %v559 = vsel %vm281, %v554, %v558
      %v560 = vshrl.u32 %v434, 16
      %v562 = vor.u32 %v560, %v558
      %v564 = vshll.u32 %v435, 16
      %v566 = vrot.slane %v564, 1
      %v567 = vsel %vm281, %v562, %v566
      %v568 = vshrl.u32 %v435, 16
      %v570 = vor.u32 %v568, %v566
      %v572 = vshll.u32 %v467, 16
      %v574 = vrot.slane %v572, 1
      %v575 = vsel %vm281, %v570, %v574
      %v576 = vshrl.u32 %v467, 16
      %v578 = vor.u32 %v576, %v574
      %579 = vrot.lane.b32.xlu0 %v479, 12
      %v580 = vpop.permute.xlu0 %579
      %581 = vrot.lane.b32.xlu0 %v487, 12
      %v582 = vpop.permute.xlu0 %581
      %583 = vrot.lane.b32.xlu0 %v495, 12
      %v584 = vpop.permute.xlu0 %583
      %585 = vrot.lane.b32.xlu0 %v503, 12
      %v586 = vpop.permute.xlu0 %585
      %587 = vrot.lane.b32.xlu0 %v511, 12
      %v588 = vpop.permute.xlu0 %587
      %589 = vrot.lane.b32.xlu0 %v519, 12
      %v590 = vpop.permute.xlu0 %589
      %591 = vrot.lane.b32.xlu0 %v527, 12
      %v592 = vpop.permute.xlu0 %591
      %593 = vrot.lane.b32.xlu0 %v535, 12
      %v594 = vpop.permute.xlu0 %593
      %595 = vrot.lane.b32.xlu0 %v543, 12
      %v596 = vpop.permute.xlu0 %595
      %597 = vrot.lane.b32.xlu0 %v551, 12
      %v598 = vpop.permute.xlu0 %597
      %599 = vrot.lane.b32.xlu0 %v559, 12
      %v600 = vpop.permute.xlu0 %599
      %601 = vrot.lane.b32.xlu0 %v567, 12
      %v602 = vpop.permute.xlu0 %601
      %603 = vrot.lane.b32.xlu0 %v575, 12
      %v604 = vpop.permute.xlu0 %603
      %605 = vrot.lane.b32.xlu0 %v578, 12
      %v606 = vpop.permute.xlu0 %605
      %v608 = vunpack.c.l.b16 %v202
      %v609 = vpack.c.b16 %v422, %v263
      %v610 = vpack.c.b16 %v608, %v608
      %611 = vrot.lane.b32.xlu0 %v265, 16
      %v612 = vpop.permute.xlu0 %611
      %613 = vrot.lane.b32.xlu0 %v266, 16
      %v614 = vpop.permute.xlu0 %613
      %615 = vrot.lane.b32.xlu0 %v267, 16
      %v616 = vpop.permute.xlu0 %615
      %617 = vrot.lane.b32.xlu0 %v268, 16
      %v618 = vpop.permute.xlu0 %617
      %619 = vrot.lane.b32.xlu0 %v269, 16
      %v620 = vpop.permute.xlu0 %619
      %621 = vrot.lane.b32.xlu0 %v270, 16
      %v622 = vpop.permute.xlu0 %621
      %623 = vrot.lane.b32.xlu0 %v271, 16
      %v624 = vpop.permute.xlu0 %623
      %625 = vrot.lane.b32.xlu0 %v272, 16
      %v626 = vpop.permute.xlu0 %625
      %627 = vrot.lane.b32.xlu0 %v273, 16
      %v628 = vpop.permute.xlu0 %627
      %629 = vrot.lane.b32.xlu0 %v274, 16
      %v630 = vpop.permute.xlu0 %629
      %631 = vrot.lane.b32.xlu0 %v275, 16
      %v632 = vpop.permute.xlu0 %631
      %633 = vrot.lane.b32.xlu0 %v276, 16
      %v634 = vpop.permute.xlu0 %633
      %635 = vrot.lane.b32.xlu0 %v609, 16
      %v636 = vpop.permute.xlu0 %635
      %637 = vrot.lane.b32.xlu0 %v610, 16
      %v638 = vpop.permute.xlu0 %637
      %v640 = vunpack.c.l.b16 %v203
      %v641 = vpack.c.b16 %v640, %v608
      %v643 = vshll.u32 %v609, 16
      %v645 = vrot.slane %v643, 1
      %v646 = vsel %vm281, %v384, %v645
      %v647 = vshrl.u32 %v609, 16
      %v649 = vor.u32 %v647, %v645
      %v651 = vshll.u32 %v641, 16
      %v653 = vrot.slane %v651, 1
      %v654 = vsel %vm281, %v649, %v653
      %v655 = vshrl.u32 %v641, 16
      %v657 = vor.u32 %v655, %v653
      %658 = vrot.lane.b32.xlu0 %v301, 20
      %v659 = vpop.permute.xlu0 %658
      %660 = vrot.lane.b32.xlu0 %v309, 20
      %v661 = vpop.permute.xlu0 %660
      %662 = vrot.lane.b32.xlu0 %v317, 20
      %v663 = vpop.permute.xlu0 %662
      %664 = vrot.lane.b32.xlu0 %v325, 20
      %v665 = vpop.permute.xlu0 %664
      %666 = vrot.lane.b32.xlu0 %v333, 20
      %v667 = vpop.permute.xlu0 %666
      %668 = vrot.lane.b32.xlu0 %v341, 20
      %v669 = vpop.permute.xlu0 %668
      %670 = vrot.lane.b32.xlu0 %v349, 20
      %v671 = vpop.permute.xlu0 %670
      %672 = vrot.lane.b32.xlu0 %v357, 20
      %v673 = vpop.permute.xlu0 %672
      %674 = vrot.lane.b32.xlu0 %v365, 20
      %v675 = vpop.permute.xlu0 %674
      %676 = vrot.lane.b32.xlu0 %v373, 20
      %v677 = vpop.permute.xlu0 %676
      %678 = vrot.lane.b32.xlu0 %v381, 20
      %v679 = vpop.permute.xlu0 %678
      %680 = vrot.lane.b32.xlu0 %v646, 20
      %v681 = vpop.permute.xlu0 %680
      %682 = vrot.lane.b32.xlu0 %v654, 20
      %v683 = vpop.permute.xlu0 %682
      %684 = vrot.lane.b32.xlu0 %v657, 20
      %v685 = vpop.permute.xlu0 %684
      %v687 = vunpack.c.l.b16 %v204
      %v688 = vpack.c.b16 %v608, %v422
      %v689 = vpack.c.b16 %v687, %v687
      %690 = vrot.lane.b32.xlu0 %v424, 24
      %v691 = vpop.permute.xlu0 %690
      %692 = vrot.lane.b32.xlu0 %v425, 24
      %v693 = vpop.permute.xlu0 %692
      %694 = vrot.lane.b32.xlu0 %v426, 24
      %v695 = vpop.permute.xlu0 %694
      %696 = vrot.lane.b32.xlu0 %v427, 24
      %v697 = vpop.permute.xlu0 %696
      %698 = vrot.lane.b32.xlu0 %v428, 24
      %v699 = vpop.permute.xlu0 %698
      %700 = vrot.lane.b32.xlu0 %v429, 24
      %v701 = vpop.permute.xlu0 %700
      %702 = vrot.lane.b32.xlu0 %v430, 24
      %v703 = vpop.permute.xlu0 %702
      %704 = vrot.lane.b32.xlu0 %v431, 24
      %v705 = vpop.permute.xlu0 %704
      %706 = vrot.lane.b32.xlu0 %v432, 24
      %v707 = vpop.permute.xlu0 %706
      %708 = vrot.lane.b32.xlu0 %v433, 24
      %v709 = vpop.permute.xlu0 %708
      %710 = vrot.lane.b32.xlu0 %v434, 24
      %v711 = vpop.permute.xlu0 %710
      %712 = vrot.lane.b32.xlu0 %v435, 24
      %v713 = vpop.permute.xlu0 %712
      %714 = vrot.lane.b32.xlu0 %v688, 24
      %v715 = vpop.permute.xlu0 %714
      %716 = vrot.lane.b32.xlu0 %v689, 24
      %v717 = vpop.permute.xlu0 %716
      %v719 = vunpack.c.l.b16 %v205
      %v720 = vpack.c.b16 %v719, %v687
      %v722 = vshll.u32 %v688, 16
      %v724 = vrot.slane %v722, 1
      %v725 = vsel %vm281, %v570, %v724
      %v726 = vshrl.u32 %v688, 16
      %v728 = vor.u32 %v726, %v724
      %v730 = vshll.u32 %v720, 16
      %v732 = vrot.slane %v730, 1
      %v733 = vsel %vm281, %v728, %v732
      %v734 = vshrl.u32 %v720, 16
      %v736 = vor.u32 %v734, %v732
      %737 = vrot.lane.b32.xlu0 %v487, 28
      %v738 = vpop.permute.xlu0 %737
      %739 = vrot.lane.b32.xlu0 %v495, 28
      %v740 = vpop.permute.xlu0 %739
      %741 = vrot.lane.b32.xlu0 %v503, 28
      %v742 = vpop.permute.xlu0 %741
      %743 = vrot.lane.b32.xlu0 %v511, 28
      %v744 = vpop.permute.xlu0 %743
      %745 = vrot.lane.b32.xlu0 %v519, 28
      %v746 = vpop.permute.xlu0 %745
      %747 = vrot.lane.b32.xlu0 %v527, 28
      %v748 = vpop.permute.xlu0 %747
      %749 = vrot.lane.b32.xlu0 %v535, 28
      %v750 = vpop.permute.xlu0 %749
      %751 = vrot.lane.b32.xlu0 %v543, 28
      %v752 = vpop.permute.xlu0 %751
      %753 = vrot.lane.b32.xlu0 %v551, 28
      %v754 = vpop.permute.xlu0 %753
      %755 = vrot.lane.b32.xlu0 %v559, 28
      %v756 = vpop.permute.xlu0 %755
      %757 = vrot.lane.b32.xlu0 %v567, 28
      %v758 = vpop.permute.xlu0 %757
      %759 = vrot.lane.b32.xlu0 %v725, 28
      %v760 = vpop.permute.xlu0 %759
      %761 = vrot.lane.b32.xlu0 %v733, 28
      %v762 = vpop.permute.xlu0 %761
      %763 = vrot.lane.b32.xlu0 %v736, 28
      %v764 = vpop.permute.xlu0 %763
      %v766 = vunpack.c.l.b16 %v206
      %v767 = vpack.c.b16 %v687, %v608
      %v768 = vpack.c.b16 %v766, %v766
      %769 = vrot.lane.b32.xlu0 %v266, 32
      %v770 = vpop.permute.xlu0 %769
      %771 = vrot.lane.b32.xlu0 %v267, 32
      %v772 = vpop.permute.xlu0 %771
      %773 = vrot.lane.b32.xlu0 %v268, 32
      %v774 = vpop.permute.xlu0 %773
      %775 = vrot.lane.b32.xlu0 %v269, 32
      %v776 = vpop.permute.xlu0 %775
      %777 = vrot.lane.b32.xlu0 %v270, 32
      %v778 = vpop.permute.xlu0 %777
      %779 = vrot.lane.b32.xlu0 %v271, 32
      %v780 = vpop.permute.xlu0 %779
      %781 = vrot.lane.b32.xlu0 %v272, 32
      %v782 = vpop.permute.xlu0 %781
      %783 = vrot.lane.b32.xlu0 %v273, 32
      %v784 = vpop.permute.xlu0 %783
      %785 = vrot.lane.b32.xlu0 %v274, 32
      %v786 = vpop.permute.xlu0 %785
      %787 = vrot.lane.b32.xlu0 %v275, 32
      %v788 = vpop.permute.xlu0 %787
      %789 = vrot.lane.b32.xlu0 %v276, 32
      %v790 = vpop.permute.xlu0 %789
      %791 = vrot.lane.b32.xlu0 %v609, 32
      %v792 = vpop.permute.xlu0 %791
      %793 = vrot.lane.b32.xlu0 %v767, 32
      %v794 = vpop.permute.xlu0 %793
      %795 = vrot.lane.b32.xlu0 %v768, 32
      %v796 = vpop.permute.xlu0 %795
      %v798 = vunpack.c.l.b16 %v207
      %v799 = vpack.c.b16 %v798, %v766
      %v801 = vshll.u32 %v767, 16
      %v803 = vrot.slane %v801, 1
      %v804 = vsel %vm281, %v649, %v803
      %v805 = vshrl.u32 %v767, 16
      %v807 = vor.u32 %v805, %v803
      %v809 = vshll.u32 %v799, 16
      %v811 = vrot.slane %v809, 1
      %v812 = vsel %vm281, %v807, %v811
      %v813 = vshrl.u32 %v799, 16
      %v815 = vor.u32 %v813, %v811
      %816 = vrot.lane.b32.xlu0 %v309, 36
      %v817 = vpop.permute.xlu0 %816
      %818 = vrot.lane.b32.xlu0 %v317, 36
      %v819 = vpop.permute.xlu0 %818
      %820 = vrot.lane.b32.xlu0 %v325, 36
      %v821 = vpop.permute.xlu0 %820
      %822 = vrot.lane.b32.xlu0 %v333, 36
      %v823 = vpop.permute.xlu0 %822
      %824 = vrot.lane.b32.xlu0 %v341, 36
      %v825 = vpop.permute.xlu0 %824
      %826 = vrot.lane.b32.xlu0 %v349, 36
      %v827 = vpop.permute.xlu0 %826
      %828 = vrot.lane.b32.xlu0 %v357, 36
      %v829 = vpop.permute.xlu0 %828
      %830 = vrot.lane.b32.xlu0 %v365, 36
      %v831 = vpop.permute.xlu0 %830
      %832 = vrot.lane.b32.xlu0 %v373, 36
      %v833 = vpop.permute.xlu0 %832
      %834 = vrot.lane.b32.xlu0 %v381, 36
      %v835 = vpop.permute.xlu0 %834
      %836 = vrot.lane.b32.xlu0 %v646, 36
      %v837 = vpop.permute.xlu0 %836
      %838 = vrot.lane.b32.xlu0 %v804, 36
      %v839 = vpop.permute.xlu0 %838
      %840 = vrot.lane.b32.xlu0 %v812, 36
      %v841 = vpop.permute.xlu0 %840
      %842 = vrot.lane.b32.xlu0 %v815, 36
      %v843 = vpop.permute.xlu0 %842
      %v845 = vunpack.c.l.b16 %v208
      %v846 = vpack.c.b16 %v766, %v687
      %v847 = vpack.c.b16 %v845, %v845
      %848 = vrot.lane.b32.xlu0 %v425, 40
      %v849 = vpop.permute.xlu0 %848
      %850 = vrot.lane.b32.xlu0 %v426, 40
      %v851 = vpop.permute.xlu0 %850
      %852 = vrot.lane.b32.xlu0 %v427, 40
      %v853 = vpop.permute.xlu0 %852
      %854 = vrot.lane.b32.xlu0 %v428, 40
      %v855 = vpop.permute.xlu0 %854
      %856 = vrot.lane.b32.xlu0 %v429, 40
      %v857 = vpop.permute.xlu0 %856
      %858 = vrot.lane.b32.xlu0 %v430, 40
      %v859 = vpop.permute.xlu0 %858
      %860 = vrot.lane.b32.xlu0 %v431, 40
      %v861 = vpop.permute.xlu0 %860
      %862 = vrot.lane.b32.xlu0 %v432, 40
      %v863 = vpop.permute.xlu0 %862
      %864 = vrot.lane.b32.xlu0 %v433, 40
      %v865 = vpop.permute.xlu0 %864
      %866 = vrot.lane.b32.xlu0 %v434, 40
      %v867 = vpop.permute.xlu0 %866
      %868 = vrot.lane.b32.xlu0 %v435, 40
      %v869 = vpop.permute.xlu0 %868
      %870 = vrot.lane.b32.xlu0 %v688, 40
      %v871 = vpop.permute.xlu0 %870
      %872 = vrot.lane.b32.xlu0 %v846, 40
      %v873 = vpop.permute.xlu0 %872
      %874 = vrot.lane.b32.xlu0 %v847, 40
      %v875 = vpop.permute.xlu0 %874
      %v877 = vunpack.c.l.b16 %v209
      %v878 = vpack.c.b16 %v877, %v845
      %v880 = vshll.u32 %v846, 16
      %v882 = vrot.slane %v880, 1
      %v883 = vsel %vm281, %v728, %v882
      %v884 = vshrl.u32 %v846, 16
      %v886 = vor.u32 %v884, %v882
      %v888 = vshll.u32 %v878, 16
      %v890 = vrot.slane %v888, 1
      %v891 = vsel %vm281, %v886, %v890
      %v892 = vshrl.u32 %v878, 16
      %v894 = vor.u32 %v892, %v890
      %895 = vrot.lane.b32.xlu0 %v495, 44
      %v896 = vpop.permute.xlu0 %895
      %897 = vrot.lane.b32.xlu0 %v503, 44
      %v898 = vpop.permute.xlu0 %897
      %899 = vrot.lane.b32.xlu0 %v511, 44
      %v900 = vpop.permute.xlu0 %899
      %901 = vrot.lane.b32.xlu0 %v519, 44
      %v902 = vpop.permute.xlu0 %901
      %903 = vrot.lane.b32.xlu0 %v527, 44
      %v904 = vpop.permute.xlu0 %903
      %905 = vrot.lane.b32.xlu0 %v535, 44
      %v906 = vpop.permute.xlu0 %905
      %907 = vrot.lane.b32.xlu0 %v543, 44
      %v908 = vpop.permute.xlu0 %907
      %909 = vrot.lane.b32.xlu0 %v551, 44
      %v910 = vpop.permute.xlu0 %909
      %911 = vrot.lane.b32.xlu0 %v559, 44
      %v912 = vpop.permute.xlu0 %911
      %913 = vrot.lane.b32.xlu0 %v567, 44
      %v914 = vpop.permute.xlu0 %913
      %915 = vrot.lane.b32.xlu0 %v725, 44
      %v916 = vpop.permute.xlu0 %915
      %917 = vrot.lane.b32.xlu0 %v883, 44
      %v918 = vpop.permute.xlu0 %917
      %919 = vrot.lane.b32.xlu0 %v891, 44
      %v920 = vpop.permute.xlu0 %919
      %921 = vrot.lane.b32.xlu0 %v894, 44
      %v922 = vpop.permute.xlu0 %921
      %vm923 = vcmask 31744
      %v925 = vsel %vm923, %v264, %v394
      %v927 = vsel %vm923, %v265, %v396
      %v929 = vsel %vm923, %v266, %v398
      %v931 = vsel %vm923, %v267, %v400
      %v933 = vsel %vm923, %v268, %v402
      %v935 = vsel %vm923, %v269, %v404
      %v937 = vsel %vm923, %v270, %v406
      %v939 = vsel %vm923, %v271, %v408
      %v941 = vsel %vm923, %v272, %v410
      %v943 = vsel %vm923, %v273, %v412
      %v945 = vsel %vm923, %v274, %v414
      %v947 = vsel %vm923, %v275, %v416
      %v949 = vsel %vm923, %v276, %v418
      %v952 = vsel %vm923, %v277, %v420
      %vm953 = vcmask 64512
      %v955 = vsel %vm953, %v925, %v438
      %v957 = vsel %vm953, %v927, %v440
      %v959 = vsel %vm953, %v929, %v442
      %v961 = vsel %vm953, %v931, %v444
      %v963 = vsel %vm953, %v933, %v446
      %v965 = vsel %vm953, %v935, %v448
      %v967 = vsel %vm953, %v937, %v450
      %v969 = vsel %vm953, %v939, %v452
      %v971 = vsel %vm953, %v941, %v454
      %v973 = vsel %vm953, %v943, %v456
      %v975 = vsel %vm953, %v945, %v458
      %v977 = vsel %vm953, %v947, %v460
      %v979 = vsel %vm953, %v949, %v462
      %v981 = vsel %vm953, %v952, %v464
      %vm982 = vcmask 97280
      %v984 = vsel %vm982, %v955, %v580
      %v986 = vsel %vm982, %v957, %v582
      %v988 = vsel %vm982, %v959, %v584
      %v990 = vsel %vm982, %v961, %v586
      %v992 = vsel %vm982, %v963, %v588
      %v994 = vsel %vm982, %v965, %v590
      %v996 = vsel %vm982, %v967, %v592
      %v998 = vsel %vm982, %v969, %v594
      %v1000 = vsel %vm982, %v971, %v596
      %v1002 = vsel %vm982, %v973, %v598
      %v1004 = vsel %vm982, %v975, %v600
      %v1006 = vsel %vm982, %v977, %v602
      %v1008 = vsel %vm982, %v979, %v604
      %v1010 = vsel %vm982, %v981, %v606
      %vm1011 = vcmask 130048
      %v1013 = vsel %vm1011, %v984, %v612
      %v1015 = vsel %vm1011, %v986, %v614
      %v1017 = vsel %vm1011, %v988, %v616
      %v1019 = vsel %vm1011, %v990, %v618
      %v1021 = vsel %vm1011, %v992, %v620
      %v1023 = vsel %vm1011, %v994, %v622
      %v1025 = vsel %vm1011, %v996, %v624
      %v1027 = vsel %vm1011, %v998, %v626
      %v1029 = vsel %vm1011, %v1000, %v628
      %v1031 = vsel %vm1011, %v1002, %v630
      %v1033 = vsel %vm1011, %v1004, %v632
      %v1035 = vsel %vm1011, %v1006, %v634
      %v1037 = vsel %vm1011, %v1008, %v636
      %v1039 = vsel %vm1011, %v1010, %v638
      %vm1040 = vcmask 162816
      %v1042 = vsel %vm1040, %v1013, %v659
      %v1044 = vsel %vm1040, %v1015, %v661
      %v1046 = vsel %vm1040, %v1017, %v663
      %v1048 = vsel %vm1040, %v1019, %v665
      %v1050 = vsel %vm1040, %v1021, %v667
      %v1052 = vsel %vm1040, %v1023, %v669
      %v1054 = vsel %vm1040, %v1025, %v671
      %v1056 = vsel %vm1040, %v1027, %v673
      %v1058 = vsel %vm1040, %v1029, %v675
      %v1060 = vsel %vm1040, %v1031, %v677
      %v1062 = vsel %vm1040, %v1033, %v679
      %v1064 = vsel %vm1040, %v1035, %v681
      %v1066 = vsel %vm1040, %v1037, %v683
      %v1068 = vsel %vm1040, %v1039, %v685
      %vm1069 = vcmask 195584
      %v1071 = vsel %vm1069, %v1042, %v691
      %v1073 = vsel %vm1069, %v1044, %v693
      %v1075 = vsel %vm1069, %v1046, %v695
      %v1077 = vsel %vm1069, %v1048, %v697
      %v1079 = vsel %vm1069, %v1050, %v699
      %v1081 = vsel %vm1069, %v1052, %v701
      %v1083 = vsel %vm1069, %v1054, %v703
      %v1085 = vsel %vm1069, %v1056, %v705
      %v1087 = vsel %vm1069, %v1058, %v707
      %v1089 = vsel %vm1069, %v1060, %v709
      %v1091 = vsel %vm1069, %v1062, %v711
      %v1093 = vsel %vm1069, %v1064, %v713
      %v1095 = vsel %vm1069, %v1066, %v715
      %v1097 = vsel %vm1069, %v1068, %v717
      %vm1098 = vcmask 228352
      %v1100 = vsel %vm1098, %v1071, %v738
      %v1102 = vsel %vm1098, %v1073, %v740
      %v1104 = vsel %vm1098, %v1075, %v742
      %v1106 = vsel %vm1098, %v1077, %v744
      %v1108 = vsel %vm1098, %v1079, %v746
      %v1110 = vsel %vm1098, %v1081, %v748
      %v1112 = vsel %vm1098, %v1083, %v750
      %v1114 = vsel %vm1098, %v1085, %v752
      %v1116 = vsel %vm1098, %v1087, %v754
      %v1118 = vsel %vm1098, %v1089, %v756
      %v1120 = vsel %vm1098, %v1091, %v758
      %v1122 = vsel %vm1098, %v1093, %v760
      %v1124 = vsel %vm1098, %v1095, %v762
      %v1126 = vsel %vm1098, %v1097, %v764
      %vm1127 = vcmask 261120
      %v1129 = vsel %vm1127, %v1100, %v770
      %v1131 = vsel %vm1127, %v1102, %v772
      %v1133 = vsel %vm1127, %v1104, %v774
      %v1135 = vsel %vm1127, %v1106, %v776
      %v1137 = vsel %vm1127, %v1108, %v778
      %v1139 = vsel %vm1127, %v1110, %v780
      %v1141 = vsel %vm1127, %v1112, %v782
      %v1143 = vsel %vm1127, %v1114, %v784
      %v1145 = vsel %vm1127, %v1116, %v786
      %v1147 = vsel %vm1127, %v1118, %v788
      %v1149 = vsel %vm1127, %v1120, %v790
      %v1151 = vsel %vm1127, %v1122, %v792
      %v1153 = vsel %vm1127, %v1124, %v794
      %v1155 = vsel %vm1127, %v1126, %v796
      %vm1156 = vcmask 293888
      %v1158 = vsel %vm1156, %v1129, %v817
      %v1160 = vsel %vm1156, %v1131, %v819
      %v1162 = vsel %vm1156, %v1133, %v821
      %v1164 = vsel %vm1156, %v1135, %v823
      %v1166 = vsel %vm1156, %v1137, %v825
      %v1168 = vsel %vm1156, %v1139, %v827
      %v1170 = vsel %vm1156, %v1141, %v829
      %v1172 = vsel %vm1156, %v1143, %v831
      %v1174 = vsel %vm1156, %v1145, %v833
      %v1176 = vsel %vm1156, %v1147, %v835
      %v1178 = vsel %vm1156, %v1149, %v837
      %v1180 = vsel %vm1156, %v1151, %v839
      %v1182 = vsel %vm1156, %v1153, %v841
      %v1184 = vsel %vm1156, %v1155, %v843
      %vm1185 = vcmask 326656
      %v1187 = vsel %vm1185, %v1158, %v849
      %v1189 = vsel %vm1185, %v1160, %v851
      %v1191 = vsel %vm1185, %v1162, %v853
      %v1193 = vsel %vm1185, %v1164, %v855
      %v1195 = vsel %vm1185, %v1166, %v857
      %v1197 = vsel %vm1185, %v1168, %v859
      %v1199 = vsel %vm1185, %v1170, %v861
      %v1201 = vsel %vm1185, %v1172, %v863
      %v1203 = vsel %vm1185, %v1174, %v865
      %v1205 = vsel %vm1185, %v1176, %v867
      %v1207 = vsel %vm1185, %v1178, %v869
      %v1209 = vsel %vm1185, %v1180, %v871
      %v1211 = vsel %vm1185, %v1182, %v873
      %v1213 = vsel %vm1185, %v1184, %v875
      %vm1214 = vcmask 359424
      %v1216 = vsel %vm1214, %v1187, %v896
      %v1218 = vsel %vm1214, %v1189, %v898
      %v1220 = vsel %vm1214, %v1191, %v900
      %v1222 = vsel %vm1214, %v1193, %v902
      %v1224 = vsel %vm1214, %v1195, %v904
      %v1226 = vsel %vm1214, %v1197, %v906
      %v1228 = vsel %vm1214, %v1199, %v908
      %v1230 = vsel %vm1214, %v1201, %v910
      %v1232 = vsel %vm1214, %v1203, %v912
      %v1234 = vsel %vm1214, %v1205, %v914
      %v1236 = vsel %vm1214, %v1207, %v916
      %v1238 = vsel %vm1214, %v1209, %v918
      %v1240 = vsel %vm1214, %v1211, %v920
      %v1242 = vsel %vm1214, %v1213, %v922
      %v1243 = vld [vmem:[%s1] sm:$0xf]
      %v1244 = vld [vmem:[%s1 + $0x4] sm:$0xf]
      %v1245 = vld [vmem:[%s1 + $0x8] sm:$0xf]
      %v1246 = vld [vmem:[%s1 + $0xc] sm:$0xf]
      %v1247 = vld [vmem:[%s1 + $0x10] sm:$0xf]
      %v1248 = vld [vmem:[%s1 + $0x14] sm:$0xf]
      %v1255 = vunpack.c.l.b16 %v1243
      %v1256 = vunpack.c.l.b16 %v1244
      %v1257 = vunpack.c.l.b16 %v1245
      %v1258 = vunpack.c.l.b16 %v1246
      %v1259 = vunpack.c.l.b16 %v1247
      %v1260 = vunpack.c.l.b16 %v1248
      %v1261 = vpack.c.b16 %v1256, %v1255
      %v1262 = vpack.c.b16 %v1258, %v1257
      %v1263 = vpack.c.b16 %v1260, %v1259
      %vm1267 = vcmask 392192
      %v1268 = vsel %vm1267, %v1216, 0
      %v1270 = vsel %vm1267, %v1218, 0
      %v1272 = vsel %vm1267, %v1220, 0
      %v1274 = vsel %vm1267, %v1222, 0
      %v1276 = vsel %vm1267, %v1224, 0
      %v1278 = vsel %vm1267, %v1226, 0
      %v1280 = vsel %vm1267, %v1228, 0
      %v1282 = vsel %vm1267, %v1230, 0
      %v1284 = vsel %vm1267, %v1232, 0
      %v1286 = vsel %vm1267, %v1234, 0
      %v1288 = vsel %vm1267, %v1236, 0
      %v1290 = vsel %vm1267, %v1238, 0
      %v1292 = vsel %vm1267, %v1240, 0
      %v1294 = vsel %vm1267, %v1242, 0
      %1296 = vmatprep.subr.bf16.mxu0 0
      %1297 = vmatpush1.bf16.msra.mxu0 %v1261
      %1298 = vmatprep.subr.bf16.mxu0 0
      %1299 = vmatpush1.bf16.msra.mxu0 %v1262
      %1300 = vmatprep.subr.bf16.mxu0 0
      %1301 = vmatpush1.bf16.msra.mxu0 %v1263
      %1302 = vmatprep.subr.bf16.mxu0 0
      %1303 = vmatpush1.bf16.msra.mxu0 0
      %1304 = vmatprep.subr.bf16.mxu0 0
      %1305 = vmatpush1.bf16.msra.mxu0 0
      %1306 = vmatprep.subr.bf16.mxu0 0
      %1307 = vmatpush1.bf16.msra.mxu0 0
      %1308 = vmatprep.subr.bf16.mxu0 0
      %1309 = vmatpush1.bf16.msra.mxu0 0
      %1310 = vmatprep.subr.bf16.mxu0 0
      %1311 = vmatpush1.bf16.msra.mxu0 0
      %1312 = vmatprep.subr.bf16.mxu0 0
      %1313 = vmatpush1.bf16.msra.mxu0 0
      %1314 = vmatprep.subr.bf16.mxu0 0
      %1315 = vmatpush1.bf16.msra.mxu0 0
      %1316 = vmatprep.subr.bf16.mxu0 0
      %1317 = vmatpush1.bf16.msra.mxu0 0
      %1318 = vmatprep.subr.bf16.mxu0 0
      %1319 = vmatpush1.bf16.msra.mxu0 0
      %1320 = vmatprep.subr.bf16.mxu0 0
      %1321 = vmatpush1.bf16.msra.mxu0 0
      %1322 = vmatprep.subr.bf16.mxu0 0
      %1323 = vmatpush1.bf16.msra.mxu0 0
      %1324 = vmatprep.subr.bf16.mxu0 0
      %1325 = vmatpush1.bf16.msra.mxu0 0
      %1326 = vmatprep.subr.bf16.mxu0 0
      %1327 = vmatpush1.bf16.msra.mxu0 0
      %1328 = vmatprep.mubr.bf16.mxu0 0
      %1329 = vmatmul.mubr.bf16.gmra.mrb[0].mxu0 %v1268
      %v1330 = vpop.f32.mrb[0].mxu0
      %v1331 = vadd.f32 0.0, %v1330
      %v1332 = vpop.f32.mrb[0].mxu0
      %v1333 = vpop.f32.mrb[0].mxu0
      %v1334 = vadd.f32 0.0, %v1333
      %v1335 = vpop.f32.mrb[0].mxu0
      %1336 = vmatprep.mubr.bf16.mxu0 0
      %1337 = vmatmul.mubr.bf16.gmra.mrb[0].mxu0 %v1270
      %v1338 = vpop.f32.mrb[0].mxu0
      %v1339 = vadd.f32 0.0, %v1338
      %v1340 = vpop.f32.mrb[0].mxu0
      %v1341 = vpop.f32.mrb[0].mxu0
      %v1342 = vadd.f32 0.0, %v1341
      %v1343 = vpop.f32.mrb[0].mxu0
      %1344 = vmatprep.mubr.bf16.mxu0 0
      %1345 = vmatmul.mubr.bf16.gmra.mrb[0].mxu0 %v1272
      %v1346 = vpop.f32.mrb[0].mxu0
      %v1347 = vadd.f32 0.0, %v1346
      %v1348 = vpop.f32.mrb[0].mxu0
      %v1349 = vpop.f32.mrb[0].mxu0
      %v1350 = vadd.f32 0.0, %v1349
      %v1351 = vpop.f32.mrb[0].mxu0
      %1352 = vmatprep.mubr.bf16.mxu0 0
      %1353 = vmatmul.mubr.bf16.gmra.mrb[0].mxu0 %v1274
      %v1354 = vpop.f32.mrb[0].mxu0
      %v1355 = vadd.f32 0.0, %v1354
      %v1356 = vpop.f32.mrb[0].mxu0
      %v1357 = vpop.f32.mrb[0].mxu0
      %v1358 = vadd.f32 0.0, %v1357
      %v1359 = vpop.f32.mrb[0].mxu0
      %1360 = vmatprep.mubr.bf16.mxu0 0
      %1361 = vmatmul.mubr.bf16.gmra.mrb[0].mxu0 %v1276
      %v1362 = vpop.f32.mrb[0].mxu0
      %v1363 = vadd.f32 0.0, %v1362
      %v1364 = vpop.f32.mrb[0].mxu0
      %v1365 = vpop.f32.mrb[0].mxu0
      %v1366 = vadd.f32 0.0, %v1365
      %v1367 = vpop.f32.mrb[0].mxu0
      %1368 = vmatprep.mubr.bf16.mxu0 0
      %1369 = vmatmul.mubr.bf16.gmra.mrb[0].mxu0 %v1278
      %v1370 = vpop.f32.mrb[0].mxu0
      %v1371 = vadd.f32 0.0, %v1370
      %v1372 = vpop.f32.mrb[0].mxu0
      %v1373 = vpop.f32.mrb[0].mxu0
      %v1374 = vadd.f32 0.0, %v1373
      %v1375 = vpop.f32.mrb[0].mxu0
      %1376 = vmatprep.mubr.bf16.mxu0 0
      %1377 = vmatmul.mubr.bf16.gmra.mrb[0].mxu0 %v1280
      %v1378 = vpop.f32.mrb[0].mxu0
      %v1379 = vadd.f32 0.0, %v1378
      %v1380 = vpop.f32.mrb[0].mxu0
      %v1381 = vpop.f32.mrb[0].mxu0
      %v1382 = vadd.f32 0.0, %v1381
      %v1383 = vpop.f32.mrb[0].mxu0
      %1384 = vmatprep.mubr.bf16.mxu0 0
      %1385 = vmatmul.mubr.bf16.gmra.mrb[0].mxu0 %v1282
      %v1386 = vpop.f32.mrb[0].mxu0
      %v1387 = vadd.f32 0.0, %v1386
      %v1388 = vpop.f32.mrb[0].mxu0
      %v1389 = vpop.f32.mrb[0].mxu0
      %v1390 = vadd.f32 0.0, %v1389
      %v1391 = vpop.f32.mrb[0].mxu0
      %1392 = vmatprep.mubr.bf16.mxu0 0
      %1393 = vmatmul.mubr.bf16.gmra.mrb[0].mxu0 %v1284
      %v1394 = vpop.f32.mrb[0].mxu0
      %v1395 = vadd.f32 0.0, %v1394
      %v1396 = vpop.f32.mrb[0].mxu0
      %v1397 = vpop.f32.mrb[0].mxu0
      %v1398 = vadd.f32 0.0, %v1397
      %v1399 = vpop.f32.mrb[0].mxu0
      %1400 = vmatprep.mubr.bf16.mxu0 0
      %1401 = vmatmul.mubr.bf16.gmra.mrb[0].mxu0 %v1286
      %v1402 = vpop.f32.mrb[0].mxu0
      %v1403 = vadd.f32 0.0, %v1402
      %v1404 = vpop.f32.mrb[0].mxu0
      %v1405 = vpop.f32.mrb[0].mxu0
      %v1406 = vadd.f32 0.0, %v1405
      %v1407 = vpop.f32.mrb[0].mxu0
      %1408 = vmatprep.mubr.bf16.mxu0 0
      %1409 = vmatmul.mubr.bf16.gmra.mrb[0].mxu0 %v1288
      %v1410 = vpop.f32.mrb[0].mxu0
      %v1411 = vadd.f32 0.0, %v1410
      %v1412 = vpop.f32.mrb[0].mxu0
      %v1413 = vpop.f32.mrb[0].mxu0
      %v1414 = vadd.f32 0.0, %v1413
      %v1415 = vpop.f32.mrb[0].mxu0
      %1416 = vmatprep.mubr.bf16.mxu0 0
      %1417 = vmatmul.mubr.bf16.gmra.mrb[0].mxu0 %v1290
      %v1418 = vpop.f32.mrb[0].mxu0
      %v1419 = vadd.f32 0.0, %v1418
      %v1420 = vpop.f32.mrb[0].mxu0
      %v1421 = vpop.f32.mrb[0].mxu0
      %v1422 = vadd.f32 0.0, %v1421
      %v1423 = vpop.f32.mrb[0].mxu0
      %1424 = vmatprep.mubr.bf16.mxu0 0
      %1425 = vmatmul.mubr.bf16.gmra.mrb[0].mxu0 %v1292
      %v1426 = vpop.f32.mrb[0].mxu0
      %v1427 = vadd.f32 0.0, %v1426
      %v1428 = vpop.f32.mrb[0].mxu0
      %v1429 = vpop.f32.mrb[0].mxu0
      %v1430 = vadd.f32 0.0, %v1429
      %v1431 = vpop.f32.mrb[0].mxu0
      %1432 = vmatprep.mubr.bf16.mxu0 0
      %1433 = vmatmul.mubr.bf16.gmra.mrb[0].mxu0 %v1294
      %v1434 = vpop.f32.mrb[0].mxu0
      %v1435 = vadd.f32 0.0, %v1434
      %v1436 = vpop.f32.mrb[0].mxu0
      %v1437 = vpop.f32.mrb[0].mxu0
      %v1438 = vpop.f32.mrb[0].mxu0
      %1439 = vdwg.mxu0
      %1467 = vrot.lane.b32.xlu0 %v1331, 96
      %v1468 = vpop.permute.xlu0 %1467
      %1469 = vrot.lane.b32.xlu0 %v1334, 96
      %v1470 = vpop.permute.xlu0 %1469
      %1471 = vrot.lane.b32.xlu0 %v1339, 96
      %v1472 = vpop.permute.xlu0 %1471
      %1473 = vrot.lane.b32.xlu0 %v1342, 96
      %v1474 = vpop.permute.xlu0 %1473
      %1475 = vrot.lane.b32.xlu0 %v1347, 96
      %v1476 = vpop.permute.xlu0 %1475
      %1477 = vrot.lane.b32.xlu0 %v1350, 96
      %v1478 = vpop.permute.xlu0 %1477
      %1479 = vrot.lane.b32.xlu0 %v1355, 96
      %v1480 = vpop.permute.xlu0 %1479
      %1481 = vrot.lane.b32.xlu0 %v1358, 96
      %v1482 = vpop.permute.xlu0 %1481
      %1483 = vrot.lane.b32.xlu0 %v1363, 96
      %v1484 = vpop.permute.xlu0 %1483
      %1485 = vrot.lane.b32.xlu0 %v1366, 96
      %v1486 = vpop.permute.xlu0 %1485
      %1487 = vrot.lane.b32.xlu0 %v1371, 96
      %v1488 = vpop.permute.xlu0 %1487
      %1489 = vrot.lane.b32.xlu0 %v1374, 96
      %v1490 = vpop.permute.xlu0 %1489
      %1491 = vrot.lane.b32.xlu0 %v1379, 96
      %v1492 = vpop.permute.xlu0 %1491
      %1493 = vrot.lane.b32.xlu0 %v1382, 96
      %v1494 = vpop.permute.xlu0 %1493
      %1495 = vrot.lane.b32.xlu0 %v1387, 96
      %v1496 = vpop.permute.xlu0 %1495
      %1497 = vrot.lane.b32.xlu0 %v1390, 96
      %v1498 = vpop.permute.xlu0 %1497
      %1499 = vrot.lane.b32.xlu0 %v1395, 96
      %v1500 = vpop.permute.xlu0 %1499
      %1501 = vrot.lane.b32.xlu0 %v1398, 96
      %v1502 = vpop.permute.xlu0 %1501
      %1503 = vrot.lane.b32.xlu0 %v1403, 96
      %v1504 = vpop.permute.xlu0 %1503
      %1505 = vrot.lane.b32.xlu0 %v1406, 96
      %v1506 = vpop.permute.xlu0 %1505
      %1507 = vrot.lane.b32.xlu0 %v1411, 96
      %v1508 = vpop.permute.xlu0 %1507
      %1509 = vrot.lane.b32.xlu0 %v1414, 96
      %v1510 = vpop.permute.xlu0 %1509
      %1511 = vrot.lane.b32.xlu0 %v1419, 96
      %v1512 = vpop.permute.xlu0 %1511
      %1513 = vrot.lane.b32.xlu0 %v1422, 96
      %v1514 = vpop.permute.xlu0 %1513
      %1515 = vrot.lane.b32.xlu0 %v1427, 96
      %v1516 = vpop.permute.xlu0 %1515
      %1517 = vrot.lane.b32.xlu0 %v1430, 96
      %v1518 = vpop.permute.xlu0 %1517
      %1519 = vrot.lane.b32.xlu0 %v1435, 96
      %v1520 = vpop.permute.xlu0 %1519
      %v1548 = vmax.f32 %v1331, %v1468
      %v1549 = vmax.f32 %v1334, %v1470
      %v1550 = vmax.f32 %v1339, %v1472
      %v1551 = vmax.f32 %v1342, %v1474
      %v1552 = vmax.f32 %v1347, %v1476
      %v1553 = vmax.f32 %v1350, %v1478
      %v1554 = vmax.f32 %v1355, %v1480
      %v1555 = vmax.f32 %v1358, %v1482
      %v1556 = vmax.f32 %v1363, %v1484
      %v1557 = vmax.f32 %v1366, %v1486
      %v1558 = vmax.f32 %v1371, %v1488
      %v1559 = vmax.f32 %v1374, %v1490
      %v1560 = vmax.f32 %v1379, %v1492
      %v1561 = vmax.f32 %v1382, %v1494
      %v1562 = vmax.f32 %v1387, %v1496
      %v1563 = vmax.f32 %v1390, %v1498
      %v1564 = vmax.f32 %v1395, %v1500
      %v1565 = vmax.f32 %v1398, %v1502
      %v1566 = vmax.f32 %v1403, %v1504
      %v1567 = vmax.f32 %v1406, %v1506
      %v1568 = vmax.f32 %v1411, %v1508
      %v1569 = vmax.f32 %v1414, %v1510
      %v1570 = vmax.f32 %v1419, %v1512
      %v1571 = vmax.f32 %v1422, %v1514
      %v1572 = vmax.f32 %v1427, %v1516
      %v1573 = vmax.f32 %v1430, %v1518
      %v1574 = vmax.f32 %v1435, %v1520
      %1602 = vrot.lane.b32.xlu0 %v1548, 64
      %v1603 = vpop.permute.xlu0 %1602
      %1604 = vrot.lane.b32.xlu0 %v1549, 64
      %v1605 = vpop.permute.xlu0 %1604
      %1606 = vrot.lane.b32.xlu0 %v1550, 64
      %v1607 = vpop.permute.xlu0 %1606
      %1608 = vrot.lane.b32.xlu0 %v1551, 64
      %v1609 = vpop.permute.xlu0 %1608
      %1610 = vrot.lane.b32.xlu0 %v1552, 64
      %v1611 = vpop.permute.xlu0 %1610
      %1612 = vrot.lane.b32.xlu0 %v1553, 64
      %v1613 = vpop.permute.xlu0 %1612
      %1614 = vrot.lane.b32.xlu0 %v1554, 64
      %v1615 = vpop.permute.xlu0 %1614
      %1616 = vrot.lane.b32.xlu0 %v1555, 64
      %v1617 = vpop.permute.xlu0 %1616
      %1618 = vrot.lane.b32.xlu0 %v1556, 64
      %v1619 = vpop.permute.xlu0 %1618
      %1620 = vrot.lane.b32.xlu0 %v1557, 64
      %v1621 = vpop.permute.xlu0 %1620
      %1622 = vrot.lane.b32.xlu0 %v1558, 64
      %v1623 = vpop.permute.xlu0 %1622
      %1624 = vrot.lane.b32.xlu0 %v1559, 64
      %v1625 = vpop.permute.xlu0 %1624
      %1626 = vrot.lane.b32.xlu0 %v1560, 64
      %v1627 = vpop.permute.xlu0 %1626
      %1628 = vrot.lane.b32.xlu0 %v1561, 64
      %v1629 = vpop.permute.xlu0 %1628
      %1630 = vrot.lane.b32.xlu0 %v1562, 64
      %v1631 = vpop.permute.xlu0 %1630
      %1632 = vrot.lane.b32.xlu0 %v1563, 64
      %v1633 = vpop.permute.xlu0 %1632
      %1634 = vrot.lane.b32.xlu0 %v1564, 64
      %v1635 = vpop.permute.xlu0 %1634
      %1636 = vrot.lane.b32.xlu0 %v1565, 64
      %v1637 = vpop.permute.xlu0 %1636
      %1638 = vrot.lane.b32.xlu0 %v1566, 64
      %v1639 = vpop.permute.xlu0 %1638
      %1640 = vrot.lane.b32.xlu0 %v1567, 64
      %v1641 = vpop.permute.xlu0 %1640
      %1642 = vrot.lane.b32.xlu0 %v1568, 64
      %v1643 = vpop.permute.xlu0 %1642
      %1644 = vrot.lane.b32.xlu0 %v1569, 64
      %v1645 = vpop.permute.xlu0 %1644
      %1646 = vrot.lane.b32.xlu0 %v1570, 64
      %v1647 = vpop.permute.xlu0 %1646
      %1648 = vrot.lane.b32.xlu0 %v1571, 64
      %v1649 = vpop.permute.xlu0 %1648
      %1650 = vrot.lane.b32.xlu0 %v1572, 64
      %v1651 = vpop.permute.xlu0 %1650
      %1652 = vrot.lane.b32.xlu0 %v1573, 64
      %v1653 = vpop.permute.xlu0 %1652
      %1654 = vrot.lane.b32.xlu0 %v1574, 64
      %v1655 = vpop.permute.xlu0 %1654
      %v1683 = vmax.f32 %v1548, %v1603
      %v1684 = vmax.f32 %v1549, %v1605
      %v1685 = vmax.f32 %v1550, %v1607
      %v1686 = vmax.f32 %v1551, %v1609
      %v1687 = vmax.f32 %v1552, %v1611
      %v1688 = vmax.f32 %v1553, %v1613
      %v1689 = vmax.f32 %v1554, %v1615
      %v1690 = vmax.f32 %v1555, %v1617
      %v1691 = vmax.f32 %v1556, %v1619
      %v1692 = vmax.f32 %v1557, %v1621
      %v1693 = vmax.f32 %v1558, %v1623
      %v1694 = vmax.f32 %v1559, %v1625
      %v1695 = vmax.f32 %v1560, %v1627
      %v1696 = vmax.f32 %v1561, %v1629
      %v1697 = vmax.f32 %v1562, %v1631
      %v1698 = vmax.f32 %v1563, %v1633
      %v1699 = vmax.f32 %v1564, %v1635
      %v1700 = vmax.f32 %v1565, %v1637
      %v1701 = vmax.f32 %v1566, %v1639
      %v1702 = vmax.f32 %v1567, %v1641
      %v1703 = vmax.f32 %v1568, %v1643
      %v1704 = vmax.f32 %v1569, %v1645
      %v1705 = vmax.f32 %v1570, %v1647
      %v1706 = vmax.f32 %v1571, %v1649
      %v1707 = vmax.f32 %v1572, %v1651
      %v1708 = vmax.f32 %v1573, %v1653
      %v1709 = vmax.f32 %v1574, %v1655
      %v1710 = vld [vmem:[%s2] sm:$0x1]
      %v1712 = vlaneseq
      %v1713 = vshrl.u32 %v1712, 7
      %v1714 = vsub.s32 0, %v1713
      %v1715 = vrot.slane %v1710, %v1714
      %v1717 = vadd.f32 %v1683, %v1715
      %v1718 = vadd.f32 %v1684, %v1715
      %v1719 = vadd.f32 %v1685, %v1715
      %v1720 = vadd.f32 %v1686, %v1715
      %v1721 = vadd.f32 %v1687, %v1715
      %v1722 = vadd.f32 %v1688, %v1715
      %v1723 = vadd.f32 %v1689, %v1715
      %v1724 = vadd.f32 %v1690, %v1715
      %v1725 = vadd.f32 %v1691, %v1715
      %v1726 = vadd.f32 %v1692, %v1715
      %v1727 = vadd.f32 %v1693, %v1715
      %v1728 = vadd.f32 %v1694, %v1715
      %v1729 = vadd.f32 %v1695, %v1715
      %v1730 = vadd.f32 %v1696, %v1715
      %v1731 = vadd.f32 %v1697, %v1715
      %v1732 = vadd.f32 %v1698, %v1715
      %v1733 = vadd.f32 %v1699, %v1715
      %v1734 = vadd.f32 %v1700, %v1715
      %v1735 = vadd.f32 %v1701, %v1715
      %v1736 = vadd.f32 %v1702, %v1715
      %v1737 = vadd.f32 %v1703, %v1715
      %v1738 = vadd.f32 %v1704, %v1715
      %v1739 = vadd.f32 %v1705, %v1715
      %v1740 = vadd.f32 %v1706, %v1715
      %v1741 = vadd.f32 %v1707, %v1715
      %v1742 = vadd.f32 %v1708, %v1715
      %v1743 = vadd.f32 %v1709, %v1715
      %v1744 = vmax.f32 %v1717, 0.0
      %v1745 = vmax.f32 %v1718, 0.0
      %v1746 = vmax.f32 %v1719, 0.0
      %v1747 = vmax.f32 %v1720, 0.0
      %v1748 = vmax.f32 %v1721, 0.0
      %v1749 = vmax.f32 %v1722, 0.0
      %v1750 = vmax.f32 %v1723, 0.0
      %v1751 = vmax.f32 %v1724, 0.0
      %v1752 = vmax.f32 %v1725, 0.0
      %v1753 = vmax.f32 %v1726, 0.0
      %v1754 = vmax.f32 %v1727, 0.0
      %v1755 = vmax.f32 %v1728, 0.0
      %v1756 = vmax.f32 %v1729, 0.0
      %v1757 = vmax.f32 %v1730, 0.0
      %v1758 = vmax.f32 %v1731, 0.0
      %v1759 = vmax.f32 %v1732, 0.0
      %v1760 = vmax.f32 %v1733, 0.0
      %v1761 = vmax.f32 %v1734, 0.0
      %v1762 = vmax.f32 %v1735, 0.0
      %v1763 = vmax.f32 %v1736, 0.0
      %v1764 = vmax.f32 %v1737, 0.0
      %v1765 = vmax.f32 %v1738, 0.0
      %v1766 = vmax.f32 %v1739, 0.0
      %v1767 = vmax.f32 %v1740, 0.0
      %v1768 = vmax.f32 %v1741, 0.0
      %v1769 = vmax.f32 %v1742, 0.0
      %v1770 = vmax.f32 %v1743, 0.0
      %v1771 = vpack.c.bf16 %v1745, %v1744
      %v1772 = vpack.c.bf16 %v1747, %v1746
      %v1773 = vpack.c.bf16 %v1749, %v1748
      %v1774 = vpack.c.bf16 %v1751, %v1750
      %v1775 = vpack.c.bf16 %v1753, %v1752
      %v1776 = vpack.c.bf16 %v1755, %v1754
      %v1777 = vpack.c.bf16 %v1757, %v1756
      %v1778 = vpack.c.bf16 %v1759, %v1758
      %v1779 = vpack.c.bf16 %v1761, %v1760
      %v1780 = vpack.c.bf16 %v1763, %v1762
      %v1781 = vpack.c.bf16 %v1765, %v1764
      %v1782 = vpack.c.bf16 %v1767, %v1766
      %v1783 = vpack.c.bf16 %v1769, %v1768
      %v1784 = vpack.c.bf16 %v1770, %v1770
      %vm1785 = vcmask 257024
      %1786 = vst.msk [vmem:[%s170] sm:$0xf] %vm1785, 0
      %1787 = vst.msk [vmem:[%s170 + $0x4] sm:$0xf] %vm1785, 0
      %1788 = vst.msk [vmem:[%s170 + $0x8] sm:$0xf] %vm1785, 0
      %1789 = vst.msk [vmem:[%s170 + $0xc] sm:$0xf] %vm1785, 0
      %1790 = vst.msk [vmem:[%s170 + $0x10] sm:$0xf] %vm1785, 0
      %1791 = vst.msk [vmem:[%s170 + $0x14] sm:$0xf] %vm1785, 0
      %1792 = vst.msk [vmem:[%s170 + $0x18] sm:$0xf] %vm1785, 0
      %1793 = vst.msk [vmem:[%s170 + $0x1c] sm:$0xf] %vm1785, 0
      %1794 = vst.msk [vmem:[%s170 + $0x20] sm:$0xf] %vm1785, 0
      %1795 = vst.msk [vmem:[%s170 + $0x24] sm:$0xf] %vm1785, 0
      %1796 = vst.msk [vmem:[%s170 + $0x28] sm:$0xf] %vm1785, 0
      %1797 = vst.msk [vmem:[%s170 + $0x2c] sm:$0xf] %vm1785, 0
      %1798 = vst.msk [vmem:[%s170 + $0x30] sm:$0xf] %vm1785, 0
      %1799 = vst.msk [vmem:[%s170 + $0x34] sm:$0xf] %vm1785, 0
      %1800 = vst.msk [vmem:[%s170 + $0x38] sm:$0xf] %vm1785, 0
      %1801 = vst.msk [vmem:[%s170 + $0x3c] sm:$0xf] %vm1785, 0
      %1802 = vst.msk [vmem:[%s170 + $0x40] sm:$0xf] %vm1785, 0
      %1803 = vst.msk [vmem:[%s170 + $0x44] sm:$0xf] %vm1785, 0
      %1804 = vst.msk [vmem:[%s170 + $0x48] sm:$0xf] %vm1785, 0
      %1805 = vst.msk [vmem:[%s170 + $0x4c] sm:$0xf] %vm1785, 0
      %1806 = vst.msk [vmem:[%s170 + $0x50] sm:$0xf] %vm1785, 0
      %1807 = vst.msk [vmem:[%s170 + $0x54] sm:$0xf] %vm1785, 0
      %v1809 = vunpack.c.l.b16 %v1771
      %v1810 = vpack.c.b16 %v1809, %v1809
      %v1812 = vshrl.u32 %v1810, 16
      %v1814 = vrot.slane %v1812, 6
      %v1815 = vshll.u32 %v1810, 16
      %v1817 = vrot.slane %v1815, 7
      %v1818 = vor.u32 %v1814, %v1817
      %v1819 = vrot.slane %v1818, 4
      %vm1822 = vcmask 257025
      %vm1823 = vsmask.f32 7942
      %vm1824 = vmand %vm1822, %vm1823
      %v1825 = vld [vmem:[%s170 + $0x8] sm:$0xe]
      %v1826 = vsel %vm1824, %v1818, %v1825
      %1827 = vst [vmem:[%s170 + $0x8] sm:$0xe] %v1826
      %vm1828 = vcmask 253952
      %1829 = vst.msk [vmem:[%s170 + $0xc] sm:$0x1] %vm1828, %v1819
      %v1831 = vunpack.c.l.b16 %v1772
      %v1832 = vpack.c.b16 %v1831, %v1831
      %v1833 = vrot.slane %v1832, 6
      %v1834 = vrot.slane %v1833, 4
      %vm1837 = vcmask 257026
      %1838 = vst.msk [vmem:[%s170 + $0xc] sm:$0xc] %vm1837, %v1833
      %vm1839 = vcmask 254976
      %vm1840 = vsmask.f32 1280
      %vm1841 = vmand %vm1839, %vm1840
      %v1842 = vld [vmem:[%s170 + $0x10] sm:$0x3]
      %v1843 = vsel %vm1841, %v1834, %v1842
      %1844 = vst [vmem:[%s170 + $0x10] sm:$0x3] %v1843
      %v1846 = vunpack.c.l.b16 %v1773
      %v1847 = vpack.c.b16 %v1846, %v1846
      %v1849 = vshrl.u32 %v1847, 16
      %v1851 = vrot.slane %v1849, 5
      %v1852 = vshll.u32 %v1847, 16
      %v1854 = vrot.slane %v1852, 6
      %v1855 = vor.u32 %v1851, %v1854
      %v1856 = vrot.slane %v1855, 4
      %vm1859 = vcmask 257026
      %vm1860 = vsmask.f32 7946
      %vm1861 = vmand %vm1859, %vm1860
      %v1862 = vld [vmem:[%s170 + $0x10] sm:$0xc]
      %v1863 = vsel %vm1861, %v1855, %v1862
      %1864 = vst [vmem:[%s170 + $0x10] sm:$0xc] %v1863
      %vm1865 = vcmask 254976
      %1866 = vst.msk [vmem:[%s170 + $0x14] sm:$0x3] %vm1865, %v1856
      %v1868 = vunpack.c.l.b16 %v1774
      %v1869 = vpack.c.b16 %v1868, %v1868
      %v1870 = vrot.slane %v1869, 5
      %v1871 = vrot.slane %v1870, 4
      %vm1874 = vcmask 257027
      %1875 = vst.msk [vmem:[%s170 + $0x14] sm:$0x8] %vm1874, %v1870
      %vm1876 = vcmask 256000
      %vm1877 = vsmask.f32 2304
      %vm1878 = vmand %vm1876, %vm1877
      %v1879 = vld [vmem:[%s170 + $0x18] sm:$0x7]
      %v1880 = vsel %vm1878, %v1871, %v1879
      %1881 = vst [vmem:[%s170 + $0x18] sm:$0x7] %v1880
      %v1883 = vunpack.c.l.b16 %v1775
      %v1884 = vpack.c.b16 %v1883, %v1883
      %v1886 = vshll.u32 %v1884, 16
      %v1888 = vrot.slane %v1886, 5
      %v1889 = vshrl.u32 %v1884, 16
      %v1891 = vrot.slane %v1889, 4
      %v1892 = vor.u32 %v1891, %v1888
      %v1893 = vrot.slane %v1892, 4
      %vm1896 = vcmask 257027
      %vm1897 = vsmask.f32 7950
      %vm1898 = vmand %vm1896, %vm1897
      %v1899 = vld [vmem:[%s170 + $0x18] sm:$0x8]
      %v1900 = vsel %vm1898, %v1888, %v1899
      %1901 = vst [vmem:[%s170 + $0x18] sm:$0x8] %v1900
      %vm1902 = vcmask 256000
      %1903 = vst.msk [vmem:[%s170 + $0x1c] sm:$0x7] %vm1902, %v1893
      %vm1904 = vcmask 257024
      %vm1905 = vsmask.f32 3328
      %vm1906 = vmand %vm1904, %vm1905
      %v1907 = vld [vmem:[%s170 + $0x20] sm:$0xf]
      %v1908 = vsel %vm1906, %v1776, %v1907
      %1909 = vst [vmem:[%s170 + $0x20] sm:$0xf] %v1908
      %v1911 = vunpack.c.l.b16 %v1777
      %v1912 = vpack.c.b16 %v1911, %v1911
      %v1914 = vshrl.u32 %v1912, 16
      %v1916 = vrot.slane %v1914, 7
      %v1917 = vshll.u32 %v1912, 16
      %v1919 = vor.u32 %v1916, %v1917
      %vm1921 = vsmask.f32 7938
      %vm1922 = vmand %vm1904, %vm1921
      %v1923 = vld [vmem:[%s170 + $0x24] sm:$0xf]
      %v1924 = vsel %vm1922, %v1919, %v1923
      %1925 = vst [vmem:[%s170 + $0x24] sm:$0xf] %v1924
      %v1927 = vunpack.c.l.b16 %v1778
      %v1928 = vpack.c.b16 %v1927, %v1927
      %v1929 = vrot.slane %v1928, 7
      %v1930 = vrot.slane %v1929, 4
      %vm1933 = vcmask 257025
      %1934 = vst.msk [vmem:[%s170 + $0x28] sm:$0xe] %vm1933, %v1929
      %vm1935 = vcmask 253952
      %vm1936 = vsmask.f32 256
      %vm1937 = vmand %vm1935, %vm1936
      %v1938 = vld [vmem:[%s170 + $0x2c] sm:$0x1]
      %v1939 = vsel %vm1937, %v1930, %v1938
      %1940 = vst [vmem:[%s170 + $0x2c] sm:$0x1] %v1939
      %v1942 = vunpack.c.l.b16 %v1779
      %v1943 = vpack.c.b16 %v1942, %v1942
      %v1945 = vshrl.u32 %v1943, 16
      %v1947 = vrot.slane %v1945, 6
      %v1948 = vshll.u32 %v1943, 16
      %v1950 = vrot.slane %v1948, 7
      %v1951 = vor.u32 %v1947, %v1950
      %v1952 = vrot.slane %v1951, 4
      %v1955 = vld [vmem:[%s170 + $0x2c] sm:$0xe]
      %v1956 = vsel %vm1824, %v1951, %v1955
      %1957 = vst [vmem:[%s170 + $0x2c] sm:$0xe] %v1956
      %1958 = vst.msk [vmem:[%s170 + $0x30] sm:$0x1] %vm1828, %v1952
      %v1960 = vunpack.c.l.b16 %v1780
      %v1961 = vpack.c.b16 %v1960, %v1960
      %v1962 = vrot.slane %v1961, 6
      %v1963 = vrot.slane %v1962, 4
      %1966 = vst.msk [vmem:[%s170 + $0x30] sm:$0xc] %vm1837, %v1962
      %v1967 = vld [vmem:[%s170 + $0x34] sm:$0x3]
      %v1968 = vsel %vm1841, %v1963, %v1967
      %1969 = vst [vmem:[%s170 + $0x34] sm:$0x3] %v1968
      %v1971 = vunpack.c.l.b16 %v1781
      %v1972 = vpack.c.b16 %v1971, %v1971
      %v1974 = vshrl.u32 %v1972, 16
      %v1976 = vrot.slane %v1974, 5
      %v1977 = vshll.u32 %v1972, 16
      %v1979 = vrot.slane %v1977, 6
      %v1980 = vor.u32 %v1976, %v1979
      %v1981 = vrot.slane %v1980, 4
      %v1984 = vld [vmem:[%s170 + $0x34] sm:$0xc]
      %v1985 = vsel %vm1861, %v1980, %v1984
      %1986 = vst [vmem:[%s170 + $0x34] sm:$0xc] %v1985
      %1987 = vst.msk [vmem:[%s170 + $0x38] sm:$0x3] %vm1865, %v1981
      %v1989 = vunpack.c.l.b16 %v1782
      %v1990 = vpack.c.b16 %v1989, %v1989
      %v1991 = vrot.slane %v1990, 5
      %v1992 = vrot.slane %v1991, 4
      %1995 = vst.msk [vmem:[%s170 + $0x38] sm:$0x8] %vm1874, %v1991
      %v1996 = vld [vmem:[%s170 + $0x3c] sm:$0x7]
      %v1997 = vsel %vm1878, %v1992, %v1996
      %1998 = vst [vmem:[%s170 + $0x3c] sm:$0x7] %v1997
      %v2000 = vunpack.c.l.b16 %v1783
      %v2001 = vpack.c.b16 %v2000, %v2000
      %v2003 = vshll.u32 %v2001, 16
      %v2005 = vrot.slane %v2003, 5
      %v2006 = vshrl.u32 %v2001, 16
      %v2008 = vrot.slane %v2006, 4
      %v2009 = vor.u32 %v2008, %v2005
      %v2010 = vrot.slane %v2009, 4
      %v2013 = vld [vmem:[%s170 + $0x3c] sm:$0x8]
      %v2014 = vsel %vm1898, %v2005, %v2013
      %2015 = vst [vmem:[%s170 + $0x3c] sm:$0x8] %v2014
      %2016 = vst.msk [vmem:[%s170 + $0x40] sm:$0x7] %vm1902, %v2010
      %v2017 = vld [vmem:[%s170 + $0x44] sm:$0xf]
      %v2018 = vsel %vm1906, %v1784, %v2017
      %2019 = vst [vmem:[%s170 + $0x44] sm:$0xf] %v2018
      %p2020 = scmp.lt.s32.totalorder %s14, 1
      %s2021 = scalar_select %p2020, %s14, 1
      %s2022 = smul.addr %s2021, 22
      %s2023 = smul.addr %s2022, 4
      %s2024 = scalar_lea.vmem %s3, %s2023
      // Predicated region
      $region33: #{cnn_forward.3} parent=31 // pred_check
        %p2025 = pneg %p100
      $region34: #{cnn_forward.3} parent=31 // pred_check_branch
        %2027 = sbr.rel (%p2025) target = $region36
      $region35: #{cnn_forward.3} parent=31 // pred_region
        _
      $region36: #{cnn_forward.3} parent=31 // pred_fallthru
        _
    $region32: #{cnn_forward.3} parent=5 // pred_fallthru
      _
    %p2028 = scmp.le.s32.totalorder 2, %s9
    // Predicated region
    $region37: #{cnn_forward.3} parent=5 // pred_check
      %p2029 = pneg %p2028
    $region38: #{cnn_forward.3} parent=5 // pred_check_branch
      %2031 = sbr.rel (%p2029) target = $region40
    $region39: #{cnn_forward.3} parent=5 // pred_region
      %s2032 = ssub.s32 %s9, 2
      // Predicated region
      $region41: #{cnn_forward.3} parent=39 // pred_check
        %p2033 = pneg %p106
      $region42: #{cnn_forward.3} parent=39 // pred_check_branch
        %2035 = sbr.rel (%p2033) target = $region44
      $region43: #{cnn_forward.3} parent=39 // pred_region
        %p2036 = scmp.lt.s32.totalorder %s15, 1
        %s2037 = scalar_select %p2036, %s15, 1
        %s2038 = smul.addr %s2037, 22
        %s2039 = smul.addr %s2038, 4
        %s2040 = scalar_lea.vmem %s3, %s2039
      $region44: #{cnn_forward.3} parent=39 // pred_fallthru
        _
    $region40: #{cnn_forward.3} parent=5 // pred_fallthru
      _
  $region6: #{cnn_forward.3} parent=0 // loop_footer
    %s13 = sadd.s32 1, %s9
  $region7: #{cnn_forward.3} parent=0 // loop_footer_branch
    %8 = sbr.rel target = $region3
  $region8: #{cnn_forward.3} parent=0 // loop_exit
    _

</llo_original>
